<compile_context>
chip_gen: v7x
topology: tpu7x:2x2x1
jax: 0.10.0
libtpu: 0.0.40
codegen_flags: <defaults>
</compile_context>

<pallas_src>
import math

import jax
import jax.numpy as jnp
from jax import lax
from jax.experimental import pallas as pl
from jax.experimental.pallas import tpu as pltpu

# ---------------- small ViT hyperparameters (consistent with the module) ----
IMG = 16          # img_size
PATCH = 4         # patch_size
IN_CH = 3         # in_channels
NUM_HEADS = 4     # num_heads  (EMBED % NUM_HEADS == 0)
MLP_SIZE = 96     # mlp_size
NUM_LAYERS = 2    # num_transformer_layer
NUM_CLASSES = 10  # num_classes
BATCH = 2

EMBED = PATCH * PATCH * IN_CH            # patch_size**2 * in_channels = 48
N_PATCH = (IMG // PATCH) ** 2            # 16
SEQ = N_PATCH + 1                        # +1 class token = 17
HEAD_DIM = EMBED // NUM_HEADS            # 12
PATCH_DIM = IN_CH * PATCH * PATCH        # flattened patch = 48
LN_EPS = 1e-5                            # PyTorch LayerNorm default

# ---------------- padded (lane/sublane aligned) sizes ------------------------
E_PAD = 128                              # embedding lanes (48 real + zero pad)
PD_PAD = 128                             # flattened-patch lanes
MLP_PAD = 128                            # MLP hidden lanes (96 real + zero pad)
SEQ_PAD = 24                             # tokens padded to a multiple of 8
ROWS = BATCH * SEQ_PAD                   # batch folded into the row axis = 48
NEG_INF = -1e30


# ---------------- reference math (unpadded, used only for verification) ------
def _layernorm(x, g, b):
    mu = jnp.mean(x, axis=-1, keepdims=True)
    var = jnp.mean((x - mu) ** 2, axis=-1, keepdims=True)
    return (x - mu) * lax.rsqrt(var + LN_EPS) * g + b


def _encoder_block_math(x, ln1g, ln1b, wq, bq, wk, bk, wv, bv, wo, bo,
                        ln2g, ln2b, w1, b1, w2, b2):
    """x: (SEQ, EMBED). Pre-norm transformer encoder block (MSA + MLP, residuals)."""
    h = _layernorm(x, ln1g, ln1b)
    q = jnp.dot(h, wq) + bq
    k = jnp.dot(h, wk) + bk
    v = jnp.dot(h, wv) + bv
    scale = 1.0 / math.sqrt(HEAD_DIM)
    heads = []
    for hh in range(NUM_HEADS):
        sl = slice(hh * HEAD_DIM, (hh + 1) * HEAD_DIM)
        qh, kh, vh = q[:, sl], k[:, sl], v[:, sl]
        s = jnp.dot(qh, kh.T) * scale
        s = s - jnp.max(s, axis=-1, keepdims=True)
        p = jnp.exp(s)
        p = p / jnp.sum(p, axis=-1, keepdims=True)
        heads.append(jnp.dot(p, vh))
    attn = jnp.concatenate(heads, axis=-1)
    attn = jnp.dot(attn, wo) + bo
    x = x + attn

    h2 = _layernorm(x, ln2g, ln2b)
    h2 = jnp.dot(h2, w1) + b1
    # TODO(synk): PyTorch nn.GELU() default is the exact erf form; tanh approx used here.
    h2 = jax.nn.gelu(h2, approximate=True)
    h2 = jnp.dot(h2, w2) + b2
    return x + h2


# ---------------- fused Pallas kernel ----------------------------------------
def _ln_masked(x, g, b):
    """LayerNorm over the true EMBED dims of a lane-padded row.

    Padded lanes of x are exactly 0 and g/b are zero-padded, so sums over 128 lanes
    equal sums over the 48 real dims; var = E[x^2] - mu^2 avoids contaminating the
    variance with the (0 - mu) terms of padded lanes.  Output padded lanes are 0.
    """
    s1 = jnp.sum(x, axis=-1, keepdims=True)
    s2 = jnp.sum(x * x, axis=-1, keepdims=True)
    mu = s1 / EMBED
    var = s2 / EMBED - mu * mu
    return (x - mu) * lax.rsqrt(var + LN_EPS) * g + b


def vit_fused_kernel(patches_ref, wpatch_ref, bias_ref, mask_ref, *rest):
    out_ref = rest[-1]
    nl = NUM_LAYERS * 12
    layer_refs = rest[:nl]
    hg_ref, hb_ref, hw_ref, hbias_ref = rest[nl:nl + 4]

    # ---- patch projection + cls token + positional embedding, fused ----------
    # patches_ref: (ROWS, PD_PAD) with zero rows for cls/pad tokens; bias_ref already
    # contains pos[token] + patch_bias (patch rows), cls + pos[0] (row 0 of each batch
    # slab) and zeros (pad rows).  Embedding dropout: identity at inference.
    x = (jnp.dot(patches_ref[...], wpatch_ref[...], preferred_element_type=jnp.float32)
         + bias_ref[...])                                         # (ROWS, E_PAD)

    # per-head lane masks, hoisted out of the layer loop (heads live in the natural
    # lane layout; masking K/V restricts each score/output matmul to that head's dims)
    lane = lax.broadcasted_iota(jnp.int32, (1, E_PAD), 1)
    head_masks = [
        ((lane >= hh * HEAD_DIM) & (lane < (hh + 1) * HEAD_DIM)).astype(jnp.float32)
        for hh in range(NUM_HEADS)
    ]
    # (ROWS, ROWS) additive mask: block-diagonal over batch + padded-key suppression
    attn_mask = mask_ref[...]

    for li in range(NUM_LAYERS):
        (ln1g, ln1b, wqkv, bqkv, wo, bo,
         ln2g, ln2b, w1, b1, w2, b2) = layer_refs[li * 12:(li + 1) * 12]

        # ---- multi-head self-attention (fused QKV, natural lane layout) ------
        h = _ln_masked(x, ln1g[...], ln1b[...])
        qkv = (jnp.dot(h, wqkv[...], preferred_element_type=jnp.float32)
               + bqkv[...])                                       # (ROWS, 3*E_PAD)
        q = qkv[:, 0:E_PAD]          # 1/sqrt(head_dim) already folded into Wq/bq
        k = qkv[:, E_PAD:2 * E_PAD]
        v = qkv[:, 2 * E_PAD:3 * E_PAD]

        attn = jnp.zeros_like(x)
        for hm in head_masks:
            kh = k * hm
            vh = v * hm
            s = lax.dot_general(q, kh, (((1,), (1,)), ((), ())),
                                preferred_element_type=jnp.float32) + attn_mask
            s = s - jnp.max(s, axis=-1, keepdims=True)
            p = jnp.exp(s)
            p = p * pl.reciprocal(jnp.sum(p, axis=-1, keepdims=True), approx=True)
            attn = attn + jnp.dot(p, vh, preferred_element_type=jnp.float32)

        attn = jnp.dot(attn, wo[...], preferred_element_type=jnp.float32) + bo[...]
        x = x + attn                                              # residual 1

        # ---- MLP sub-block ----
        h2 = _ln_masked(x, ln2g[...], ln2b[...])
        h2 = jnp.dot(h2, w1[...], preferred_element_type=jnp.float32) + b1[...]
        # TODO(synk): PyTorch nn.GELU() default is the exact erf form; tanh approx used.
        h2 = jax.nn.gelu(h2, approximate=True)
        h2 = jnp.dot(h2, w2[...], preferred_element_type=jnp.float32) + b2[...]
        x = x + h2                                                # residual 2

    # ---- classifier head (applied to every row; wrapper reads the cls rows) ----
    hcls = _ln_masked(x, hg_ref[...], hb_ref[...])
    out_ref[...] = (jnp.dot(hcls, hw_ref[...], preferred_element_type=jnp.float32)
                    + hbias_ref[...])                             # (ROWS, E_PAD)


# ---------------- pallas_call wrapper -----------------------------------------
def _const_spec(shape):
    nd = len(shape)
    return pl.BlockSpec(shape, lambda i, _nd=nd: (0,) * _nd)


def _extract_patches(x_nchw):
    # NCHW -> (B, N_PATCH, C*p*p), patch inner order (c, kh, kw) == flattened conv kernel.
    B = x_nchw.shape[0]
    hp = IMG // PATCH
    p = x_nchw.reshape(B, IN_CH, hp, PATCH, hp, PATCH)
    p = p.transpose(0, 2, 4, 1, 3, 5)
    return p.reshape(B, N_PATCH, PATCH_DIM)


def vit_forward(x_nchw, padded):
    B = x_nchw.shape[0]
    patches = _extract_patches(x_nchw)                            # (B, N_PATCH, 48)
    patches_pad = jnp.zeros((B, SEQ_PAD, PD_PAD), jnp.float32)
    patches_pad = patches_pad.at[:, 1:SEQ, :PATCH_DIM].set(patches)
    patches_pad = patches_pad.reshape(B * SEQ_PAD, PD_PAD)        # batch folded into rows

    flat = [patches_pad, padded["wpatch"], padded["embed_bias"], padded["attn_mask"]]
    for layer in padded["layers"]:
        flat.extend(layer)
    flat.extend([padded["head_ln_g"], padded["head_ln_b"],
                 padded["head_w"], padded["head_b"]])

    in_specs = [_const_spec(a.shape) for a in flat]

    out = pl.pallas_call(
        vit_fused_kernel,
        out_shape=jax.ShapeDtypeStruct((B * SEQ_PAD, E_PAD), jnp.float32),
        grid=(1,),
        in_specs=in_specs,
        out_specs=_const_spec((B * SEQ_PAD, E_PAD)),
        compiler_params=pltpu.CompilerParams(dimension_semantics=("arbitrary",)),
    )(*flat)
    logits = out.reshape(B, SEQ_PAD, E_PAD)[:, 0, :NUM_CLASSES]   # cls token row
    return logits


# ---------------- pure-JAX reference (unpadded) --------------------------------
def vit_reference(x_nchw, params):
    B = x_nchw.shape[0]
    patches = _extract_patches(x_nchw)
    x = jnp.einsum("bnk,ke->bne", patches, params["patch_w"]) + params["patch_b"]
    cls_tok = jnp.broadcast_to(params["cls"], (B, 1, EMBED))
    x = jnp.concatenate([cls_tok, x], axis=1) + params["pos"]
    for layer in params["layers"]:
        x = jax.vmap(lambda xb: _encoder_block_math(xb, *layer))(x)
    h = _layernorm(x[:, 0, :], params["head_ln_g"], params["head_ln_b"])
    return jnp.dot(h, params["head_w"]) + params["head_b"]


# ---------------- deterministic parameter construction -------------------------
def init_params(key):
    def dense(k, shape, scale=0.02):
        return (scale * jax.random.normal(k, shape)).astype(jnp.float32)

    keys = jax.random.split(key, 6 + NUM_LAYERS)
    params = {
        "patch_w": dense(keys[0], (PATCH_DIM, EMBED)),
        "patch_b": dense(keys[1], (1, EMBED)),
        "cls": dense(keys[2], (1, 1, EMBED), scale=1.0),      # torch.randn
        "pos": dense(keys[3], (1, SEQ, EMBED), scale=1.0),    # torch.randn
        "head_ln_g": jnp.ones((1, EMBED), jnp.float32),
        "head_ln_b": jnp.zeros((1, EMBED), jnp.float32),
        "head_w": dense(keys[4], (EMBED, NUM_CLASSES)),
        "head_b": dense(keys[5], (1, NUM_CLASSES)),
        "layers": [],
    }
    for li in range(NUM_LAYERS):
        lk = jax.random.split(keys[6 + li], 10)
        layer = (
            jnp.ones((1, EMBED), jnp.float32),   # ln1 gamma
            jnp.zeros((1, EMBED), jnp.float32),  # ln1 beta
            dense(lk[0], (EMBED, EMBED)), dense(lk[1], (1, EMBED)),   # wq, bq
            dense(lk[2], (EMBED, EMBED)), dense(lk[3], (1, EMBED)),   # wk, bk
            dense(lk[4], (EMBED, EMBED)), dense(lk[5], (1, EMBED)),   # wv, bv
            dense(lk[6], (EMBED, EMBED)), dense(lk[7], (1, EMBED)),   # wo, bo
            jnp.ones((1, EMBED), jnp.float32),   # ln2 gamma
            jnp.zeros((1, EMBED), jnp.float32),  # ln2 beta
            dense(lk[8], (EMBED, MLP_SIZE)), jnp.zeros((1, MLP_SIZE), jnp.float32),
            dense(lk[9], (MLP_SIZE, EMBED)), jnp.zeros((1, EMBED), jnp.float32),
        )
        params["layers"].append(layer)
    return params


# ---------------- padded / fused parameter layout for the kernel ---------------
def prepare_padded_params(params):
    scale = 1.0 / math.sqrt(HEAD_DIM)

    def pad2(w, rows=E_PAD, cols=E_PAD):
        out = jnp.zeros((rows, cols), jnp.float32)
        return out.at[:w.shape[0], :w.shape[1]].set(w)

    def pad_vec(v, cols=E_PAD):                 # (1, n) -> (1, cols)
        out = jnp.zeros((1, cols), jnp.float32)
        return out.at[:, :v.shape[1]].set(v)

    # token bias: cls + pos[0] at row 0, pos[1:] + patch_bias at rows 1..16, zero pad
    # rows; tiled over batch so the kernel adds it with a single (ROWS, E_PAD) add.
    pos = params["pos"][0]                      # (SEQ, EMBED)
    bias = jnp.zeros((SEQ_PAD, E_PAD), jnp.float32)
    bias = bias.at[0, :EMBED].set(pos[0] + params["cls"][0, 0])
    bias = bias.at[1:SEQ, :EMBED].set(pos[1:SEQ] + params["patch_b"])
    bias = jnp.tile(bias, (BATCH, 1))           # (ROWS, E_PAD)

    # attention mask: queries may only attend to keys of the same batch slab whose
    # within-slab index is a real token (< SEQ).  Built on host; additive in kernel.
    idx = jnp.arange(ROWS)
    same_batch = (idx[:, None] // SEQ_PAD) == (idx[None, :] // SEQ_PAD)
    key_valid = (idx[None, :] % SEQ_PAD) < SEQ
    attn_mask = jnp.where(same_batch & key_valid, 0.0, NEG_INF).astype(jnp.float32)

    padded = {
        "wpatch": pad2(params["patch_w"], PD_PAD, E_PAD),
        "embed_bias": bias,
        "attn_mask": attn_mask,
        "head_ln_g": pad_vec(params["head_ln_g"]),
        "head_ln_b": pad_vec(params["head_ln_b"]),
        "head_w": pad2(params["head_w"]),
        "head_b": pad_vec(params["head_b"]),
        "layers": [],
    }
    for layer in params["layers"]:
        (ln1g, ln1b, wq, bq, wk, bk, wv, bv, wo, bo,
         ln2g, ln2b, w1, b1, w2, b2) = layer
        # natural (compact) layout, Q pre-scaled by 1/sqrt(head_dim)
        wqkv = jnp.concatenate([pad2(wq * scale), pad2(wk), pad2(wv)], axis=1)
        bqkv = jnp.concatenate([pad_vec(bq * scale), pad_vec(bk), pad_vec(bv)], axis=1)
        padded["layers"].append((
            pad_vec(ln1g), pad_vec(ln1b),
            wqkv, bqkv,
            pad2(wo), pad_vec(bo),
            pad_vec(ln2g), pad_vec(ln2b),
            pad2(w1, E_PAD, MLP_PAD), pad_vec(b1, MLP_PAD),
            pad2(w2, MLP_PAD, E_PAD), pad_vec(b2, E_PAD),
        ))
    return padded


if __name__ == "__main__":
    key = jax.random.PRNGKey(0)
    pkey, xkey = jax.random.split(key)
    params = init_params(pkey)
    padded = prepare_padded_params(params)
    x = jax.random.normal(xkey, (BATCH, IN_CH, IMG, IMG), dtype=jnp.float32)

    out = jax.jit(vit_forward)(x, padded)
    out = jax.block_until_ready(out)

    ref = jax.block_until_ready(vit_reference(x, params))
    assert out.shape == (BATCH, NUM_CLASSES), out.shape
    max_err = float(jnp.max(jnp.abs(out - ref)))
    assert max_err < 1e-2, f"mismatch vs reference: {max_err}"

    print("KERNEL_OK")
</pallas_src>

<mosaic_0001>
module attributes {stable_mosaic.version = 11 : i64} {
  func.func @vit_fused_kernel(%arg0: i32, %arg1: memref<48x128xf32, #tpu.memory_space<vmem>>, %arg2: memref<128x128xf32, #tpu.memory_space<vmem>>, %arg3: memref<48x128xf32, #tpu.memory_space<vmem>>, %arg4: memref<48x48xf32, #tpu.memory_space<vmem>>, %arg5: memref<1x128xf32, #tpu.memory_space<vmem>>, %arg6: memref<1x128xf32, #tpu.memory_space<vmem>>, %arg7: memref<128x384xf32, #tpu.memory_space<vmem>>, %arg8: memref<1x384xf32, #tpu.memory_space<vmem>>, %arg9: memref<128x128xf32, #tpu.memory_space<vmem>>, %arg10: memref<1x128xf32, #tpu.memory_space<vmem>>, %arg11: memref<1x128xf32, #tpu.memory_space<vmem>>, %arg12: memref<1x128xf32, #tpu.memory_space<vmem>>, %arg13: memref<128x128xf32, #tpu.memory_space<vmem>>, %arg14: memref<1x128xf32, #tpu.memory_space<vmem>>, %arg15: memref<128x128xf32, #tpu.memory_space<vmem>>, %arg16: memref<1x128xf32, #tpu.memory_space<vmem>>, %arg17: memref<1x128xf32, #tpu.memory_space<vmem>>, %arg18: memref<1x128xf32, #tpu.memory_space<vmem>>, %arg19: memref<128x384xf32, #tpu.memory_space<vmem>>, %arg20: memref<1x384xf32, #tpu.memory_space<vmem>>, %arg21: memref<128x128xf32, #tpu.memory_space<vmem>>, %arg22: memref<1x128xf32, #tpu.memory_space<vmem>>, %arg23: memref<1x128xf32, #tpu.memory_space<vmem>>, %arg24: memref<1x128xf32, #tpu.memory_space<vmem>>, %arg25: memref<128x128xf32, #tpu.memory_space<vmem>>, %arg26: memref<1x128xf32, #tpu.memory_space<vmem>>, %arg27: memref<128x128xf32, #tpu.memory_space<vmem>>, %arg28: memref<1x128xf32, #tpu.memory_space<vmem>>, %arg29: memref<1x128xf32, #tpu.memory_space<vmem>>, %arg30: memref<1x128xf32, #tpu.memory_space<vmem>>, %arg31: memref<128x128xf32, #tpu.memory_space<vmem>>, %arg32: memref<1x128xf32, #tpu.memory_space<vmem>>, %arg33: memref<48x128xf32, #tpu.memory_space<vmem>>) attributes {dimension_semantics = [#tpu.dimension_semantics<arbitrary>], iteration_bounds = array<i64: 1>, scalar_prefetch = 0 : i64, scratch_operands = 0 : i64, tpu.core_type = #tpu.core_type<tc>, window_params = [{pipeline_mode = #tpu.pipeline_mode<synchronous>, transform_indices = @transform_0, window_bounds = array<i64: 48, 128>}, {pipeline_mode = #tpu.pipeline_mode<synchronous>, transform_indices = @transform_1, window_bounds = array<i64: 128, 128>}, {pipeline_mode = #tpu.pipeline_mode<synchronous>, transform_indices = @transform_2, window_bounds = array<i64: 48, 128>}, {pipeline_mode = #tpu.pipeline_mode<synchronous>, transform_indices = @transform_3, window_bounds = array<i64: 48, 48>}, {pipeline_mode = #tpu.pipeline_mode<synchronous>, transform_indices = @transform_4, window_bounds = array<i64: 1, 128>}, {pipeline_mode = #tpu.pipeline_mode<synchronous>, transform_indices = @transform_5, window_bounds = array<i64: 1, 128>}, {pipeline_mode = #tpu.pipeline_mode<synchronous>, transform_indices = @transform_6, window_bounds = array<i64: 128, 384>}, {pipeline_mode = #tpu.pipeline_mode<synchronous>, transform_indices = @transform_7, window_bounds = array<i64: 1, 384>}, {pipeline_mode = #tpu.pipeline_mode<synchronous>, transform_indices = @transform_8, window_bounds = array<i64: 128, 128>}, {pipeline_mode = #tpu.pipeline_mode<synchronous>, transform_indices = @transform_9, window_bounds = array<i64: 1, 128>}, {pipeline_mode = #tpu.pipeline_mode<synchronous>, transform_indices = @transform_10, window_bounds = array<i64: 1, 128>}, {pipeline_mode = #tpu.pipeline_mode<synchronous>, transform_indices = @transform_11, window_bounds = array<i64: 1, 128>}, {pipeline_mode = #tpu.pipeline_mode<synchronous>, transform_indices = @transform_12, window_bounds = array<i64: 128, 128>}, {pipeline_mode = #tpu.pipeline_mode<synchronous>, transform_indices = @transform_13, window_bounds = array<i64: 1, 128>}, {pipeline_mode = #tpu.pipeline_mode<synchronous>, transform_indices = @transform_14, window_bounds = array<i64: 128, 128>}, {pipeline_mode = #tpu.pipeline_mode<synchronous>, transform_indices = @transform_15, window_bounds = array<i64: 1, 128>}, {pipeline_mode = #tpu.pipeline_mode<synchronous>, transform_indices = @transform_16, window_bounds = array<i64: 1, 128>}, {pipeline_mode = #tpu.pipeline_mode<synchronous>, transform_indices = @transform_17, window_bounds = array<i64: 1, 128>}, {pipeline_mode = #tpu.pipeline_mode<synchronous>, transform_indices = @transform_18, window_bounds = array<i64: 128, 384>}, {pipeline_mode = #tpu.pipeline_mode<synchronous>, transform_indices = @transform_19, window_bounds = array<i64: 1, 384>}, {pipeline_mode = #tpu.pipeline_mode<synchronous>, transform_indices = @transform_20, window_bounds = array<i64: 128, 128>}, {pipeline_mode = #tpu.pipeline_mode<synchronous>, transform_indices = @transform_21, window_bounds = array<i64: 1, 128>}, {pipeline_mode = #tpu.pipeline_mode<synchronous>, transform_indices = @transform_22, window_bounds = array<i64: 1, 128>}, {pipeline_mode = #tpu.pipeline_mode<synchronous>, transform_indices = @transform_23, window_bounds = array<i64: 1, 128>}, {pipeline_mode = #tpu.pipeline_mode<synchronous>, transform_indices = @transform_24, window_bounds = array<i64: 128, 128>}, {pipeline_mode = #tpu.pipeline_mode<synchronous>, transform_indices = @transform_25, window_bounds = array<i64: 1, 128>}, {pipeline_mode = #tpu.pipeline_mode<synchronous>, transform_indices = @transform_26, window_bounds = array<i64: 128, 128>}, {pipeline_mode = #tpu.pipeline_mode<synchronous>, transform_indices = @transform_27, window_bounds = array<i64: 1, 128>}, {pipeline_mode = #tpu.pipeline_mode<synchronous>, transform_indices = @transform_28, window_bounds = array<i64: 1, 128>}, {pipeline_mode = #tpu.pipeline_mode<synchronous>, transform_indices = @transform_29, window_bounds = array<i64: 1, 128>}, {pipeline_mode = #tpu.pipeline_mode<synchronous>, transform_indices = @transform_30, window_bounds = array<i64: 128, 128>}, {pipeline_mode = #tpu.pipeline_mode<synchronous>, transform_indices = @transform_31, window_bounds = array<i64: 1, 128>}, {pipeline_mode = #tpu.pipeline_mode<synchronous>, transform_indices = @transform_32, window_bounds = array<i64: 48, 128>}]} {
    %c0 = arith.constant 0 : index
    %c0_0 = arith.constant 0 : index
    %0 = vector.load %arg1[%c0, %c0_0] : memref<48x128xf32, #tpu.memory_space<vmem>>, vector<48x128xf32>
    %c0_1 = arith.constant 0 : index
    %c0_2 = arith.constant 0 : index
    %1 = vector.load %arg2[%c0_1, %c0_2] : memref<128x128xf32, #tpu.memory_space<vmem>>, vector<128x128xf32>
    %cst = arith.constant dense<0.000000e+00> : vector<48x128xf32>
    %2 = tpu.matmul %0, %1, %cst {dimension_numbers = #tpu.dot_dimension_numbers<[1], [0], [0], [1], [0, 0, 1, 1], [], []>} : vector<48x128xf32>, vector<128x128xf32>, vector<48x128xf32> -> vector<48x128xf32>
    %c0_3 = arith.constant 0 : index
    %c0_4 = arith.constant 0 : index
    %3 = vector.load %arg3[%c0_3, %c0_4] : memref<48x128xf32, #tpu.memory_space<vmem>>, vector<48x128xf32>
    %4 = arith.addf %2, %3 : vector<48x128xf32>
    %5 = tpu.iota {dimensions = array<i32: 1>} : vector<1x128xi32>
    %c0_i32 = arith.constant 0 : i32
    %6 = vector.broadcast %c0_i32 : i32 to vector<1x128xi32>
    %7 = arith.cmpi sge, %5, %6 : vector<1x128xi32>
    %c12_i32 = arith.constant 12 : i32
    %8 = vector.broadcast %c12_i32 : i32 to vector<1x128xi32>
    %9 = arith.cmpi slt, %5, %8 : vector<1x128xi32>
    %10 = arith.andi %7, %9 : vector<1x128xi1>
    %11 = arith.extui %10 : vector<1x128xi1> to vector<1x128xi32>
    %12 = arith.sitofp %11 : vector<1x128xi32> to vector<1x128xf32>
    %c12_i32_5 = arith.constant 12 : i32
    %13 = vector.broadcast %c12_i32_5 : i32 to vector<1x128xi32>
    %14 = arith.cmpi sge, %5, %13 : vector<1x128xi32>
    %c24_i32 = arith.constant 24 : i32
    %15 = vector.broadcast %c24_i32 : i32 to vector<1x128xi32>
    %16 = arith.cmpi slt, %5, %15 : vector<1x128xi32>
    %17 = arith.andi %14, %16 : vector<1x128xi1>
    %18 = arith.extui %17 : vector<1x128xi1> to vector<1x128xi32>
    %19 = arith.sitofp %18 : vector<1x128xi32> to vector<1x128xf32>
    %c24_i32_6 = arith.constant 24 : i32
    %20 = vector.broadcast %c24_i32_6 : i32 to vector<1x128xi32>
    %21 = arith.cmpi sge, %5, %20 : vector<1x128xi32>
    %c36_i32 = arith.constant 36 : i32
    %22 = vector.broadcast %c36_i32 : i32 to vector<1x128xi32>
    %23 = arith.cmpi slt, %5, %22 : vector<1x128xi32>
    %24 = arith.andi %21, %23 : vector<1x128xi1>
    %25 = arith.extui %24 : vector<1x128xi1> to vector<1x128xi32>
    %26 = arith.sitofp %25 : vector<1x128xi32> to vector<1x128xf32>
    %c36_i32_7 = arith.constant 36 : i32
    %27 = vector.broadcast %c36_i32_7 : i32 to vector<1x128xi32>
    %28 = arith.cmpi sge, %5, %27 : vector<1x128xi32>
    %c48_i32 = arith.constant 48 : i32
    %29 = vector.broadcast %c48_i32 : i32 to vector<1x128xi32>
    %30 = arith.cmpi slt, %5, %29 : vector<1x128xi32>
    %31 = arith.andi %28, %30 : vector<1x128xi1>
    %32 = arith.extui %31 : vector<1x128xi1> to vector<1x128xi32>
    %33 = arith.sitofp %32 : vector<1x128xi32> to vector<1x128xf32>
    %c0_8 = arith.constant 0 : index
    %c0_9 = arith.constant 0 : index
    %34 = vector.load %arg4[%c0_8, %c0_9] : memref<48x48xf32, #tpu.memory_space<vmem>>, vector<48x48xf32>
    %c0_10 = arith.constant 0 : index
    %c0_11 = arith.constant 0 : index
    %35 = vector.load %arg5[%c0_10, %c0_11] : memref<1x128xf32, #tpu.memory_space<vmem>>, vector<1x128xf32>
    %c0_12 = arith.constant 0 : index
    %c0_13 = arith.constant 0 : index
    %36 = vector.load %arg6[%c0_12, %c0_13] : memref<1x128xf32, #tpu.memory_space<vmem>>, vector<1x128xf32>
    %cst_14 = arith.constant dense<0.000000e+00> : vector<48xf32>
    %37 = vector.multi_reduction <add>, %4, %cst_14 [1] : vector<48x128xf32> to vector<48xf32>
    %38 = vector.shape_cast %37 : vector<48xf32> to vector<48x1xf32>
    %39 = arith.mulf %4, %4 : vector<48x128xf32>
    %cst_15 = arith.constant dense<0.000000e+00> : vector<48xf32>
    %40 = vector.multi_reduction <add>, %39, %cst_15 [1] : vector<48x128xf32> to vector<48xf32>
    %41 = vector.shape_cast %40 : vector<48xf32> to vector<48x1xf32>
    %cst_16 = arith.constant 4.800000e+01 : f32
    %42 = vector.broadcast %cst_16 : f32 to vector<48x1xf32>
    %43 = arith.divf %38, %42 : vector<48x1xf32>
    %cst_17 = arith.constant 4.800000e+01 : f32
    %44 = vector.broadcast %cst_17 : f32 to vector<48x1xf32>
    %45 = arith.divf %41, %44 : vector<48x1xf32>
    %46 = arith.mulf %43, %43 : vector<48x1xf32>
    %47 = arith.subf %45, %46 : vector<48x1xf32>
    %48 = vector.broadcast %43 : vector<48x1xf32> to vector<48x128xf32>
    %49 = arith.subf %4, %48 : vector<48x128xf32>
    %cst_18 = arith.constant 9.99999974E-6 : f32
    %50 = vector.broadcast %cst_18 : f32 to vector<48x1xf32>
    %51 = arith.addf %47, %50 : vector<48x1xf32>
    %52 = math.rsqrt %51 : vector<48x1xf32>
    %53 = vector.broadcast %52 : vector<48x1xf32> to vector<48x128xf32>
    %54 = arith.mulf %49, %53 : vector<48x128xf32>
    %55 = vector.broadcast %35 : vector<1x128xf32> to vector<48x128xf32>
    %56 = arith.mulf %54, %55 : vector<48x128xf32>
    %57 = vector.broadcast %36 : vector<1x128xf32> to vector<48x128xf32>
    %58 = arith.addf %56, %57 : vector<48x128xf32>
    %c0_19 = arith.constant 0 : index
    %c0_20 = arith.constant 0 : index
    %59 = vector.load %arg7[%c0_19, %c0_20] : memref<128x384xf32, #tpu.memory_space<vmem>>, vector<128x384xf32>
    %cst_21 = arith.constant dense<0.000000e+00> : vector<48x384xf32>
    %60 = tpu.matmul %58, %59, %cst_21 {dimension_numbers = #tpu.dot_dimension_numbers<[1], [0], [0], [1], [0, 0, 1, 1], [], []>} : vector<48x128xf32>, vector<128x384xf32>, vector<48x384xf32> -> vector<48x384xf32>
    %c0_22 = arith.constant 0 : index
    %c0_23 = arith.constant 0 : index
    %61 = vector.load %arg8[%c0_22, %c0_23] : memref<1x384xf32, #tpu.memory_space<vmem>>, vector<1x384xf32>
    %62 = vector.broadcast %61 : vector<1x384xf32> to vector<48x384xf32>
    %63 = arith.addf %60, %62 : vector<48x384xf32>
    %64 = vector.extract_strided_slice %63 {offsets = [0, 0], sizes = [48, 128], strides = [1, 1]} : vector<48x384xf32> to vector<48x128xf32>
    %65 = vector.extract_strided_slice %63 {offsets = [0, 128], sizes = [48, 128], strides = [1, 1]} : vector<48x384xf32> to vector<48x128xf32>
    %66 = vector.extract_strided_slice %63 {offsets = [0, 256], sizes = [48, 128], strides = [1, 1]} : vector<48x384xf32> to vector<48x128xf32>
    %cst_24 = arith.constant 0.000000e+00 : f32
    %67 = vector.broadcast %cst_24 : f32 to vector<48x128xf32>
    %68 = vector.broadcast %12 : vector<1x128xf32> to vector<48x128xf32>
    %69 = arith.mulf %65, %68 : vector<48x128xf32>
    %70 = vector.broadcast %12 : vector<1x128xf32> to vector<48x128xf32>
    %71 = arith.mulf %66, %70 : vector<48x128xf32>
    %cst_25 = arith.constant dense<0.000000e+00> : vector<48x48xf32>
    %72 = tpu.matmul %64, %69, %cst_25 {dimension_numbers = #tpu.dot_dimension_numbers<[1], [1], [0], [0], [0, 0, 1, 0], [], []>} : vector<48x128xf32>, vector<48x128xf32>, vector<48x48xf32> -> vector<48x48xf32>
    %73 = arith.addf %72, %34 : vector<48x48xf32>
    %cst_26 = arith.constant dense<0xFF800000> : vector<48xf32>
    %74 = vector.multi_reduction <maximumf>, %73, %cst_26 [1] : vector<48x48xf32> to vector<48xf32>
    %75 = vector.shape_cast %74 : vector<48xf32> to vector<48x1xf32>
    %76 = vector.broadcast %75 : vector<48x1xf32> to vector<48x48xf32>
    %77 = arith.subf %73, %76 : vector<48x48xf32>
    %78 = math.exp %77 : vector<48x48xf32>
    %cst_27 = arith.constant dense<0.000000e+00> : vector<48xf32>
    %79 = vector.multi_reduction <add>, %78, %cst_27 [1] : vector<48x48xf32> to vector<48xf32>
    %80 = vector.shape_cast %79 : vector<48xf32> to vector<48x1xf32>
    %81 = tpu.reciprocal %80 {approx = true} : vector<48x1xf32> -> vector<48x1xf32>
    %82 = vector.broadcast %81 : vector<48x1xf32> to vector<48x48xf32>
    %83 = arith.mulf %78, %82 : vector<48x48xf32>
    %cst_28 = arith.constant dense<0.000000e+00> : vector<48x128xf32>
    %84 = tpu.matmul %83, %71, %cst_28 {dimension_numbers = #tpu.dot_dimension_numbers<[1], [0], [0], [1], [0, 0, 1, 1], [], []>} : vector<48x48xf32>, vector<48x128xf32>, vector<48x128xf32> -> vector<48x128xf32>
    %85 = arith.addf %67, %84 : vector<48x128xf32>
    %86 = vector.broadcast %19 : vector<1x128xf32> to vector<48x128xf32>
    %87 = arith.mulf %65, %86 : vector<48x128xf32>
    %88 = vector.broadcast %19 : vector<1x128xf32> to vector<48x128xf32>
    %89 = arith.mulf %66, %88 : vector<48x128xf32>
    %cst_29 = arith.constant dense<0.000000e+00> : vector<48x48xf32>
    %90 = tpu.matmul %64, %87, %cst_29 {dimension_numbers = #tpu.dot_dimension_numbers<[1], [1], [0], [0], [0, 0, 1, 0], [], []>} : vector<48x128xf32>, vector<48x128xf32>, vector<48x48xf32> -> vector<48x48xf32>
    %91 = arith.addf %90, %34 : vector<48x48xf32>
    %cst_30 = arith.constant dense<0xFF800000> : vector<48xf32>
    %92 = vector.multi_reduction <maximumf>, %91, %cst_30 [1] : vector<48x48xf32> to vector<48xf32>
    %93 = vector.shape_cast %92 : vector<48xf32> to vector<48x1xf32>
    %94 = vector.broadcast %93 : vector<48x1xf32> to vector<48x48xf32>
    %95 = arith.subf %91, %94 : vector<48x48xf32>
    %96 = math.exp %95 : vector<48x48xf32>
    %cst_31 = arith.constant dense<0.000000e+00> : vector<48xf32>
    %97 = vector.multi_reduction <add>, %96, %cst_31 [1] : vector<48x48xf32> to vector<48xf32>
    %98 = vector.shape_cast %97 : vector<48xf32> to vector<48x1xf32>
    %99 = tpu.reciprocal %98 {approx = true} : vector<48x1xf32> -> vector<48x1xf32>
    %100 = vector.broadcast %99 : vector<48x1xf32> to vector<48x48xf32>
    %101 = arith.mulf %96, %100 : vector<48x48xf32>
    %cst_32 = arith.constant dense<0.000000e+00> : vector<48x128xf32>
    %102 = tpu.matmul %101, %89, %cst_32 {dimension_numbers = #tpu.dot_dimension_numbers<[1], [0], [0], [1], [0, 0, 1, 1], [], []>} : vector<48x48xf32>, vector<48x128xf32>, vector<48x128xf32> -> vector<48x128xf32>
    %103 = arith.addf %85, %102 : vector<48x128xf32>
    %104 = vector.broadcast %26 : vector<1x128xf32> to vector<48x128xf32>
    %105 = arith.mulf %65, %104 : vector<48x128xf32>
    %106 = vector.broadcast %26 : vector<1x128xf32> to vector<48x128xf32>
    %107 = arith.mulf %66, %106 : vector<48x128xf32>
    %cst_33 = arith.constant dense<0.000000e+00> : vector<48x48xf32>
    %108 = tpu.matmul %64, %105, %cst_33 {dimension_numbers = #tpu.dot_dimension_numbers<[1], [1], [0], [0], [0, 0, 1, 0], [], []>} : vector<48x128xf32>, vector<48x128xf32>, vector<48x48xf32> -> vector<48x48xf32>
    %109 = arith.addf %108, %34 : vector<48x48xf32>
    %cst_34 = arith.constant dense<0xFF800000> : vector<48xf32>
    %110 = vector.multi_reduction <maximumf>, %109, %cst_34 [1] : vector<48x48xf32> to vector<48xf32>
    %111 = vector.shape_cast %110 : vector<48xf32> to vector<48x1xf32>
    %112 = vector.broadcast %111 : vector<48x1xf32> to vector<48x48xf32>
    %113 = arith.subf %109, %112 : vector<48x48xf32>
    %114 = math.exp %113 : vector<48x48xf32>
    %cst_35 = arith.constant dense<0.000000e+00> : vector<48xf32>
    %115 = vector.multi_reduction <add>, %114, %cst_35 [1] : vector<48x48xf32> to vector<48xf32>
    %116 = vector.shape_cast %115 : vector<48xf32> to vector<48x1xf32>
    %117 = tpu.reciprocal %116 {approx = true} : vector<48x1xf32> -> vector<48x1xf32>
    %118 = vector.broadcast %117 : vector<48x1xf32> to vector<48x48xf32>
    %119 = arith.mulf %114, %118 : vector<48x48xf32>
    %cst_36 = arith.constant dense<0.000000e+00> : vector<48x128xf32>
    %120 = tpu.matmul %119, %107, %cst_36 {dimension_numbers = #tpu.dot_dimension_numbers<[1], [0], [0], [1], [0, 0, 1, 1], [], []>} : vector<48x48xf32>, vector<48x128xf32>, vector<48x128xf32> -> vector<48x128xf32>
    %121 = arith.addf %103, %120 : vector<48x128xf32>
    %122 = vector.broadcast %33 : vector<1x128xf32> to vector<48x128xf32>
    %123 = arith.mulf %65, %122 : vector<48x128xf32>
    %124 = vector.broadcast %33 : vector<1x128xf32> to vector<48x128xf32>
    %125 = arith.mulf %66, %124 : vector<48x128xf32>
    %cst_37 = arith.constant dense<0.000000e+00> : vector<48x48xf32>
    %126 = tpu.matmul %64, %123, %cst_37 {dimension_numbers = #tpu.dot_dimension_numbers<[1], [1], [0], [0], [0, 0, 1, 0], [], []>} : vector<48x128xf32>, vector<48x128xf32>, vector<48x48xf32> -> vector<48x48xf32>
    %127 = arith.addf %126, %34 : vector<48x48xf32>
    %cst_38 = arith.constant dense<0xFF800000> : vector<48xf32>
    %128 = vector.multi_reduction <maximumf>, %127, %cst_38 [1] : vector<48x48xf32> to vector<48xf32>
    %129 = vector.shape_cast %128 : vector<48xf32> to vector<48x1xf32>
    %130 = vector.broadcast %129 : vector<48x1xf32> to vector<48x48xf32>
    %131 = arith.subf %127, %130 : vector<48x48xf32>
    %132 = math.exp %131 : vector<48x48xf32>
    %cst_39 = arith.constant dense<0.000000e+00> : vector<48xf32>
    %133 = vector.multi_reduction <add>, %132, %cst_39 [1] : vector<48x48xf32> to vector<48xf32>
    %134 = vector.shape_cast %133 : vector<48xf32> to vector<48x1xf32>
    %135 = tpu.reciprocal %134 {approx = true} : vector<48x1xf32> -> vector<48x1xf32>
    %136 = vector.broadcast %135 : vector<48x1xf32> to vector<48x48xf32>
    %137 = arith.mulf %132, %136 : vector<48x48xf32>
    %cst_40 = arith.constant dense<0.000000e+00> : vector<48x128xf32>
    %138 = tpu.matmul %137, %125, %cst_40 {dimension_numbers = #tpu.dot_dimension_numbers<[1], [0], [0], [1], [0, 0, 1, 1], [], []>} : vector<48x48xf32>, vector<48x128xf32>, vector<48x128xf32> -> vector<48x128xf32>
    %139 = arith.addf %121, %138 : vector<48x128xf32>
    %c0_41 = arith.constant 0 : index
    %c0_42 = arith.constant 0 : index
    %140 = vector.load %arg9[%c0_41, %c0_42] : memref<128x128xf32, #tpu.memory_space<vmem>>, vector<128x128xf32>
    %cst_43 = arith.constant dense<0.000000e+00> : vector<48x128xf32>
    %141 = tpu.matmul %139, %140, %cst_43 {dimension_numbers = #tpu.dot_dimension_numbers<[1], [0], [0], [1], [0, 0, 1, 1], [], []>} : vector<48x128xf32>, vector<128x128xf32>, vector<48x128xf32> -> vector<48x128xf32>
    %c0_44 = arith.constant 0 : index
    %c0_45 = arith.constant 0 : index
    %142 = vector.load %arg10[%c0_44, %c0_45] : memref<1x128xf32, #tpu.memory_space<vmem>>, vector<1x128xf32>
    %143 = vector.broadcast %142 : vector<1x128xf32> to vector<48x128xf32>
    %144 = arith.addf %141, %143 : vector<48x128xf32>
    %145 = arith.addf %4, %144 : vector<48x128xf32>
    %c0_46 = arith.constant 0 : index
    %c0_47 = arith.constant 0 : index
    %146 = vector.load %arg11[%c0_46, %c0_47] : memref<1x128xf32, #tpu.memory_space<vmem>>, vector<1x128xf32>
    %c0_48 = arith.constant 0 : index
    %c0_49 = arith.constant 0 : index
    %147 = vector.load %arg12[%c0_48, %c0_49] : memref<1x128xf32, #tpu.memory_space<vmem>>, vector<1x128xf32>
    %cst_50 = arith.constant dense<0.000000e+00> : vector<48xf32>
    %148 = vector.multi_reduction <add>, %145, %cst_50 [1] : vector<48x128xf32> to vector<48xf32>
    %149 = vector.shape_cast %148 : vector<48xf32> to vector<48x1xf32>
    %150 = arith.mulf %145, %145 : vector<48x128xf32>
    %cst_51 = arith.constant dense<0.000000e+00> : vector<48xf32>
    %151 = vector.multi_reduction <add>, %150, %cst_51 [1] : vector<48x128xf32> to vector<48xf32>
    %152 = vector.shape_cast %151 : vector<48xf32> to vector<48x1xf32>
    %cst_52 = arith.constant 4.800000e+01 : f32
    %153 = vector.broadcast %cst_52 : f32 to vector<48x1xf32>
    %154 = arith.divf %149, %153 : vector<48x1xf32>
    %cst_53 = arith.constant 4.800000e+01 : f32
    %155 = vector.broadcast %cst_53 : f32 to vector<48x1xf32>
    %156 = arith.divf %152, %155 : vector<48x1xf32>
    %157 = arith.mulf %154, %154 : vector<48x1xf32>
    %158 = arith.subf %156, %157 : vector<48x1xf32>
    %159 = vector.broadcast %154 : vector<48x1xf32> to vector<48x128xf32>
    %160 = arith.subf %145, %159 : vector<48x128xf32>
    %cst_54 = arith.constant 9.99999974E-6 : f32
    %161 = vector.broadcast %cst_54 : f32 to vector<48x1xf32>
    %162 = arith.addf %158, %161 : vector<48x1xf32>
    %163 = math.rsqrt %162 : vector<48x1xf32>
    %164 = vector.broadcast %163 : vector<48x1xf32> to vector<48x128xf32>
    %165 = arith.mulf %160, %164 : vector<48x128xf32>
    %166 = vector.broadcast %146 : vector<1x128xf32> to vector<48x128xf32>
    %167 = arith.mulf %165, %166 : vector<48x128xf32>
    %168 = vector.broadcast %147 : vector<1x128xf32> to vector<48x128xf32>
    %169 = arith.addf %167, %168 : vector<48x128xf32>
    %c0_55 = arith.constant 0 : index
    %c0_56 = arith.constant 0 : index
    %170 = vector.load %arg13[%c0_55, %c0_56] : memref<128x128xf32, #tpu.memory_space<vmem>>, vector<128x128xf32>
    %cst_57 = arith.constant dense<0.000000e+00> : vector<48x128xf32>
    %171 = tpu.matmul %169, %170, %cst_57 {dimension_numbers = #tpu.dot_dimension_numbers<[1], [0], [0], [1], [0, 0, 1, 1], [], []>} : vector<48x128xf32>, vector<128x128xf32>, vector<48x128xf32> -> vector<48x128xf32>
    %c0_58 = arith.constant 0 : index
    %c0_59 = arith.constant 0 : index
    %172 = vector.load %arg14[%c0_58, %c0_59] : memref<1x128xf32, #tpu.memory_space<vmem>>, vector<1x128xf32>
    %173 = vector.broadcast %172 : vector<1x128xf32> to vector<48x128xf32>
    %174 = arith.addf %171, %173 : vector<48x128xf32>
    %175 = arith.mulf %174, %174 : vector<48x128xf32>
    %176 = arith.mulf %174, %175 : vector<48x128xf32>
    %cst_60 = arith.constant 4.471500e-02 : f32
    %177 = vector.broadcast %cst_60 : f32 to vector<48x128xf32>
    %178 = arith.mulf %177, %176 : vector<48x128xf32>
    %179 = arith.addf %174, %178 : vector<48x128xf32>
    %cst_61 = arith.constant 0.797884583 : f32
    %180 = vector.broadcast %cst_61 : f32 to vector<48x128xf32>
    %181 = arith.mulf %180, %179 : vector<48x128xf32>
    %182 = math.tanh %181 : vector<48x128xf32>
    %cst_62 = arith.constant 1.000000e+00 : f32
    %183 = vector.broadcast %cst_62 : f32 to vector<48x128xf32>
    %184 = arith.addf %183, %182 : vector<48x128xf32>
    %cst_63 = arith.constant 5.000000e-01 : f32
    %185 = vector.broadcast %cst_63 : f32 to vector<48x128xf32>
    %186 = arith.mulf %185, %184 : vector<48x128xf32>
    %187 = arith.mulf %174, %186 : vector<48x128xf32>
    %c0_64 = arith.constant 0 : index
    %c0_65 = arith.constant 0 : index
    %188 = vector.load %arg15[%c0_64, %c0_65] : memref<128x128xf32, #tpu.memory_space<vmem>>, vector<128x128xf32>
    %cst_66 = arith.constant dense<0.000000e+00> : vector<48x128xf32>
    %189 = tpu.matmul %187, %188, %cst_66 {dimension_numbers = #tpu.dot_dimension_numbers<[1], [0], [0], [1], [0, 0, 1, 1], [], []>} : vector<48x128xf32>, vector<128x128xf32>, vector<48x128xf32> -> vector<48x128xf32>
    %c0_67 = arith.constant 0 : index
    %c0_68 = arith.constant 0 : index
    %190 = vector.load %arg16[%c0_67, %c0_68] : memref<1x128xf32, #tpu.memory_space<vmem>>, vector<1x128xf32>
    %191 = vector.broadcast %190 : vector<1x128xf32> to vector<48x128xf32>
    %192 = arith.addf %189, %191 : vector<48x128xf32>
    %193 = arith.addf %145, %192 : vector<48x128xf32>
    %c0_69 = arith.constant 0 : index
    %c0_70 = arith.constant 0 : index
    %194 = vector.load %arg17[%c0_69, %c0_70] : memref<1x128xf32, #tpu.memory_space<vmem>>, vector<1x128xf32>
    %c0_71 = arith.constant 0 : index
    %c0_72 = arith.constant 0 : index
    %195 = vector.load %arg18[%c0_71, %c0_72] : memref<1x128xf32, #tpu.memory_space<vmem>>, vector<1x128xf32>
    %cst_73 = arith.constant dense<0.000000e+00> : vector<48xf32>
    %196 = vector.multi_reduction <add>, %193, %cst_73 [1] : vector<48x128xf32> to vector<48xf32>
    %197 = vector.shape_cast %196 : vector<48xf32> to vector<48x1xf32>
    %198 = arith.mulf %193, %193 : vector<48x128xf32>
    %cst_74 = arith.constant dense<0.000000e+00> : vector<48xf32>
    %199 = vector.multi_reduction <add>, %198, %cst_74 [1] : vector<48x128xf32> to vector<48xf32>
    %200 = vector.shape_cast %199 : vector<48xf32> to vector<48x1xf32>
    %cst_75 = arith.constant 4.800000e+01 : f32
    %201 = vector.broadcast %cst_75 : f32 to vector<48x1xf32>
    %202 = arith.divf %197, %201 : vector<48x1xf32>
    %cst_76 = arith.constant 4.800000e+01 : f32
    %203 = vector.broadcast %cst_76 : f32 to vector<48x1xf32>
    %204 = arith.divf %200, %203 : vector<48x1xf32>
    %205 = arith.mulf %202, %202 : vector<48x1xf32>
    %206 = arith.subf %204, %205 : vector<48x1xf32>
    %207 = vector.broadcast %202 : vector<48x1xf32> to vector<48x128xf32>
    %208 = arith.subf %193, %207 : vector<48x128xf32>
    %cst_77 = arith.constant 9.99999974E-6 : f32
    %209 = vector.broadcast %cst_77 : f32 to vector<48x1xf32>
    %210 = arith.addf %206, %209 : vector<48x1xf32>
    %211 = math.rsqrt %210 : vector<48x1xf32>
    %212 = vector.broadcast %211 : vector<48x1xf32> to vector<48x128xf32>
    %213 = arith.mulf %208, %212 : vector<48x128xf32>
    %214 = vector.broadcast %194 : vector<1x128xf32> to vector<48x128xf32>
    %215 = arith.mulf %213, %214 : vector<48x128xf32>
    %216 = vector.broadcast %195 : vector<1x128xf32> to vector<48x128xf32>
    %217 = arith.addf %215, %216 : vector<48x128xf32>
    %c0_78 = arith.constant 0 : index
    %c0_79 = arith.constant 0 : index
    %218 = vector.load %arg19[%c0_78, %c0_79] : memref<128x384xf32, #tpu.memory_space<vmem>>, vector<128x384xf32>
    %cst_80 = arith.constant dense<0.000000e+00> : vector<48x384xf32>
    %219 = tpu.matmul %217, %218, %cst_80 {dimension_numbers = #tpu.dot_dimension_numbers<[1], [0], [0], [1], [0, 0, 1, 1], [], []>} : vector<48x128xf32>, vector<128x384xf32>, vector<48x384xf32> -> vector<48x384xf32>
    %c0_81 = arith.constant 0 : index
    %c0_82 = arith.constant 0 : index
    %220 = vector.load %arg20[%c0_81, %c0_82] : memref<1x384xf32, #tpu.memory_space<vmem>>, vector<1x384xf32>
    %221 = vector.broadcast %220 : vector<1x384xf32> to vector<48x384xf32>
    %222 = arith.addf %219, %221 : vector<48x384xf32>
    %223 = vector.extract_strided_slice %222 {offsets = [0, 0], sizes = [48, 128], strides = [1, 1]} : vector<48x384xf32> to vector<48x128xf32>
    %224 = vector.extract_strided_slice %222 {offsets = [0, 128], sizes = [48, 128], strides = [1, 1]} : vector<48x384xf32> to vector<48x128xf32>
    %225 = vector.extract_strided_slice %222 {offsets = [0, 256], sizes = [48, 128], strides = [1, 1]} : vector<48x384xf32> to vector<48x128xf32>
    %cst_83 = arith.constant 0.000000e+00 : f32
    %226 = vector.broadcast %cst_83 : f32 to vector<48x128xf32>
    %227 = vector.broadcast %12 : vector<1x128xf32> to vector<48x128xf32>
    %228 = arith.mulf %224, %227 : vector<48x128xf32>
    %229 = vector.broadcast %12 : vector<1x128xf32> to vector<48x128xf32>
    %230 = arith.mulf %225, %229 : vector<48x128xf32>
    %cst_84 = arith.constant dense<0.000000e+00> : vector<48x48xf32>
    %231 = tpu.matmul %223, %228, %cst_84 {dimension_numbers = #tpu.dot_dimension_numbers<[1], [1], [0], [0], [0, 0, 1, 0], [], []>} : vector<48x128xf32>, vector<48x128xf32>, vector<48x48xf32> -> vector<48x48xf32>
    %232 = arith.addf %231, %34 : vector<48x48xf32>
    %cst_85 = arith.constant dense<0xFF800000> : vector<48xf32>
    %233 = vector.multi_reduction <maximumf>, %232, %cst_85 [1] : vector<48x48xf32> to vector<48xf32>
    %234 = vector.shape_cast %233 : vector<48xf32> to vector<48x1xf32>
    %235 = vector.broadcast %234 : vector<48x1xf32> to vector<48x48xf32>
    %236 = arith.subf %232, %235 : vector<48x48xf32>
    %237 = math.exp %236 : vector<48x48xf32>
    %cst_86 = arith.constant dense<0.000000e+00> : vector<48xf32>
    %238 = vector.multi_reduction <add>, %237, %cst_86 [1] : vector<48x48xf32> to vector<48xf32>
    %239 = vector.shape_cast %238 : vector<48xf32> to vector<48x1xf32>
    %240 = tpu.reciprocal %239 {approx = true} : vector<48x1xf32> -> vector<48x1xf32>
    %241 = vector.broadcast %240 : vector<48x1xf32> to vector<48x48xf32>
    %242 = arith.mulf %237, %241 : vector<48x48xf32>
    %cst_87 = arith.constant dense<0.000000e+00> : vector<48x128xf32>
    %243 = tpu.matmul %242, %230, %cst_87 {dimension_numbers = #tpu.dot_dimension_numbers<[1], [0], [0], [1], [0, 0, 1, 1], [], []>} : vector<48x48xf32>, vector<48x128xf32>, vector<48x128xf32> -> vector<48x128xf32>
    %244 = arith.addf %226, %243 : vector<48x128xf32>
    %245 = vector.broadcast %19 : vector<1x128xf32> to vector<48x128xf32>
    %246 = arith.mulf %224, %245 : vector<48x128xf32>
    %247 = vector.broadcast %19 : vector<1x128xf32> to vector<48x128xf32>
    %248 = arith.mulf %225, %247 : vector<48x128xf32>
    %cst_88 = arith.constant dense<0.000000e+00> : vector<48x48xf32>
    %249 = tpu.matmul %223, %246, %cst_88 {dimension_numbers = #tpu.dot_dimension_numbers<[1], [1], [0], [0], [0, 0, 1, 0], [], []>} : vector<48x128xf32>, vector<48x128xf32>, vector<48x48xf32> -> vector<48x48xf32>
    %250 = arith.addf %249, %34 : vector<48x48xf32>
    %cst_89 = arith.constant dense<0xFF800000> : vector<48xf32>
    %251 = vector.multi_reduction <maximumf>, %250, %cst_89 [1] : vector<48x48xf32> to vector<48xf32>
    %252 = vector.shape_cast %251 : vector<48xf32> to vector<48x1xf32>
    %253 = vector.broadcast %252 : vector<48x1xf32> to vector<48x48xf32>
    %254 = arith.subf %250, %253 : vector<48x48xf32>
    %255 = math.exp %254 : vector<48x48xf32>
    %cst_90 = arith.constant dense<0.000000e+00> : vector<48xf32>
    %256 = vector.multi_reduction <add>, %255, %cst_90 [1] : vector<48x48xf32> to vector<48xf32>
    %257 = vector.shape_cast %256 : vector<48xf32> to vector<48x1xf32>
    %258 = tpu.reciprocal %257 {approx = true} : vector<48x1xf32> -> vector<48x1xf32>
    %259 = vector.broadcast %258 : vector<48x1xf32> to vector<48x48xf32>
    %260 = arith.mulf %255, %259 : vector<48x48xf32>
    %cst_91 = arith.constant dense<0.000000e+00> : vector<48x128xf32>
    %261 = tpu.matmul %260, %248, %cst_91 {dimension_numbers = #tpu.dot_dimension_numbers<[1], [0], [0], [1], [0, 0, 1, 1], [], []>} : vector<48x48xf32>, vector<48x128xf32>, vector<48x128xf32> -> vector<48x128xf32>
    %262 = arith.addf %244, %261 : vector<48x128xf32>
    %263 = vector.broadcast %26 : vector<1x128xf32> to vector<48x128xf32>
    %264 = arith.mulf %224, %263 : vector<48x128xf32>
    %265 = vector.broadcast %26 : vector<1x128xf32> to vector<48x128xf32>
    %266 = arith.mulf %225, %265 : vector<48x128xf32>
    %cst_92 = arith.constant dense<0.000000e+00> : vector<48x48xf32>
    %267 = tpu.matmul %223, %264, %cst_92 {dimension_numbers = #tpu.dot_dimension_numbers<[1], [1], [0], [0], [0, 0, 1, 0], [], []>} : vector<48x128xf32>, vector<48x128xf32>, vector<48x48xf32> -> vector<48x48xf32>
    %268 = arith.addf %267, %34 : vector<48x48xf32>
    %cst_93 = arith.constant dense<0xFF800000> : vector<48xf32>
    %269 = vector.multi_reduction <maximumf>, %268, %cst_93 [1] : vector<48x48xf32> to vector<48xf32>
    %270 = vector.shape_cast %269 : vector<48xf32> to vector<48x1xf32>
    %271 = vector.broadcast %270 : vector<48x1xf32> to vector<48x48xf32>
    %272 = arith.subf %268, %271 : vector<48x48xf32>
    %273 = math.exp %272 : vector<48x48xf32>
    %cst_94 = arith.constant dense<0.000000e+00> : vector<48xf32>
    %274 = vector.multi_reduction <add>, %273, %cst_94 [1] : vector<48x48xf32> to vector<48xf32>
    %275 = vector.shape_cast %274 : vector<48xf32> to vector<48x1xf32>
    %276 = tpu.reciprocal %275 {approx = true} : vector<48x1xf32> -> vector<48x1xf32>
    %277 = vector.broadcast %276 : vector<48x1xf32> to vector<48x48xf32>
    %278 = arith.mulf %273, %277 : vector<48x48xf32>
    %cst_95 = arith.constant dense<0.000000e+00> : vector<48x128xf32>
    %279 = tpu.matmul %278, %266, %cst_95 {dimension_numbers = #tpu.dot_dimension_numbers<[1], [0], [0], [1], [0, 0, 1, 1], [], []>} : vector<48x48xf32>, vector<48x128xf32>, vector<48x128xf32> -> vector<48x128xf32>
    %280 = arith.addf %262, %279 : vector<48x128xf32>
    %281 = vector.broadcast %33 : vector<1x128xf32> to vector<48x128xf32>
    %282 = arith.mulf %224, %281 : vector<48x128xf32>
    %283 = vector.broadcast %33 : vector<1x128xf32> to vector<48x128xf32>
    %284 = arith.mulf %225, %283 : vector<48x128xf32>
    %cst_96 = arith.constant dense<0.000000e+00> : vector<48x48xf32>
    %285 = tpu.matmul %223, %282, %cst_96 {dimension_numbers = #tpu.dot_dimension_numbers<[1], [1], [0], [0], [0, 0, 1, 0], [], []>} : vector<48x128xf32>, vector<48x128xf32>, vector<48x48xf32> -> vector<48x48xf32>
    %286 = arith.addf %285, %34 : vector<48x48xf32>
    %cst_97 = arith.constant dense<0xFF800000> : vector<48xf32>
    %287 = vector.multi_reduction <maximumf>, %286, %cst_97 [1] : vector<48x48xf32> to vector<48xf32>
    %288 = vector.shape_cast %287 : vector<48xf32> to vector<48x1xf32>
    %289 = vector.broadcast %288 : vector<48x1xf32> to vector<48x48xf32>
    %290 = arith.subf %286, %289 : vector<48x48xf32>
    %291 = math.exp %290 : vector<48x48xf32>
    %cst_98 = arith.constant dense<0.000000e+00> : vector<48xf32>
    %292 = vector.multi_reduction <add>, %291, %cst_98 [1] : vector<48x48xf32> to vector<48xf32>
    %293 = vector.shape_cast %292 : vector<48xf32> to vector<48x1xf32>
    %294 = tpu.reciprocal %293 {approx = true} : vector<48x1xf32> -> vector<48x1xf32>
    %295 = vector.broadcast %294 : vector<48x1xf32> to vector<48x48xf32>
    %296 = arith.mulf %291, %295 : vector<48x48xf32>
    %cst_99 = arith.constant dense<0.000000e+00> : vector<48x128xf32>
    %297 = tpu.matmul %296, %284, %cst_99 {dimension_numbers = #tpu.dot_dimension_numbers<[1], [0], [0], [1], [0, 0, 1, 1], [], []>} : vector<48x48xf32>, vector<48x128xf32>, vector<48x128xf32> -> vector<48x128xf32>
    %298 = arith.addf %280, %297 : vector<48x128xf32>
    %c0_100 = arith.constant 0 : index
    %c0_101 = arith.constant 0 : index
    %299 = vector.load %arg21[%c0_100, %c0_101] : memref<128x128xf32, #tpu.memory_space<vmem>>, vector<128x128xf32>
    %cst_102 = arith.constant dense<0.000000e+00> : vector<48x128xf32>
    %300 = tpu.matmul %298, %299, %cst_102 {dimension_numbers = #tpu.dot_dimension_numbers<[1], [0], [0], [1], [0, 0, 1, 1], [], []>} : vector<48x128xf32>, vector<128x128xf32>, vector<48x128xf32> -> vector<48x128xf32>
    %c0_103 = arith.constant 0 : index
    %c0_104 = arith.constant 0 : index
    %301 = vector.load %arg22[%c0_103, %c0_104] : memref<1x128xf32, #tpu.memory_space<vmem>>, vector<1x128xf32>
    %302 = vector.broadcast %301 : vector<1x128xf32> to vector<48x128xf32>
    %303 = arith.addf %300, %302 : vector<48x128xf32>
    %304 = arith.addf %193, %303 : vector<48x128xf32>
    %c0_105 = arith.constant 0 : index
    %c0_106 = arith.constant 0 : index
    %305 = vector.load %arg23[%c0_105, %c0_106] : memref<1x128xf32, #tpu.memory_space<vmem>>, vector<1x128xf32>
    %c0_107 = arith.constant 0 : index
    %c0_108 = arith.constant 0 : index
    %306 = vector.load %arg24[%c0_107, %c0_108] : memref<1x128xf32, #tpu.memory_space<vmem>>, vector<1x128xf32>
    %cst_109 = arith.constant dense<0.000000e+00> : vector<48xf32>
    %307 = vector.multi_reduction <add>, %304, %cst_109 [1] : vector<48x128xf32> to vector<48xf32>
    %308 = vector.shape_cast %307 : vector<48xf32> to vector<48x1xf32>
    %309 = arith.mulf %304, %304 : vector<48x128xf32>
    %cst_110 = arith.constant dense<0.000000e+00> : vector<48xf32>
    %310 = vector.multi_reduction <add>, %309, %cst_110 [1] : vector<48x128xf32> to vector<48xf32>
    %311 = vector.shape_cast %310 : vector<48xf32> to vector<48x1xf32>
    %cst_111 = arith.constant 4.800000e+01 : f32
    %312 = vector.broadcast %cst_111 : f32 to vector<48x1xf32>
    %313 = arith.divf %308, %312 : vector<48x1xf32>
    %cst_112 = arith.constant 4.800000e+01 : f32
    %314 = vector.broadcast %cst_112 : f32 to vector<48x1xf32>
    %315 = arith.divf %311, %314 : vector<48x1xf32>
    %316 = arith.mulf %313, %313 : vector<48x1xf32>
    %317 = arith.subf %315, %316 : vector<48x1xf32>
    %318 = vector.broadcast %313 : vector<48x1xf32> to vector<48x128xf32>
    %319 = arith.subf %304, %318 : vector<48x128xf32>
    %cst_113 = arith.constant 9.99999974E-6 : f32
    %320 = vector.broadcast %cst_113 : f32 to vector<48x1xf32>
    %321 = arith.addf %317, %320 : vector<48x1xf32>
    %322 = math.rsqrt %321 : vector<48x1xf32>
    %323 = vector.broadcast %322 : vector<48x1xf32> to vector<48x128xf32>
    %324 = arith.mulf %319, %323 : vector<48x128xf32>
    %325 = vector.broadcast %305 : vector<1x128xf32> to vector<48x128xf32>
    %326 = arith.mulf %324, %325 : vector<48x128xf32>
    %327 = vector.broadcast %306 : vector<1x128xf32> to vector<48x128xf32>
    %328 = arith.addf %326, %327 : vector<48x128xf32>
    %c0_114 = arith.constant 0 : index
    %c0_115 = arith.constant 0 : index
    %329 = vector.load %arg25[%c0_114, %c0_115] : memref<128x128xf32, #tpu.memory_space<vmem>>, vector<128x128xf32>
    %cst_116 = arith.constant dense<0.000000e+00> : vector<48x128xf32>
    %330 = tpu.matmul %328, %329, %cst_116 {dimension_numbers = #tpu.dot_dimension_numbers<[1], [0], [0], [1], [0, 0, 1, 1], [], []>} : vector<48x128xf32>, vector<128x128xf32>, vector<48x128xf32> -> vector<48x128xf32>
    %c0_117 = arith.constant 0 : index
    %c0_118 = arith.constant 0 : index
    %331 = vector.load %arg26[%c0_117, %c0_118] : memref<1x128xf32, #tpu.memory_space<vmem>>, vector<1x128xf32>
    %332 = vector.broadcast %331 : vector<1x128xf32> to vector<48x128xf32>
    %333 = arith.addf %330, %332 : vector<48x128xf32>
    %334 = arith.mulf %333, %333 : vector<48x128xf32>
    %335 = arith.mulf %333, %334 : vector<48x128xf32>
    %cst_119 = arith.constant 4.471500e-02 : f32
    %336 = vector.broadcast %cst_119 : f32 to vector<48x128xf32>
    %337 = arith.mulf %336, %335 : vector<48x128xf32>
    %338 = arith.addf %333, %337 : vector<48x128xf32>
    %cst_120 = arith.constant 0.797884583 : f32
    %339 = vector.broadcast %cst_120 : f32 to vector<48x128xf32>
    %340 = arith.mulf %339, %338 : vector<48x128xf32>
    %341 = math.tanh %340 : vector<48x128xf32>
    %cst_121 = arith.constant 1.000000e+00 : f32
    %342 = vector.broadcast %cst_121 : f32 to vector<48x128xf32>
    %343 = arith.addf %342, %341 : vector<48x128xf32>
    %cst_122 = arith.constant 5.000000e-01 : f32
    %344 = vector.broadcast %cst_122 : f32 to vector<48x128xf32>
    %345 = arith.mulf %344, %343 : vector<48x128xf32>
    %346 = arith.mulf %333, %345 : vector<48x128xf32>
    %c0_123 = arith.constant 0 : index
    %c0_124 = arith.constant 0 : index
    %347 = vector.load %arg27[%c0_123, %c0_124] : memref<128x128xf32, #tpu.memory_space<vmem>>, vector<128x128xf32>
    %cst_125 = arith.constant dense<0.000000e+00> : vector<48x128xf32>
    %348 = tpu.matmul %346, %347, %cst_125 {dimension_numbers = #tpu.dot_dimension_numbers<[1], [0], [0], [1], [0, 0, 1, 1], [], []>} : vector<48x128xf32>, vector<128x128xf32>, vector<48x128xf32> -> vector<48x128xf32>
    %c0_126 = arith.constant 0 : index
    %c0_127 = arith.constant 0 : index
    %349 = vector.load %arg28[%c0_126, %c0_127] : memref<1x128xf32, #tpu.memory_space<vmem>>, vector<1x128xf32>
    %350 = vector.broadcast %349 : vector<1x128xf32> to vector<48x128xf32>
    %351 = arith.addf %348, %350 : vector<48x128xf32>
    %352 = arith.addf %304, %351 : vector<48x128xf32>
    %c0_128 = arith.constant 0 : index
    %c0_129 = arith.constant 0 : index
    %353 = vector.load %arg29[%c0_128, %c0_129] : memref<1x128xf32, #tpu.memory_space<vmem>>, vector<1x128xf32>
    %c0_130 = arith.constant 0 : index
    %c0_131 = arith.constant 0 : index
    %354 = vector.load %arg30[%c0_130, %c0_131] : memref<1x128xf32, #tpu.memory_space<vmem>>, vector<1x128xf32>
    %cst_132 = arith.constant dense<0.000000e+00> : vector<48xf32>
    %355 = vector.multi_reduction <add>, %352, %cst_132 [1] : vector<48x128xf32> to vector<48xf32>
    %356 = vector.shape_cast %355 : vector<48xf32> to vector<48x1xf32>
    %357 = arith.mulf %352, %352 : vector<48x128xf32>
    %cst_133 = arith.constant dense<0.000000e+00> : vector<48xf32>
    %358 = vector.multi_reduction <add>, %357, %cst_133 [1] : vector<48x128xf32> to vector<48xf32>
    %359 = vector.shape_cast %358 : vector<48xf32> to vector<48x1xf32>
    %cst_134 = arith.constant 4.800000e+01 : f32
    %360 = vector.broadcast %cst_134 : f32 to vector<48x1xf32>
    %361 = arith.divf %356, %360 : vector<48x1xf32>
    %cst_135 = arith.constant 4.800000e+01 : f32
    %362 = vector.broadcast %cst_135 : f32 to vector<48x1xf32>
    %363 = arith.divf %359, %362 : vector<48x1xf32>
    %364 = arith.mulf %361, %361 : vector<48x1xf32>
    %365 = arith.subf %363, %364 : vector<48x1xf32>
    %366 = vector.broadcast %361 : vector<48x1xf32> to vector<48x128xf32>
    %367 = arith.subf %352, %366 : vector<48x128xf32>
    %cst_136 = arith.constant 9.99999974E-6 : f32
    %368 = vector.broadcast %cst_136 : f32 to vector<48x1xf32>
    %369 = arith.addf %365, %368 : vector<48x1xf32>
    %370 = math.rsqrt %369 : vector<48x1xf32>
    %371 = vector.broadcast %370 : vector<48x1xf32> to vector<48x128xf32>
    %372 = arith.mulf %367, %371 : vector<48x128xf32>
    %373 = vector.broadcast %353 : vector<1x128xf32> to vector<48x128xf32>
    %374 = arith.mulf %372, %373 : vector<48x128xf32>
    %375 = vector.broadcast %354 : vector<1x128xf32> to vector<48x128xf32>
    %376 = arith.addf %374, %375 : vector<48x128xf32>
    %c0_137 = arith.constant 0 : index
    %c0_138 = arith.constant 0 : index
    %377 = vector.load %arg31[%c0_137, %c0_138] : memref<128x128xf32, #tpu.memory_space<vmem>>, vector<128x128xf32>
    %cst_139 = arith.constant dense<0.000000e+00> : vector<48x128xf32>
    %378 = tpu.matmul %376, %377, %cst_139 {dimension_numbers = #tpu.dot_dimension_numbers<[1], [0], [0], [1], [0, 0, 1, 1], [], []>} : vector<48x128xf32>, vector<128x128xf32>, vector<48x128xf32> -> vector<48x128xf32>
    %c0_140 = arith.constant 0 : index
    %c0_141 = arith.constant 0 : index
    %379 = vector.load %arg32[%c0_140, %c0_141] : memref<1x128xf32, #tpu.memory_space<vmem>>, vector<1x128xf32>
    %380 = vector.broadcast %379 : vector<1x128xf32> to vector<48x128xf32>
    %381 = arith.addf %378, %380 : vector<48x128xf32>
    %c0_142 = arith.constant 0 : index
    %c0_143 = arith.constant 0 : index
    %382 = vector.load %arg33[%c0_142, %c0_143] : memref<48x128xf32, #tpu.memory_space<vmem>>, vector<48x128xf32>
    tpu.vector_store %arg33[%c0_142, %c0_143], %381 {strides = array<i32>} : memref<48x128xf32, #tpu.memory_space<vmem>>, vector<48x128xf32>,
    return
  }
  func.func @transform_0(%arg0: i32) -> (i32, i32) {
    %c0_i32 = arith.constant 0 : i32
    %c0_i32_0 = arith.constant 0 : i32
    %c0_i32_1 = arith.constant 0 : i32
    return %c0_i32, %c0_i32_0 : i32, i32
  }
  func.func @transform_1(%arg0: i32) -> (i32, i32) {
    %c0_i32 = arith.constant 0 : i32
    %c0_i32_0 = arith.constant 0 : i32
    %c0_i32_1 = arith.constant 0 : i32
    return %c0_i32, %c0_i32_0 : i32, i32
  }
  func.func @transform_2(%arg0: i32) -> (i32, i32) {
    %c0_i32 = arith.constant 0 : i32
    %c0_i32_0 = arith.constant 0 : i32
    %c0_i32_1 = arith.constant 0 : i32
    return %c0_i32, %c0_i32_0 : i32, i32
  }
  func.func @transform_3(%arg0: i32) -> (i32, i32) {
    %c0_i32 = arith.constant 0 : i32
    %c0_i32_0 = arith.constant 0 : i32
    %c0_i32_1 = arith.constant 0 : i32
    return %c0_i32, %c0_i32_0 : i32, i32
  }
  func.func @transform_4(%arg0: i32) -> (i32, i32) {
    %c0_i32 = arith.constant 0 : i32
    %c0_i32_0 = arith.constant 0 : i32
    %c0_i32_1 = arith.constant 0 : i32
    return %c0_i32, %c0_i32_0 : i32, i32
  }
  func.func @transform_5(%arg0: i32) -> (i32, i32) {
    %c0_i32 = arith.constant 0 : i32
    %c0_i32_0 = arith.constant 0 : i32
    %c0_i32_1 = arith.constant 0 : i32
    return %c0_i32, %c0_i32_0 : i32, i32
  }
  func.func @transform_6(%arg0: i32) -> (i32, i32) {
    %c0_i32 = arith.constant 0 : i32
    %c0_i32_0 = arith.constant 0 : i32
    %c0_i32_1 = arith.constant 0 : i32
    return %c0_i32, %c0_i32_0 : i32, i32
  }
  func.func @transform_7(%arg0: i32) -> (i32, i32) {
    %c0_i32 = arith.constant 0 : i32
    %c0_i32_0 = arith.constant 0 : i32
    %c0_i32_1 = arith.constant 0 : i32
    return %c0_i32, %c0_i32_0 : i32, i32
  }
  func.func @transform_8(%arg0: i32) -> (i32, i32) {
    %c0_i32 = arith.constant 0 : i32
    %c0_i32_0 = arith.constant 0 : i32
    %c0_i32_1 = arith.constant 0 : i32
    return %c0_i32, %c0_i32_0 : i32, i32
  }
  func.func @transform_9(%arg0: i32) -> (i32, i32) {
    %c0_i32 = arith.constant 0 : i32
    %c0_i32_0 = arith.constant 0 : i32
    %c0_i32_1 = arith.constant 0 : i32
    return %c0_i32, %c0_i32_0 : i32, i32
  }
  func.func @transform_10(%arg0: i32) -> (i32, i32) {
    %c0_i32 = arith.constant 0 : i32
    %c0_i32_0 = arith.constant 0 : i32
    %c0_i32_1 = arith.constant 0 : i32
    return %c0_i32, %c0_i32_0 : i32, i32
  }
  func.func @transform_11(%arg0: i32) -> (i32, i32) {
    %c0_i32 = arith.constant 0 : i32
    %c0_i32_0 = arith.constant 0 : i32
    %c0_i32_1 = arith.constant 0 : i32
    return %c0_i32, %c0_i32_0 : i32, i32
  }
  func.func @transform_12(%arg0: i32) -> (i32, i32) {
    %c0_i32 = arith.constant 0 : i32
    %c0_i32_0 = arith.constant 0 : i32
    %c0_i32_1 = arith.constant 0 : i32
    return %c0_i32, %c0_i32_0 : i32, i32
  }
  func.func @transform_13(%arg0: i32) -> (i32, i32) {
    %c0_i32 = arith.constant 0 : i32
    %c0_i32_0 = arith.constant 0 : i32
    %c0_i32_1 = arith.constant 0 : i32
    return %c0_i32, %c0_i32_0 : i32, i32
  }
  func.func @transform_14(%arg0: i32) -> (i32, i32) {
    %c0_i32 = arith.constant 0 : i32
    %c0_i32_0 = arith.constant 0 : i32
    %c0_i32_1 = arith.constant 0 : i32
    return %c0_i32, %c0_i32_0 : i32, i32
  }
  func.func @transform_15(%arg0: i32) -> (i32, i32) {
    %c0_i32 = arith.constant 0 : i32
    %c0_i32_0 = arith.constant 0 : i32
    %c0_i32_1 = arith.constant 0 : i32
    return %c0_i32, %c0_i32_0 : i32, i32
  }
  func.func @transform_16(%arg0: i32) -> (i32, i32) {
    %c0_i32 = arith.constant 0 : i32
    %c0_i32_0 = arith.constant 0 : i32
    %c0_i32_1 = arith.constant 0 : i32
    return %c0_i32, %c0_i32_0 : i32, i32
  }
  func.func @transform_17(%arg0: i32) -> (i32, i32) {
    %c0_i32 = arith.constant 0 : i32
    %c0_i32_0 = arith.constant 0 : i32
    %c0_i32_1 = arith.constant 0 : i32
    return %c0_i32, %c0_i32_0 : i32, i32
  }
  func.func @transform_18(%arg0: i32) -> (i32, i32) {
    %c0_i32 = arith.constant 0 : i32
    %c0_i32_0 = arith.constant 0 : i32
    %c0_i32_1 = arith.constant 0 : i32
    return %c0_i32, %c0_i32_0 : i32, i32
  }
  func.func @transform_19(%arg0: i32) -> (i32, i32) {
    %c0_i32 = arith.constant 0 : i32
    %c0_i32_0 = arith.constant 0 : i32
    %c0_i32_1 = arith.constant 0 : i32
    return %c0_i32, %c0_i32_0 : i32, i32
  }
  func.func @transform_20(%arg0: i32) -> (i32, i32) {
    %c0_i32 = arith.constant 0 : i32
    %c0_i32_0 = arith.constant 0 : i32
    %c0_i32_1 = arith.constant 0 : i32
    return %c0_i32, %c0_i32_0 : i32, i32
  }
  func.func @transform_21(%arg0: i32) -> (i32, i32) {
    %c0_i32 = arith.constant 0 : i32
    %c0_i32_0 = arith.constant 0 : i32
    %c0_i32_1 = arith.constant 0 : i32
    return %c0_i32, %c0_i32_0 : i32, i32
  }
  func.func @transform_22(%arg0: i32) -> (i32, i32) {
    %c0_i32 = arith.constant 0 : i32
    %c0_i32_0 = arith.constant 0 : i32
    %c0_i32_1 = arith.constant 0 : i32
    return %c0_i32, %c0_i32_0 : i32, i32
  }
  func.func @transform_23(%arg0: i32) -> (i32, i32) {
    %c0_i32 = arith.constant 0 : i32
    %c0_i32_0 = arith.constant 0 : i32
    %c0_i32_1 = arith.constant 0 : i32
    return %c0_i32, %c0_i32_0 : i32, i32
  }
  func.func @transform_24(%arg0: i32) -> (i32, i32) {
    %c0_i32 = arith.constant 0 : i32
    %c0_i32_0 = arith.constant 0 : i32
    %c0_i32_1 = arith.constant 0 : i32
    return %c0_i32, %c0_i32_0 : i32, i32
  }
  func.func @transform_25(%arg0: i32) -> (i32, i32) {
    %c0_i32 = arith.constant 0 : i32
    %c0_i32_0 = arith.constant 0 : i32
    %c0_i32_1 = arith.constant 0 : i32
    return %c0_i32, %c0_i32_0 : i32, i32
  }
  func.func @transform_26(%arg0: i32) -> (i32, i32) {
    %c0_i32 = arith.constant 0 : i32
    %c0_i32_0 = arith.constant 0 : i32
    %c0_i32_1 = arith.constant 0 : i32
    return %c0_i32, %c0_i32_0 : i32, i32
  }
  func.func @transform_27(%arg0: i32) -> (i32, i32) {
    %c0_i32 = arith.constant 0 : i32
    %c0_i32_0 = arith.constant 0 : i32
    %c0_i32_1 = arith.constant 0 : i32
    return %c0_i32, %c0_i32_0 : i32, i32
  }
  func.func @transform_28(%arg0: i32) -> (i32, i32) {
    %c0_i32 = arith.constant 0 : i32
    %c0_i32_0 = arith.constant 0 : i32
    %c0_i32_1 = arith.constant 0 : i32
    return %c0_i32, %c0_i32_0 : i32, i32
  }
  func.func @transform_29(%arg0: i32) -> (i32, i32) {
    %c0_i32 = arith.constant 0 : i32
    %c0_i32_0 = arith.constant 0 : i32
    %c0_i32_1 = arith.constant 0 : i32
    return %c0_i32, %c0_i32_0 : i32, i32
  }
  func.func @transform_30(%arg0: i32) -> (i32, i32) {
    %c0_i32 = arith.constant 0 : i32
    %c0_i32_0 = arith.constant 0 : i32
    %c0_i32_1 = arith.constant 0 : i32
    return %c0_i32, %c0_i32_0 : i32, i32
  }
  func.func @transform_31(%arg0: i32) -> (i32, i32) {
    %c0_i32 = arith.constant 0 : i32
    %c0_i32_0 = arith.constant 0 : i32
    %c0_i32_1 = arith.constant 0 : i32
    return %c0_i32, %c0_i32_0 : i32, i32
  }
  func.func @transform_32(%arg0: i32) -> (i32, i32) {
    %c0_i32 = arith.constant 0 : i32
    %c0_i32_0 = arith.constant 0 : i32
    %c0_i32_1 = arith.constant 0 : i32
    return %c0_i32, %c0_i32_0 : i32, i32
  }
}

</mosaic_0001>

<llo_original>
// kernel: vit_forward.1
$region0: #{vit_forward.1}
  #allocation0 [shape = 'u32[]', space=smem, size = 0x4, offset = 0x4, fixed_abs, tag = 'smem constant byte address 0x4 - core index']
  #allocation1 [shape = 'u32[144,128]{1,0:T(1,128)}', space=vmem, size = 0x12000, scoped, tag = 'internal scratch']
  %s0 = inlined_call_operand.smem [shape: u32[33], index: -1, kind: input, shape index: {}]
  %s1 = sld [smem:[%s0]]
  %s2 = scalar_lea.smem %s0, 1
  %s3 = sld [smem:[%s2]]
  %s4 = scalar_lea.smem %s0, 2
  %s5 = sld [smem:[%s4]]
  %s6 = scalar_lea.smem %s0, 3
  %s7 = sld [smem:[%s6]]
  %s8 = scalar_lea.smem %s0, 4
  %s9 = sld [smem:[%s8]]
  %s10 = scalar_lea.smem %s0, 5
  %s11 = sld [smem:[%s10]]
  %s12 = scalar_lea.smem %s0, 6
  %s13 = sld [smem:[%s12]]
  %s14 = scalar_lea.smem %s0, 7
  %s15 = sld [smem:[%s14]]
  %s16 = scalar_lea.smem %s0, 8
  %s17 = sld [smem:[%s16]]
  %s18 = scalar_lea.smem %s0, 9
  %s19 = sld [smem:[%s18]]
  %s20 = scalar_lea.smem %s0, 10
  %s21 = sld [smem:[%s20]]
  %s22 = scalar_lea.smem %s0, 11
  %s23 = sld [smem:[%s22]]
  %s24 = scalar_lea.smem %s0, 12
  %s25 = sld [smem:[%s24]]
  %s26 = scalar_lea.smem %s0, 13
  %s27 = sld [smem:[%s26]]
  %s28 = scalar_lea.smem %s0, 14
  %s29 = sld [smem:[%s28]]
  %s30 = scalar_lea.smem %s0, 15
  %s31 = sld [smem:[%s30]]
  %s32 = scalar_lea.smem %s0, 16
  %s33 = sld [smem:[%s32]]
  %s34 = scalar_lea.smem %s0, 17
  %s35 = sld [smem:[%s34]]
  %s36 = scalar_lea.smem %s0, 18
  %s37 = sld [smem:[%s36]]
  %s38 = scalar_lea.smem %s0, 19
  %s39 = sld [smem:[%s38]]
  %s40 = scalar_lea.smem %s0, 20
  %s41 = sld [smem:[%s40]]
  %s42 = scalar_lea.smem %s0, 21
  %s43 = sld [smem:[%s42]]
  %s44 = scalar_lea.smem %s0, 22
  %s45 = sld [smem:[%s44]]
  %s46 = scalar_lea.smem %s0, 23
  %s47 = sld [smem:[%s46]]
  %s48 = scalar_lea.smem %s0, 24
  %s49 = sld [smem:[%s48]]
  %s50 = scalar_lea.smem %s0, 25
  %s51 = sld [smem:[%s50]]
  %s52 = scalar_lea.smem %s0, 26
  %s53 = sld [smem:[%s52]]
  %s54 = scalar_lea.smem %s0, 27
  %s55 = sld [smem:[%s54]]
  %s56 = scalar_lea.smem %s0, 28
  %s57 = sld [smem:[%s56]]
  %s58 = scalar_lea.smem %s0, 29
  %s59 = sld [smem:[%s58]]
  %s60 = scalar_lea.smem %s0, 30
  %s61 = sld [smem:[%s60]]
  %s62 = scalar_lea.smem %s0, 31
  %s63 = sld [smem:[%s62]]
  %s64 = scalar_lea.smem %s0, 32
  %s65 = sld [smem:[%s64]]
  %s66 = sld [smem:[#allocation0]]
  $region146: #{vit_forward.1} parent=0
    _
  %s68 = ssub.s32 1, %s66
  %s69 = scalar_select 0, %s68, %s66
  $region1: #{vit_forward.1} parent=0
    #allocation2 [shape = 'u8[24576]{0}', space=vmem, size = 0x6000, scoped, tag = 'input window, operand 3, single buffered']
    #allocation3 [shape = 's32[1]{0}', space=sflag, size = 0x4, scoped, tag = 'scoped memory for vit_forward.1']
    #allocation4 [shape = 'u8[65536]{0}', space=vmem, size = 0x10000, scoped, tag = 'input window, operand 30, single buffered']
    #allocation5 [shape = 's32[1]{0}', space=sflag, size = 0x4, scoped, tag = 'scoped memory for vit_forward.1']
    %70 = vsyncpa [#allocation3], 0
    %71 = vsyncpa [#allocation5], 0
    // Predicated region
    $region2: #{vit_forward.1} parent=1 // pred_check
      _
    $region3: #{vit_forward.1} parent=1 // pred_check_branch
      %73 = sbr.rel (0) target = $region5
    $region4: #{vit_forward.1} parent=1 // pred_region
      _
    $region5: #{vit_forward.1} parent=1 // pred_fallthru
      _
    // Predicated region
    $region6: #{vit_forward.1} parent=1 // pred_check
      _
    $region7: #{vit_forward.1} parent=1 // pred_check_branch
      %75 = sbr.rel (0) target = $region9
    $region8: #{vit_forward.1} parent=1 // pred_region
      _
    $region9: #{vit_forward.1} parent=1 // pred_fallthru
      _
    // Predicated region
    $region10: #{vit_forward.1} parent=1 // pred_check
      _
    $region11: #{vit_forward.1} parent=1 // pred_check_branch
      %77 = sbr.rel (0) target = $region13
    $region12: #{vit_forward.1} parent=1 // pred_region
      _
    $region13: #{vit_forward.1} parent=1 // pred_fallthru
      _
    // Predicated region
    $region14: #{vit_forward.1} parent=1 // pred_check
      _
    $region15: #{vit_forward.1} parent=1 // pred_check_branch
      %79 = sbr.rel (0) target = $region17
    $region16: #{vit_forward.1} parent=1 // pred_region
      %s81 = ssub.s32 768, 768
      %82 = vsyncadd [#allocation3], %s81
      %s83 = sshll.u32 [#allocation2], 4
      %s84 = int_to_ptr.vmem [resolvable:$true] %s83
      %89 = dma.hbm_to_vmem [thread:$0]  %s7, 768, %s84, [#allocation3], 128, 128, 8
    $region17: #{vit_forward.1} parent=1 // pred_fallthru
      _
    // Predicated region
    $region18: #{vit_forward.1} parent=1 // pred_check
      _
    $region19: #{vit_forward.1} parent=1 // pred_check_branch
      %91 = sbr.rel (0) target = $region21
    $region20: #{vit_forward.1} parent=1 // pred_region
      _
    $region21: #{vit_forward.1} parent=1 // pred_fallthru
      _
    // Predicated region
    $region22: #{vit_forward.1} parent=1 // pred_check
      _
    $region23: #{vit_forward.1} parent=1 // pred_check_branch
      %93 = sbr.rel (0) target = $region25
    $region24: #{vit_forward.1} parent=1 // pred_region
      _
    $region25: #{vit_forward.1} parent=1 // pred_fallthru
      _
    // Predicated region
    $region26: #{vit_forward.1} parent=1 // pred_check
      _
    $region27: #{vit_forward.1} parent=1 // pred_check_branch
      %95 = sbr.rel (0) target = $region29
    $region28: #{vit_forward.1} parent=1 // pred_region
      _
    $region29: #{vit_forward.1} parent=1 // pred_fallthru
      _
    // Predicated region
    $region30: #{vit_forward.1} parent=1 // pred_check
      _
    $region31: #{vit_forward.1} parent=1 // pred_check_branch
      %97 = sbr.rel (0) target = $region33
    $region32: #{vit_forward.1} parent=1 // pred_region
      _
    $region33: #{vit_forward.1} parent=1 // pred_fallthru
      _
    // Predicated region
    $region34: #{vit_forward.1} parent=1 // pred_check
      _
    $region35: #{vit_forward.1} parent=1 // pred_check_branch
      %99 = sbr.rel (0) target = $region37
    $region36: #{vit_forward.1} parent=1 // pred_region
      _
    $region37: #{vit_forward.1} parent=1 // pred_fallthru
      _
    // Predicated region
    $region38: #{vit_forward.1} parent=1 // pred_check
      _
    $region39: #{vit_forward.1} parent=1 // pred_check_branch
      %101 = sbr.rel (0) target = $region41
    $region40: #{vit_forward.1} parent=1 // pred_region
      _
    $region41: #{vit_forward.1} parent=1 // pred_fallthru
      _
    // Predicated region
    $region42: #{vit_forward.1} parent=1 // pred_check
      _
    $region43: #{vit_forward.1} parent=1 // pred_check_branch
      %103 = sbr.rel (0) target = $region45
    $region44: #{vit_forward.1} parent=1 // pred_region
      _
    $region45: #{vit_forward.1} parent=1 // pred_fallthru
      _
    // Predicated region
    $region46: #{vit_forward.1} parent=1 // pred_check
      _
    $region47: #{vit_forward.1} parent=1 // pred_check_branch
      %105 = sbr.rel (0) target = $region49
    $region48: #{vit_forward.1} parent=1 // pred_region
      _
    $region49: #{vit_forward.1} parent=1 // pred_fallthru
      _
    // Predicated region
    $region50: #{vit_forward.1} parent=1 // pred_check
      _
    $region51: #{vit_forward.1} parent=1 // pred_check_branch
      %107 = sbr.rel (0) target = $region53
    $region52: #{vit_forward.1} parent=1 // pred_region
      _
    $region53: #{vit_forward.1} parent=1 // pred_fallthru
      _
    // Predicated region
    $region54: #{vit_forward.1} parent=1 // pred_check
      _
    $region55: #{vit_forward.1} parent=1 // pred_check_branch
      %109 = sbr.rel (0) target = $region57
    $region56: #{vit_forward.1} parent=1 // pred_region
      _
    $region57: #{vit_forward.1} parent=1 // pred_fallthru
      _
    // Predicated region
    $region58: #{vit_forward.1} parent=1 // pred_check
      _
    $region59: #{vit_forward.1} parent=1 // pred_check_branch
      %111 = sbr.rel (0) target = $region61
    $region60: #{vit_forward.1} parent=1 // pred_region
      _
    $region61: #{vit_forward.1} parent=1 // pred_fallthru
      _
    // Predicated region
    $region62: #{vit_forward.1} parent=1 // pred_check
      _
    $region63: #{vit_forward.1} parent=1 // pred_check_branch
      %113 = sbr.rel (0) target = $region65
    $region64: #{vit_forward.1} parent=1 // pred_region
      _
    $region65: #{vit_forward.1} parent=1 // pred_fallthru
      _
    // Predicated region
    $region66: #{vit_forward.1} parent=1 // pred_check
      _
    $region67: #{vit_forward.1} parent=1 // pred_check_branch
      %115 = sbr.rel (0) target = $region69
    $region68: #{vit_forward.1} parent=1 // pred_region
      _
    $region69: #{vit_forward.1} parent=1 // pred_fallthru
      _
    // Predicated region
    $region70: #{vit_forward.1} parent=1 // pred_check
      _
    $region71: #{vit_forward.1} parent=1 // pred_check_branch
      %117 = sbr.rel (0) target = $region73
    $region72: #{vit_forward.1} parent=1 // pred_region
      _
    $region73: #{vit_forward.1} parent=1 // pred_fallthru
      _
    // Predicated region
    $region74: #{vit_forward.1} parent=1 // pred_check
      _
    $region75: #{vit_forward.1} parent=1 // pred_check_branch
      %119 = sbr.rel (0) target = $region77
    $region76: #{vit_forward.1} parent=1 // pred_region
      _
    $region77: #{vit_forward.1} parent=1 // pred_fallthru
      _
    // Predicated region
    $region78: #{vit_forward.1} parent=1 // pred_check
      _
    $region79: #{vit_forward.1} parent=1 // pred_check_branch
      %121 = sbr.rel (0) target = $region81
    $region80: #{vit_forward.1} parent=1 // pred_region
      _
    $region81: #{vit_forward.1} parent=1 // pred_fallthru
      _
    // Predicated region
    $region82: #{vit_forward.1} parent=1 // pred_check
      _
    $region83: #{vit_forward.1} parent=1 // pred_check_branch
      %123 = sbr.rel (0) target = $region85
    $region84: #{vit_forward.1} parent=1 // pred_region
      _
    $region85: #{vit_forward.1} parent=1 // pred_fallthru
      _
    // Predicated region
    $region86: #{vit_forward.1} parent=1 // pred_check
      _
    $region87: #{vit_forward.1} parent=1 // pred_check_branch
      %125 = sbr.rel (0) target = $region89
    $region88: #{vit_forward.1} parent=1 // pred_region
      _
    $region89: #{vit_forward.1} parent=1 // pred_fallthru
      _
    // Predicated region
    $region90: #{vit_forward.1} parent=1 // pred_check
      _
    $region91: #{vit_forward.1} parent=1 // pred_check_branch
      %127 = sbr.rel (0) target = $region93
    $region92: #{vit_forward.1} parent=1 // pred_region
      _
    $region93: #{vit_forward.1} parent=1 // pred_fallthru
      _
    // Predicated region
    $region94: #{vit_forward.1} parent=1 // pred_check
      _
    $region95: #{vit_forward.1} parent=1 // pred_check_branch
      %129 = sbr.rel (0) target = $region97
    $region96: #{vit_forward.1} parent=1 // pred_region
      _
    $region97: #{vit_forward.1} parent=1 // pred_fallthru
      _
    // Predicated region
    $region98: #{vit_forward.1} parent=1 // pred_check
      _
    $region99: #{vit_forward.1} parent=1 // pred_check_branch
      %131 = sbr.rel (0) target = $region101
    $region100: #{vit_forward.1} parent=1 // pred_region
      _
    $region101: #{vit_forward.1} parent=1 // pred_fallthru
      _
    // Predicated region
    $region102: #{vit_forward.1} parent=1 // pred_check
      _
    $region103: #{vit_forward.1} parent=1 // pred_check_branch
      %133 = sbr.rel (0) target = $region105
    $region104: #{vit_forward.1} parent=1 // pred_region
      _
    $region105: #{vit_forward.1} parent=1 // pred_fallthru
      _
    // Predicated region
    $region106: #{vit_forward.1} parent=1 // pred_check
      _
    $region107: #{vit_forward.1} parent=1 // pred_check_branch
      %135 = sbr.rel (0) target = $region109
    $region108: #{vit_forward.1} parent=1 // pred_region
      _
    $region109: #{vit_forward.1} parent=1 // pred_fallthru
      _
    // Predicated region
    $region110: #{vit_forward.1} parent=1 // pred_check
      _
    $region111: #{vit_forward.1} parent=1 // pred_check_branch
      %137 = sbr.rel (0) target = $region113
    $region112: #{vit_forward.1} parent=1 // pred_region
      _
    $region113: #{vit_forward.1} parent=1 // pred_fallthru
      _
    // Predicated region
    $region114: #{vit_forward.1} parent=1 // pred_check
      _
    $region115: #{vit_forward.1} parent=1 // pred_check_branch
      %139 = sbr.rel (0) target = $region117
    $region116: #{vit_forward.1} parent=1 // pred_region
      _
    $region117: #{vit_forward.1} parent=1 // pred_fallthru
      _
    // Predicated region
    $region118: #{vit_forward.1} parent=1 // pred_check
      _
    $region119: #{vit_forward.1} parent=1 // pred_check_branch
      %141 = sbr.rel (0) target = $region121
    $region120: #{vit_forward.1} parent=1 // pred_region
      _
    $region121: #{vit_forward.1} parent=1 // pred_fallthru
      _
    // Predicated region
    $region122: #{vit_forward.1} parent=1 // pred_check
      _
    $region123: #{vit_forward.1} parent=1 // pred_check_branch
      %143 = sbr.rel (0) target = $region125
    $region124: #{vit_forward.1} parent=1 // pred_region
      %s145 = ssub.s32 2048, 2048
      %146 = vsyncadd [#allocation5], %s145
      %s147 = sshll.u32 [#allocation4], 4
      %s148 = int_to_ptr.vmem [resolvable:$true] %s147
      %153 = dma.hbm_to_vmem [thread:$0]  %s61, 2048, %s148, [#allocation5], 128, 128, 8
    $region125: #{vit_forward.1} parent=1 // pred_fallthru
      _
    // Predicated region
    $region126: #{vit_forward.1} parent=1 // pred_check
      _
    $region127: #{vit_forward.1} parent=1 // pred_check_branch
      %155 = sbr.rel (0) target = $region129
    $region128: #{vit_forward.1} parent=1 // pred_region
      _
    $region129: #{vit_forward.1} parent=1 // pred_fallthru
      _
    // Predicated region
    $region130: #{vit_forward.1} parent=1 // pred_check
      _
    $region131: #{vit_forward.1} parent=1 // pred_check_branch
      %157 = sbr.rel (0) target = $region133
    $region132: #{vit_forward.1} parent=1 // pred_region
      %158 = dma.done [#allocation3], 768
    $region133: #{vit_forward.1} parent=1 // pred_fallthru
      _
    // Predicated region
    $region134: #{vit_forward.1} parent=1 // pred_check
      _
    $region135: #{vit_forward.1} parent=1 // pred_check_branch
      %160 = sbr.rel (0) target = $region137
    $region136: #{vit_forward.1} parent=1 // pred_region
      %161 = dma.done [#allocation5], 2048
    $region137: #{vit_forward.1} parent=1 // pred_fallthru
      _
    %v162 = vld [vmem:[%s1] sm:$0xff]
    %v163 = vld [vmem:[%s1 + $0x8] sm:$0xff]
    %v164 = vld [vmem:[%s1 + $0x10] sm:$0xff]
    %v165 = vld [vmem:[%s1 + $0x18] sm:$0xff]
    %v166 = vld [vmem:[%s1 + $0x20] sm:$0xff]
    %v167 = vld [vmem:[%s1 + $0x28] sm:$0xff]
    %v168 = vld [vmem:[%s3] sm:$0xff]
    %v169 = vld [vmem:[%s3 + $0x8] sm:$0xff]
    %v170 = vld [vmem:[%s3 + $0x10] sm:$0xff]
    %v171 = vld [vmem:[%s3 + $0x18] sm:$0xff]
    %v172 = vld [vmem:[%s3 + $0x20] sm:$0xff]
    %v173 = vld [vmem:[%s3 + $0x28] sm:$0xff]
    %v174 = vld [vmem:[%s3 + $0x30] sm:$0xff]
    %v175 = vld [vmem:[%s3 + $0x38] sm:$0xff]
    %v176 = vld [vmem:[%s3 + $0x40] sm:$0xff]
    %v177 = vld [vmem:[%s3 + $0x48] sm:$0xff]
    %v178 = vld [vmem:[%s3 + $0x50] sm:$0xff]
    %v179 = vld [vmem:[%s3 + $0x58] sm:$0xff]
    %v180 = vld [vmem:[%s3 + $0x60] sm:$0xff]
    %v181 = vld [vmem:[%s3 + $0x68] sm:$0xff]
    %v182 = vld [vmem:[%s3 + $0x70] sm:$0xff]
    %v183 = vld [vmem:[%s3 + $0x78] sm:$0xff]
    %v184 = vld [vmem:[%s5] sm:$0xff]
    %v185 = vld [vmem:[%s5 + $0x8] sm:$0xff]
    %v186 = vld [vmem:[%s5 + $0x10] sm:$0xff]
    %v187 = vld [vmem:[%s5 + $0x18] sm:$0xff]
    %v188 = vld [vmem:[%s5 + $0x20] sm:$0xff]
    %v189 = vld [vmem:[%s5 + $0x28] sm:$0xff]
    %190 = vmatprep.subr.mxu0 0.0
    %191 = vmatpush1.msra.mxu0 %v168
    %192 = vmatprep.subr.mxu0 0.0
    %193 = vmatpush1.msra.mxu0 %v169
    %194 = vmatprep.subr.mxu0 0.0
    %195 = vmatpush1.msra.mxu0 %v170
    %196 = vmatprep.subr.mxu0 0.0
    %197 = vmatpush1.msra.mxu0 %v171
    %198 = vmatprep.subr.mxu0 0.0
    %199 = vmatpush1.msra.mxu0 %v172
    %200 = vmatprep.subr.mxu0 0.0
    %201 = vmatpush1.msra.mxu0 %v173
    %202 = vmatprep.subr.mxu0 0.0
    %203 = vmatpush1.msra.mxu0 %v174
    %204 = vmatprep.subr.mxu0 0.0
    %205 = vmatpush1.msra.mxu0 %v175
    %206 = vmatprep.subr.mxu0 0.0
    %207 = vmatpush1.msra.mxu0 %v176
    %208 = vmatprep.subr.mxu0 0.0
    %209 = vmatpush1.msra.mxu0 %v177
    %210 = vmatprep.subr.mxu0 0.0
    %211 = vmatpush1.msra.mxu0 %v178
    %212 = vmatprep.subr.mxu0 0.0
    %213 = vmatpush1.msra.mxu0 %v179
    %214 = vmatprep.subr.mxu0 0.0
    %215 = vmatpush1.msra.mxu0 %v180
    %216 = vmatprep.subr.mxu0 0.0
    %217 = vmatpush1.msra.mxu0 %v181
    %218 = vmatprep.subr.mxu0 0.0
    %219 = vmatpush1.msra.mxu0 %v182
    %220 = vmatprep.subr.mxu0 0.0
    %221 = vmatpush1.msra.mxu0 %v183
    %222 = vmatprep.subr.mxu0 0.0
    %223 = vmatpush1.msra.mxu0 0.0
    %224 = vmatprep.subr.mxu0 0.0
    %225 = vmatpush1.msra.mxu0 0.0
    %226 = vmatprep.subr.mxu0 0.0
    %227 = vmatpush1.msra.mxu0 0.0
    %228 = vmatprep.subr.mxu0 0.0
    %229 = vmatpush1.msra.mxu0 0.0
    %230 = vmatprep.subr.mxu0 0.0
    %231 = vmatpush1.msra.mxu0 0.0
    %232 = vmatprep.subr.mxu0 0.0
    %233 = vmatpush1.msra.mxu0 0.0
    %234 = vmatprep.subr.mxu0 0.0
    %235 = vmatpush1.msra.mxu0 0.0
    %236 = vmatprep.subr.mxu0 0.0
    %237 = vmatpush1.msra.mxu0 0.0
    %238 = vmatprep.subr.mxu0 0.0
    %239 = vmatpush1.msra.mxu0 0.0
    %240 = vmatprep.subr.mxu0 0.0
    %241 = vmatpush1.msra.mxu0 0.0
    %242 = vmatprep.subr.mxu0 0.0
    %243 = vmatpush1.msra.mxu0 0.0
    %244 = vmatprep.subr.mxu0 0.0
    %245 = vmatpush1.msra.mxu0 0.0
    %246 = vmatprep.subr.mxu0 0.0
    %247 = vmatpush1.msra.mxu0 0.0
    %248 = vmatprep.subr.mxu0 0.0
    %249 = vmatpush1.msra.mxu0 0.0
    %250 = vmatprep.subr.mxu0 0.0
    %251 = vmatpush1.msra.mxu0 0.0
    %252 = vmatprep.subr.mxu0 0.0
    %253 = vmatpush1.msra.mxu0 0.0
    %254 = vmatprep.mubr.f32.mxu0 0.0
    %255 = vmatmul.mubr.f32.gmra.mrb[0].mxu0 %v162
    %v256 = vpop.f32.mrb[0].mxu0
    %v257 = vadd.f32 %v184, %v256
    %v258 = vpop.f32.mrb[0].mxu0
    %259 = vmatprep.mubr.f32.mxu0 0.0
    %260 = vmatmul.mubr.f32.gmra.mrb[0].mxu0 %v163
    %v261 = vpop.f32.mrb[0].mxu0
    %v262 = vadd.f32 %v185, %v261
    %v263 = vpop.f32.mrb[0].mxu0
    %264 = vmatprep.mubr.f32.mxu0 0.0
    %265 = vmatmul.mubr.f32.gmra.mrb[0].mxu0 %v164
    %v266 = vpop.f32.mrb[0].mxu0
    %v267 = vadd.f32 %v186, %v266
    %v268 = vpop.f32.mrb[0].mxu0
    %269 = vmatprep.mubr.f32.mxu0 0.0
    %270 = vmatmul.mubr.f32.gmra.mrb[0].mxu0 %v165
    %v271 = vpop.f32.mrb[0].mxu0
    %v272 = vadd.f32 %v187, %v271
    %v273 = vpop.f32.mrb[0].mxu0
    %274 = vmatprep.mubr.f32.mxu0 0.0
    %275 = vmatmul.mubr.f32.gmra.mrb[0].mxu0 %v166
    %v276 = vpop.f32.mrb[0].mxu0
    %v277 = vadd.f32 %v188, %v276
    %v278 = vpop.f32.mrb[0].mxu0
    %279 = vmatprep.mubr.f32.mxu0 0.0
    %280 = vmatmul.mubr.f32.gmra.mrb[0].mxu0 %v167
    %v281 = vpop.f32.mrb[0].mxu0
    %v282 = vadd.f32 %v189, %v281
    %v283 = vpop.f32.mrb[0].mxu0
    %284 = vdwg.mxu0
    %v285 = vlaneseq
    %v286 = vand.u32 %v285, 127
    %vm287 = vcmp.ge.s32.totalorder %v286, 0
    %vm288 = vcmp.lt.s32.totalorder %v286, 12
    %vm289 = vmand %vm287, %vm288
    %v290 = vsel %vm289, 1, 0
    %v291 = vcvt.s32.f32 %v290
    %vm292 = vcmp.ge.s32.totalorder %v286, 12
    %vm293 = vcmp.lt.s32.totalorder %v286, 24
    %vm294 = vmand %vm292, %vm293
    %v295 = vsel %vm294, 1, 0
    %v296 = vcvt.s32.f32 %v295
    %vm297 = vcmp.ge.s32.totalorder %v286, 24
    %vm298 = vcmp.lt.s32.totalorder %v286, 36
    %vm299 = vmand %vm297, %vm298
    %v300 = vsel %vm299, 1, 0
    %v301 = vcvt.s32.f32 %v300
    %vm302 = vcmp.ge.s32.totalorder %v286, 36
    %vm303 = vcmp.lt.s32.totalorder %v286, 48
    %vm304 = vmand %vm302, %vm303
    %v305 = vsel %vm304, 1, 0
    %v306 = vcvt.s32.f32 %v305
    %v307 = vld [vmem:[#allocation2] sm:$0xff]
    %v308 = vld [vmem:[#allocation2 + $0x8] sm:$0xff]
    %v309 = vld [vmem:[#allocation2 + $0x10] sm:$0xff]
    %v310 = vld [vmem:[#allocation2 + $0x18] sm:$0xff]
    %v311 = vld [vmem:[#allocation2 + $0x20] sm:$0xff]
    %v312 = vld [vmem:[#allocation2 + $0x28] sm:$0xff]
    %v313 = vld [vmem:[%s9] sm:$0x1]
    %v314 = vld [vmem:[%s11] sm:$0x1]
    %315 = vadd.xlane.f32.xlu0 %v257
    %v316 = vpop.xlane.xlu0 %315
    %317 = vadd.xlane.f32.xlu0 %v262
    %v318 = vpop.xlane.xlu0 %317
    %319 = vadd.xlane.f32.xlu0 %v267
    %v320 = vpop.xlane.xlu0 %319
    %321 = vadd.xlane.f32.xlu0 %v272
    %v322 = vpop.xlane.xlu0 %321
    %323 = vadd.xlane.f32.xlu0 %v277
    %v324 = vpop.xlane.xlu0 %323
    %325 = vadd.xlane.f32.xlu0 %v282
    %v326 = vpop.xlane.xlu0 %325
    %v327 = vmul.f32 %v257, %v257
    %v328 = vmul.f32 %v262, %v262
    %v329 = vmul.f32 %v267, %v267
    %v330 = vmul.f32 %v272, %v272
    %v331 = vmul.f32 %v277, %v277
    %v332 = vmul.f32 %v282, %v282
    %333 = vadd.xlane.f32.xlu0 %v327
    %v334 = vpop.xlane.xlu0 %333
    %335 = vadd.xlane.f32.xlu0 %v328
    %v336 = vpop.xlane.xlu0 %335
    %337 = vadd.xlane.f32.xlu0 %v329
    %v338 = vpop.xlane.xlu0 %337
    %339 = vadd.xlane.f32.xlu0 %v330
    %v340 = vpop.xlane.xlu0 %339
    %341 = vadd.xlane.f32.xlu0 %v331
    %v342 = vpop.xlane.xlu0 %341
    %343 = vadd.xlane.f32.xlu0 %v332
    %v344 = vpop.xlane.xlu0 %343
    %v345 = vrcp.pop 48.0
    %v346 = vmul.f32 %v316, %v345
    %v347 = vmul.f32 %v318, %v345
    %v348 = vmul.f32 %v320, %v345
    %v349 = vmul.f32 %v322, %v345
    %v350 = vmul.f32 %v324, %v345
    %v351 = vmul.f32 %v326, %v345
    %v352 = vmul.f32 %v334, %v345
    %v353 = vmul.f32 %v336, %v345
    %v354 = vmul.f32 %v338, %v345
    %v355 = vmul.f32 %v340, %v345
    %v356 = vmul.f32 %v342, %v345
    %v357 = vmul.f32 %v344, %v345
    %v358 = vmul.f32 %v346, %v346
    %v359 = vmul.f32 %v347, %v347
    %v360 = vmul.f32 %v348, %v348
    %v361 = vmul.f32 %v349, %v349
    %v362 = vmul.f32 %v350, %v350
    %v363 = vmul.f32 %v351, %v351
    %v364 = vsub.f32 %v352, %v358
    %v365 = vsub.f32 %v353, %v359
    %v366 = vsub.f32 %v354, %v360
    %v367 = vsub.f32 %v355, %v361
    %v368 = vsub.f32 %v356, %v362
    %v369 = vsub.f32 %v357, %v363
    %v370 = vsub.f32 %v257, %v346
    %v371 = vsub.f32 %v262, %v347
    %v372 = vsub.f32 %v267, %v348
    %v373 = vsub.f32 %v272, %v349
    %v374 = vsub.f32 %v277, %v350
    %v375 = vsub.f32 %v282, %v351
    %v376 = vadd.f32 %v364, 1e-05
    %v377 = vadd.f32 %v365, 1e-05
    %v378 = vadd.f32 %v366, 1e-05
    %v379 = vadd.f32 %v367, 1e-05
    %v380 = vadd.f32 %v368, 1e-05
    %v381 = vadd.f32 %v369, 1e-05
    %v382 = vrsqrt.pop %v376
    %v383 = vrsqrt.pop %v377
    %v384 = vrsqrt.pop %v378
    %v385 = vrsqrt.pop %v379
    %v386 = vrsqrt.pop %v380
    %v387 = vrsqrt.pop %v381
    %v388 = vmul.f32 %v370, %v382
    %v389 = vmul.f32 %v371, %v383
    %v390 = vmul.f32 %v372, %v384
    %v391 = vmul.f32 %v373, %v385
    %v392 = vmul.f32 %v374, %v386
    %v393 = vmul.f32 %v375, %v387
    %v395 = vlaneseq
    %v396 = vshrl.u32 %v395, 7
    %v397 = vsub.s32 0, %v396
    %v398 = vrot.slane %v313, %v397
    %v400 = vmul.f32 %v388, %v398
    %v401 = vmul.f32 %v389, %v398
    %v402 = vmul.f32 %v390, %v398
    %v403 = vmul.f32 %v391, %v398
    %v404 = vmul.f32 %v392, %v398
    %v405 = vmul.f32 %v393, %v398
    %v407 = vlaneseq
    %v408 = vshrl.u32 %v407, 7
    %v409 = vsub.s32 0, %v408
    %v410 = vrot.slane %v314, %v409
    %v412 = vadd.f32 %v400, %v410
    %v413 = vadd.f32 %v401, %v410
    %v414 = vadd.f32 %v402, %v410
    %v415 = vadd.f32 %v403, %v410
    %v416 = vadd.f32 %v404, %v410
    %v417 = vadd.f32 %v405, %v410
    %v418 = vld [vmem:[%s13] sm:$0xff]
    %v419 = vld [vmem:[%s13 + $0x8] sm:$0xff]
    %v420 = vld [vmem:[%s13 + $0x10] sm:$0xff]
    %v421 = vld [vmem:[%s13 + $0x18] sm:$0xff]
    %v422 = vld [vmem:[%s13 + $0x20] sm:$0xff]
    %v423 = vld [vmem:[%s13 + $0x28] sm:$0xff]
    %v424 = vld [vmem:[%s13 + $0x30] sm:$0xff]
    %v425 = vld [vmem:[%s13 + $0x38] sm:$0xff]
    %v426 = vld [vmem:[%s13 + $0x40] sm:$0xff]
    %v427 = vld [vmem:[%s13 + $0x48] sm:$0xff]
    %v428 = vld [vmem:[%s13 + $0x50] sm:$0xff]
    %v429 = vld [vmem:[%s13 + $0x58] sm:$0xff]
    %v430 = vld [vmem:[%s13 + $0x60] sm:$0xff]
    %v431 = vld [vmem:[%s13 + $0x68] sm:$0xff]
    %v432 = vld [vmem:[%s13 + $0x70] sm:$0xff]
    %v433 = vld [vmem:[%s13 + $0x78] sm:$0xff]
    %v434 = vld [vmem:[%s13 + $0x80] sm:$0xff]
    %v435 = vld [vmem:[%s13 + $0x88] sm:$0xff]
    %v436 = vld [vmem:[%s13 + $0x90] sm:$0xff]
    %v437 = vld [vmem:[%s13 + $0x98] sm:$0xff]
    %v438 = vld [vmem:[%s13 + $0xa0] sm:$0xff]
    %v439 = vld [vmem:[%s13 + $0xa8] sm:$0xff]
    %v440 = vld [vmem:[%s13 + $0xb0] sm:$0xff]
    %v441 = vld [vmem:[%s13 + $0xb8] sm:$0xff]
    %v442 = vld [vmem:[%s13 + $0xc0] sm:$0xff]
    %v443 = vld [vmem:[%s13 + $0xc8] sm:$0xff]
    %v444 = vld [vmem:[%s13 + $0xd0] sm:$0xff]
    %v445 = vld [vmem:[%s13 + $0xd8] sm:$0xff]
    %v446 = vld [vmem:[%s13 + $0xe0] sm:$0xff]
    %v447 = vld [vmem:[%s13 + $0xe8] sm:$0xff]
    %v448 = vld [vmem:[%s13 + $0xf0] sm:$0xff]
    %v449 = vld [vmem:[%s13 + $0xf8] sm:$0xff]
    %v450 = vld [vmem:[%s13 + $0x100] sm:$0xff]
    %v451 = vld [vmem:[%s13 + $0x108] sm:$0xff]
    %v452 = vld [vmem:[%s13 + $0x110] sm:$0xff]
    %v453 = vld [vmem:[%s13 + $0x118] sm:$0xff]
    %v454 = vld [vmem:[%s13 + $0x120] sm:$0xff]
    %v455 = vld [vmem:[%s13 + $0x128] sm:$0xff]
    %v456 = vld [vmem:[%s13 + $0x130] sm:$0xff]
    %v457 = vld [vmem:[%s13 + $0x138] sm:$0xff]
    %v458 = vld [vmem:[%s13 + $0x140] sm:$0xff]
    %v459 = vld [vmem:[%s13 + $0x148] sm:$0xff]
    %v460 = vld [vmem:[%s13 + $0x150] sm:$0xff]
    %v461 = vld [vmem:[%s13 + $0x158] sm:$0xff]
    %v462 = vld [vmem:[%s13 + $0x160] sm:$0xff]
    %v463 = vld [vmem:[%s13 + $0x168] sm:$0xff]
    %v464 = vld [vmem:[%s13 + $0x170] sm:$0xff]
    %v465 = vld [vmem:[%s13 + $0x178] sm:$0xff]
    %v466 = vld [vmem:[%s15] sm:$0x7]
    %v468 = vlaneseq
    %v469 = vshrl.u32 %v468, 7
    %v470 = vsub.s32 0, %v469
    %v471 = vrot.slane %v466, %v470
    %v472 = vlaneseq
    %v473 = vshrl.u32 %v472, 7
    %v474 = vsub.s32 1, %v473
    %v475 = vrot.slane %v466, %v474
    %v476 = vlaneseq
    %v477 = vshrl.u32 %v476, 7
    %v478 = vsub.s32 2, %v477
    %v479 = vrot.slane %v466, %v478
    %483 = vmatprep.subr.mxu0 %v419
    %484 = vmatpush1.msra.mxu0 %v418
    %485 = vmatprep.subr.mxu0 %v422
    %486 = vmatpush1.msra.mxu0 %v421
    %487 = vmatprep.subr.mxu0 %v425
    %488 = vmatpush1.msra.mxu0 %v424
    %489 = vmatprep.subr.mxu0 %v428
    %490 = vmatpush1.msra.mxu0 %v427
    %491 = vmatprep.subr.mxu0 %v431
    %492 = vmatpush1.msra.mxu0 %v430
    %493 = vmatprep.subr.mxu0 %v434
    %494 = vmatpush1.msra.mxu0 %v433
    %495 = vmatprep.subr.mxu0 %v437
    %496 = vmatpush1.msra.mxu0 %v436
    %497 = vmatprep.subr.mxu0 %v440
    %498 = vmatpush1.msra.mxu0 %v439
    %499 = vmatprep.subr.mxu0 %v443
    %500 = vmatpush1.msra.mxu0 %v442
    %501 = vmatprep.subr.mxu0 %v446
    %502 = vmatpush1.msra.mxu0 %v445
    %503 = vmatprep.subr.mxu0 %v449
    %504 = vmatpush1.msra.mxu0 %v448
    %505 = vmatprep.subr.mxu0 %v452
    %506 = vmatpush1.msra.mxu0 %v451
    %507 = vmatprep.subr.mxu0 %v455
    %508 = vmatpush1.msra.mxu0 %v454
    %509 = vmatprep.subr.mxu0 %v458
    %510 = vmatpush1.msra.mxu0 %v457
    %511 = vmatprep.subr.mxu0 %v461
    %512 = vmatpush1.msra.mxu0 %v460
    %513 = vmatprep.subr.mxu0 %v464
    %514 = vmatpush1.msra.mxu0 %v463
    %515 = vmatprep.subr.mxu0 0.0
    %516 = vmatpush1.msra.mxu0 0.0
    %517 = vmatprep.subr.mxu0 0.0
    %518 = vmatpush1.msra.mxu0 0.0
    %519 = vmatprep.subr.mxu0 0.0
    %520 = vmatpush1.msra.mxu0 0.0
    %521 = vmatprep.subr.mxu0 0.0
    %522 = vmatpush1.msra.mxu0 0.0
    %523 = vmatprep.subr.mxu0 0.0
    %524 = vmatpush1.msra.mxu0 0.0
    %525 = vmatprep.subr.mxu0 0.0
    %526 = vmatpush1.msra.mxu0 0.0
    %527 = vmatprep.subr.mxu0 0.0
    %528 = vmatpush1.msra.mxu0 0.0
    %529 = vmatprep.subr.mxu0 0.0
    %530 = vmatpush1.msra.mxu0 0.0
    %531 = vmatprep.subr.mxu0 0.0
    %532 = vmatpush1.msra.mxu0 0.0
    %533 = vmatprep.subr.mxu0 0.0
    %534 = vmatpush1.msra.mxu0 0.0
    %535 = vmatprep.subr.mxu0 0.0
    %536 = vmatpush1.msra.mxu0 0.0
    %537 = vmatprep.subr.mxu0 0.0
    %538 = vmatpush1.msra.mxu0 0.0
    %539 = vmatprep.subr.mxu0 0.0
    %540 = vmatpush1.msra.mxu0 0.0
    %541 = vmatprep.subr.mxu0 0.0
    %542 = vmatpush1.msra.mxu0 0.0
    %543 = vmatprep.subr.mxu0 0.0
    %544 = vmatpush1.msra.mxu0 0.0
    %545 = vmatprep.subr.mxu0 0.0
    %546 = vmatpush1.msra.mxu0 0.0
    %547 = vmatprep.mubr.f32.mxu0 0.0
    %548 = vmatmul.mubr.f32.gmra.mrb[0].mxu0 %v412
    %v549 = vpop.f32.mrb[0].mxu0
    %v550 = vadd.f32 %v471, %v549
    %v551 = vpop.f32.mrb[0].mxu0
    %v552 = vadd.f32 %v475, %v551
    %553 = vmatprep.mubr.f32.mxu0 0.0
    %554 = vmatmul.mubr.f32.gmra.mrb[0].mxu0 %v413
    %v555 = vpop.f32.mrb[0].mxu0
    %v556 = vadd.f32 %v471, %v555
    %v557 = vpop.f32.mrb[0].mxu0
    %v558 = vadd.f32 %v475, %v557
    %559 = vmatprep.mubr.f32.mxu0 0.0
    %560 = vmatmul.mubr.f32.gmra.mrb[0].mxu0 %v414
    %v561 = vpop.f32.mrb[0].mxu0
    %v562 = vadd.f32 %v471, %v561
    %v563 = vpop.f32.mrb[0].mxu0
    %v564 = vadd.f32 %v475, %v563
    %565 = vmatprep.mubr.f32.mxu0 0.0
    %566 = vmatmul.mubr.f32.gmra.mrb[0].mxu0 %v415
    %v567 = vpop.f32.mrb[0].mxu0
    %v568 = vadd.f32 %v471, %v567
    %v569 = vpop.f32.mrb[0].mxu0
    %v570 = vadd.f32 %v475, %v569
    %571 = vmatprep.mubr.f32.mxu0 0.0
    %572 = vmatmul.mubr.f32.gmra.mrb[0].mxu0 %v416
    %v573 = vpop.f32.mrb[0].mxu0
    %v574 = vadd.f32 %v471, %v573
    %v575 = vpop.f32.mrb[0].mxu0
    %v576 = vadd.f32 %v475, %v575
    %577 = vmatprep.mubr.f32.mxu0 0.0
    %578 = vmatmul.mubr.f32.gmra.mrb[0].mxu0 %v417
    %v579 = vpop.f32.mrb[0].mxu0
    %v580 = vadd.f32 %v471, %v579
    %v581 = vpop.f32.mrb[0].mxu0
    %v582 = vadd.f32 %v475, %v581
    %583 = vdwg.mxu0
    %584 = vmatprep.subr.mxu0 0.0
    %585 = vmatpush1.msra.mxu0 %v420
    %586 = vmatprep.subr.mxu0 0.0
    %587 = vmatpush1.msra.mxu0 %v423
    %588 = vmatprep.subr.mxu0 0.0
    %589 = vmatpush1.msra.mxu0 %v426
    %590 = vmatprep.subr.mxu0 0.0
    %591 = vmatpush1.msra.mxu0 %v429
    %592 = vmatprep.subr.mxu0 0.0
    %593 = vmatpush1.msra.mxu0 %v432
    %594 = vmatprep.subr.mxu0 0.0
    %595 = vmatpush1.msra.mxu0 %v435
    %596 = vmatprep.subr.mxu0 0.0
    %597 = vmatpush1.msra.mxu0 %v438
    %598 = vmatprep.subr.mxu0 0.0
    %599 = vmatpush1.msra.mxu0 %v441
    %600 = vmatprep.subr.mxu0 0.0
    %601 = vmatpush1.msra.mxu0 %v444
    %602 = vmatprep.subr.mxu0 0.0
    %603 = vmatpush1.msra.mxu0 %v447
    %604 = vmatprep.subr.mxu0 0.0
    %605 = vmatpush1.msra.mxu0 %v450
    %606 = vmatprep.subr.mxu0 0.0
    %607 = vmatpush1.msra.mxu0 %v453
    %608 = vmatprep.subr.mxu0 0.0
    %609 = vmatpush1.msra.mxu0 %v456
    %610 = vmatprep.subr.mxu0 0.0
    %611 = vmatpush1.msra.mxu0 %v459
    %612 = vmatprep.subr.mxu0 0.0
    %613 = vmatpush1.msra.mxu0 %v462
    %614 = vmatprep.subr.mxu0 0.0
    %615 = vmatpush1.msra.mxu0 %v465
    %616 = vmatprep.subr.mxu0 0.0
    %617 = vmatpush1.msra.mxu0 0.0
    %618 = vmatprep.subr.mxu0 0.0
    %619 = vmatpush1.msra.mxu0 0.0
    %620 = vmatprep.subr.mxu0 0.0
    %621 = vmatpush1.msra.mxu0 0.0
    %622 = vmatprep.subr.mxu0 0.0
    %623 = vmatpush1.msra.mxu0 0.0
    %624 = vmatprep.subr.mxu0 0.0
    %625 = vmatpush1.msra.mxu0 0.0
    %626 = vmatprep.subr.mxu0 0.0
    %627 = vmatpush1.msra.mxu0 0.0
    %628 = vmatprep.subr.mxu0 0.0
    %629 = vmatpush1.msra.mxu0 0.0
    %630 = vmatprep.subr.mxu0 0.0
    %631 = vmatpush1.msra.mxu0 0.0
    %632 = vmatprep.subr.mxu0 0.0
    %633 = vmatpush1.msra.mxu0 0.0
    %634 = vmatprep.subr.mxu0 0.0
    %635 = vmatpush1.msra.mxu0 0.0
    %636 = vmatprep.subr.mxu0 0.0
    %637 = vmatpush1.msra.mxu0 0.0
    %638 = vmatprep.subr.mxu0 0.0
    %639 = vmatpush1.msra.mxu0 0.0
    %640 = vmatprep.subr.mxu0 0.0
    %641 = vmatpush1.msra.mxu0 0.0
    %642 = vmatprep.subr.mxu0 0.0
    %643 = vmatpush1.msra.mxu0 0.0
    %644 = vmatprep.subr.mxu0 0.0
    %645 = vmatpush1.msra.mxu0 0.0
    %646 = vmatprep.subr.mxu0 0.0
    %647 = vmatpush1.msra.mxu0 0.0
    %648 = vmatprep.mubr.f32.mxu0 0.0
    %649 = vmatmul.mubr.f32.gmra.mrb[0].mxu0 %v412
    %v650 = vpop.f32.mrb[0].mxu0
    %v651 = vadd.f32 %v479, %v650
    %v652 = vpop.f32.mrb[0].mxu0
    %653 = vmatprep.mubr.f32.mxu0 0.0
    %654 = vmatmul.mubr.f32.gmra.mrb[0].mxu0 %v413
    %v655 = vpop.f32.mrb[0].mxu0
    %v656 = vadd.f32 %v479, %v655
    %v657 = vpop.f32.mrb[0].mxu0
    %658 = vmatprep.mubr.f32.mxu0 0.0
    %659 = vmatmul.mubr.f32.gmra.mrb[0].mxu0 %v414
    %v660 = vpop.f32.mrb[0].mxu0
    %v661 = vadd.f32 %v479, %v660
    %v662 = vpop.f32.mrb[0].mxu0
    %663 = vmatprep.mubr.f32.mxu0 0.0
    %664 = vmatmul.mubr.f32.gmra.mrb[0].mxu0 %v415
    %v665 = vpop.f32.mrb[0].mxu0
    %v666 = vadd.f32 %v479, %v665
    %v667 = vpop.f32.mrb[0].mxu0
    %668 = vmatprep.mubr.f32.mxu0 0.0
    %669 = vmatmul.mubr.f32.gmra.mrb[0].mxu0 %v416
    %v670 = vpop.f32.mrb[0].mxu0
    %v671 = vadd.f32 %v479, %v670
    %v672 = vpop.f32.mrb[0].mxu0
    %673 = vmatprep.mubr.f32.mxu0 0.0
    %674 = vmatmul.mubr.f32.gmra.mrb[0].mxu0 %v417
    %v675 = vpop.f32.mrb[0].mxu0
    %v676 = vadd.f32 %v479, %v675
    %v677 = vpop.f32.mrb[0].mxu0
    %678 = vdwg.mxu0
    %v679 = vmul.f32 %v552, %v291
    %v680 = vmul.f32 %v558, %v291
    %v681 = vmul.f32 %v564, %v291
    %v682 = vmul.f32 %v570, %v291
    %v683 = vmul.f32 %v576, %v291
    %v684 = vmul.f32 %v582, %v291
    %v685 = vmul.f32 %v651, %v291
    %v686 = vmul.f32 %v656, %v291
    %v687 = vmul.f32 %v661, %v291
    %v688 = vmul.f32 %v666, %v291
    %v689 = vmul.f32 %v671, %v291
    %v690 = vmul.f32 %v676, %v291
    %691 = vmatprep.subr.mxu0 0.0
    %692 = vmatpush1.xpose.msra.mxu0 %v679
    %693 = vmatprep.subr.mxu0 0.0
    %694 = vmatpush1.xpose.msra.mxu0 %v680
    %695 = vmatprep.subr.mxu0 0.0
    %696 = vmatpush1.xpose.msra.mxu0 %v681
    %697 = vmatprep.subr.mxu0 0.0
    %698 = vmatpush1.xpose.msra.mxu0 %v682
    %699 = vmatprep.subr.mxu0 0.0
    %700 = vmatpush1.xpose.msra.mxu0 %v683
    %701 = vmatprep.subr.mxu0 0.0
    %702 = vmatpush1.xpose.msra.mxu0 %v684
    %703 = vmatprep.subr.mxu0 0.0
    %704 = vmatpush1.xpose.msra.mxu0 0.0
    %705 = vmatprep.subr.mxu0 0.0
    %706 = vmatpush1.xpose.msra.mxu0 0.0
    %707 = vmatprep.subr.mxu0 0.0
    %708 = vmatpush1.xpose.msra.mxu0 0.0
    %709 = vmatprep.subr.mxu0 0.0
    %710 = vmatpush1.xpose.msra.mxu0 0.0
    %711 = vmatprep.subr.mxu0 0.0
    %712 = vmatpush1.xpose.msra.mxu0 0.0
    %713 = vmatprep.subr.mxu0 0.0
    %714 = vmatpush1.xpose.msra.mxu0 0.0
    %715 = vmatprep.subr.mxu0 0.0
    %716 = vmatpush1.xpose.msra.mxu0 0.0
    %717 = vmatprep.subr.mxu0 0.0
    %718 = vmatpush1.xpose.msra.mxu0 0.0
    %719 = vmatprep.subr.mxu0 0.0
    %720 = vmatpush1.xpose.msra.mxu0 0.0
    %721 = vmatprep.subr.mxu0 0.0
    %722 = vmatpush1.xpose.msra.mxu0 0.0
    %723 = vmatprep.subr.mxu0 0.0
    %724 = vmatpush1.xpose.msra.mxu0 0.0
    %725 = vmatprep.subr.mxu0 0.0
    %726 = vmatpush1.xpose.msra.mxu0 0.0
    %727 = vmatprep.subr.mxu0 0.0
    %728 = vmatpush1.xpose.msra.mxu0 0.0
    %729 = vmatprep.subr.mxu0 0.0
    %730 = vmatpush1.xpose.msra.mxu0 0.0
    %731 = vmatprep.subr.mxu0 0.0
    %732 = vmatpush1.xpose.msra.mxu0 0.0
    %733 = vmatprep.subr.mxu0 0.0
    %734 = vmatpush1.xpose.msra.mxu0 0.0
    %735 = vmatprep.subr.mxu0 0.0
    %736 = vmatpush1.xpose.msra.mxu0 0.0
    %737 = vmatprep.subr.mxu0 0.0
    %738 = vmatpush1.xpose.msra.mxu0 0.0
    %739 = vmatprep.subr.mxu0 0.0
    %740 = vmatpush1.xpose.msra.mxu0 0.0
    %741 = vmatprep.subr.mxu0 0.0
    %742 = vmatpush1.xpose.msra.mxu0 0.0
    %743 = vmatprep.subr.mxu0 0.0
    %744 = vmatpush1.xpose.msra.mxu0 0.0
    %745 = vmatprep.subr.mxu0 0.0
    %746 = vmatpush1.xpose.msra.mxu0 0.0
    %747 = vmatprep.subr.mxu0 0.0
    %748 = vmatpush1.xpose.msra.mxu0 0.0
    %749 = vmatprep.subr.mxu0 0.0
    %750 = vmatpush1.xpose.msra.mxu0 0.0
    %751 = vmatprep.subr.mxu0 0.0
    %752 = vmatpush1.xpose.msra.mxu0 0.0
    %753 = vmatprep.subr.mxu0 0.0
    %754 = vmatpush1.xpose.msra.mxu0 0.0
    %755 = vmatprep.mubr.f32.mxu0 0.0
    %756 = vmatmul.mubr.f32.gmra.mrb[0].mxu0 %v550
    %v757 = vpop.f32.mrb[0].mxu0
    %v758 = vadd.f32 %v307, %v757
    %v759 = vpop.f32.mrb[0].mxu0
    %760 = vmatprep.mubr.f32.mxu0 0.0
    %761 = vmatmul.mubr.f32.gmra.mrb[0].mxu0 %v556
    %v762 = vpop.f32.mrb[0].mxu0
    %v763 = vadd.f32 %v308, %v762
    %v764 = vpop.f32.mrb[0].mxu0
    %765 = vmatprep.mubr.f32.mxu0 0.0
    %766 = vmatmul.mubr.f32.gmra.mrb[0].mxu0 %v562
    %v767 = vpop.f32.mrb[0].mxu0
    %v768 = vadd.f32 %v309, %v767
    %v769 = vpop.f32.mrb[0].mxu0
    %770 = vmatprep.mubr.f32.mxu0 0.0
    %771 = vmatmul.mubr.f32.gmra.mrb[0].mxu0 %v568
    %v772 = vpop.f32.mrb[0].mxu0
    %v773 = vadd.f32 %v310, %v772
    %v774 = vpop.f32.mrb[0].mxu0
    %775 = vmatprep.mubr.f32.mxu0 0.0
    %776 = vmatmul.mubr.f32.gmra.mrb[0].mxu0 %v574
    %v777 = vpop.f32.mrb[0].mxu0
    %v778 = vadd.f32 %v311, %v777
    %v779 = vpop.f32.mrb[0].mxu0
    %780 = vmatprep.mubr.f32.mxu0 0.0
    %781 = vmatmul.mubr.f32.gmra.mrb[0].mxu0 %v580
    %v782 = vpop.f32.mrb[0].mxu0
    %v783 = vadd.f32 %v312, %v782
    %v784 = vpop.f32.mrb[0].mxu0
    %785 = vdwg.mxu0
    %vm786 = vcmask 392192
    %v787 = vsel %vm786, %v758, -inf
    %788 = vmax.xlane.f32.xlu0 %v787
    %v789 = vpop.xlane.xlu0 %788
    %v790 = vsel %vm786, %v763, -inf
    %791 = vmax.xlane.f32.xlu0 %v790
    %v792 = vpop.xlane.xlu0 %791
    %v793 = vsel %vm786, %v768, -inf
    %794 = vmax.xlane.f32.xlu0 %v793
    %v795 = vpop.xlane.xlu0 %794
    %v796 = vsel %vm786, %v773, -inf
    %797 = vmax.xlane.f32.xlu0 %v796
    %v798 = vpop.xlane.xlu0 %797
    %v799 = vsel %vm786, %v778, -inf
    %800 = vmax.xlane.f32.xlu0 %v799
    %v801 = vpop.xlane.xlu0 %800
    %v802 = vsel %vm786, %v783, -inf
    %803 = vmax.xlane.f32.xlu0 %v802
    %v804 = vpop.xlane.xlu0 %803
    %v805 = vsub.f32 %v758, %v789
    %v806 = vsub.f32 %v763, %v792
    %v807 = vsub.f32 %v768, %v795
    %v808 = vsub.f32 %v773, %v798
    %v809 = vsub.f32 %v778, %v801
    %v810 = vsub.f32 %v783, %v804
    %v811 = vmul.f32 %v805, 1.442695
    %v812 = vpow.pop %v811
    %v813 = vmul.f32 %v806, 1.442695
    %v814 = vpow.pop %v813
    %v815 = vmul.f32 %v807, 1.442695
    %v816 = vpow.pop %v815
    %v817 = vmul.f32 %v808, 1.442695
    %v818 = vpow.pop %v817
    %v819 = vmul.f32 %v809, 1.442695
    %v820 = vpow.pop %v819
    %v821 = vmul.f32 %v810, 1.442695
    %v822 = vpow.pop %v821
    %v823 = vsel %vm786, %v812, 0.0
    %824 = vadd.xlane.f32.xlu0 %v823
    %v825 = vpop.xlane.xlu0 %824
    %v826 = vsel %vm786, %v814, 0.0
    %827 = vadd.xlane.f32.xlu0 %v826
    %v828 = vpop.xlane.xlu0 %827
    %v829 = vsel %vm786, %v816, 0.0
    %830 = vadd.xlane.f32.xlu0 %v829
    %v831 = vpop.xlane.xlu0 %830
    %v832 = vsel %vm786, %v818, 0.0
    %833 = vadd.xlane.f32.xlu0 %v832
    %v834 = vpop.xlane.xlu0 %833
    %v835 = vsel %vm786, %v820, 0.0
    %836 = vadd.xlane.f32.xlu0 %v835
    %v837 = vpop.xlane.xlu0 %836
    %v838 = vsel %vm786, %v822, 0.0
    %839 = vadd.xlane.f32.xlu0 %v838
    %v840 = vpop.xlane.xlu0 %839
    %v841 = vrcp.pop %v825
    %v842 = vrcp.pop %v828
    %v843 = vrcp.pop %v831
    %v844 = vrcp.pop %v834
    %v845 = vrcp.pop %v837
    %v846 = vrcp.pop %v840
    %v847 = vmul.f32 %v812, %v841
    %v848 = vmul.f32 %v814, %v842
    %v849 = vmul.f32 %v816, %v843
    %v850 = vmul.f32 %v818, %v844
    %v851 = vmul.f32 %v820, %v845
    %v852 = vmul.f32 %v822, %v846
    %v853 = vmul.f32 %v552, %v296
    %v854 = vmul.f32 %v558, %v296
    %v855 = vmul.f32 %v564, %v296
    %v856 = vmul.f32 %v570, %v296
    %v857 = vmul.f32 %v576, %v296
    %v858 = vmul.f32 %v582, %v296
    %v859 = vmul.f32 %v651, %v296
    %v860 = vmul.f32 %v656, %v296
    %v861 = vmul.f32 %v661, %v296
    %v862 = vmul.f32 %v666, %v296
    %v863 = vmul.f32 %v671, %v296
    %v864 = vmul.f32 %v676, %v296
    %865 = vmatprep.subr.mxu0 0.0
    %866 = vmatpush1.xpose.msra.mxu0 %v853
    %867 = vmatprep.subr.mxu0 0.0
    %868 = vmatpush1.xpose.msra.mxu0 %v854
    %869 = vmatprep.subr.mxu0 0.0
    %870 = vmatpush1.xpose.msra.mxu0 %v855
    %871 = vmatprep.subr.mxu0 0.0
    %872 = vmatpush1.xpose.msra.mxu0 %v856
    %873 = vmatprep.subr.mxu0 0.0
    %874 = vmatpush1.xpose.msra.mxu0 %v857
    %875 = vmatprep.subr.mxu0 0.0
    %876 = vmatpush1.xpose.msra.mxu0 %v858
    %877 = vmatprep.subr.mxu0 0.0
    %878 = vmatpush1.xpose.msra.mxu0 0.0
    %879 = vmatprep.subr.mxu0 0.0
    %880 = vmatpush1.xpose.msra.mxu0 0.0
    %881 = vmatprep.subr.mxu0 0.0
    %882 = vmatpush1.xpose.msra.mxu0 0.0
    %883 = vmatprep.subr.mxu0 0.0
    %884 = vmatpush1.xpose.msra.mxu0 0.0
    %885 = vmatprep.subr.mxu0 0.0
    %886 = vmatpush1.xpose.msra.mxu0 0.0
    %887 = vmatprep.subr.mxu0 0.0
    %888 = vmatpush1.xpose.msra.mxu0 0.0
    %889 = vmatprep.subr.mxu0 0.0
    %890 = vmatpush1.xpose.msra.mxu0 0.0
    %891 = vmatprep.subr.mxu0 0.0
    %892 = vmatpush1.xpose.msra.mxu0 0.0
    %893 = vmatprep.subr.mxu0 0.0
    %894 = vmatpush1.xpose.msra.mxu0 0.0
    %895 = vmatprep.subr.mxu0 0.0
    %896 = vmatpush1.xpose.msra.mxu0 0.0
    %897 = vmatprep.subr.mxu0 0.0
    %898 = vmatpush1.xpose.msra.mxu0 0.0
    %899 = vmatprep.subr.mxu0 0.0
    %900 = vmatpush1.xpose.msra.mxu0 0.0
    %901 = vmatprep.subr.mxu0 0.0
    %902 = vmatpush1.xpose.msra.mxu0 0.0
    %903 = vmatprep.subr.mxu0 0.0
    %904 = vmatpush1.xpose.msra.mxu0 0.0
    %905 = vmatprep.subr.mxu0 0.0
    %906 = vmatpush1.xpose.msra.mxu0 0.0
    %907 = vmatprep.subr.mxu0 0.0
    %908 = vmatpush1.xpose.msra.mxu0 0.0
    %909 = vmatprep.subr.mxu0 0.0
    %910 = vmatpush1.xpose.msra.mxu0 0.0
    %911 = vmatprep.subr.mxu0 0.0
    %912 = vmatpush1.xpose.msra.mxu0 0.0
    %913 = vmatprep.subr.mxu0 0.0
    %914 = vmatpush1.xpose.msra.mxu0 0.0
    %915 = vmatprep.subr.mxu0 0.0
    %916 = vmatpush1.xpose.msra.mxu0 0.0
    %917 = vmatprep.subr.mxu0 0.0
    %918 = vmatpush1.xpose.msra.mxu0 0.0
    %919 = vmatprep.subr.mxu0 0.0
    %920 = vmatpush1.xpose.msra.mxu0 0.0
    %921 = vmatprep.subr.mxu0 0.0
    %922 = vmatpush1.xpose.msra.mxu0 0.0
    %923 = vmatprep.subr.mxu0 0.0
    %924 = vmatpush1.xpose.msra.mxu0 0.0
    %925 = vmatprep.subr.mxu0 0.0
    %926 = vmatpush1.xpose.msra.mxu0 0.0
    %927 = vmatprep.subr.mxu0 0.0
    %928 = vmatpush1.xpose.msra.mxu0 0.0
    %929 = vmatprep.mubr.f32.mxu0 0.0
    %930 = vmatmul.mubr.f32.gmra.mrb[0].mxu0 %v550
    %v931 = vpop.f32.mrb[0].mxu0
    %v932 = vadd.f32 %v307, %v931
    %v933 = vpop.f32.mrb[0].mxu0
    %934 = vmatprep.mubr.f32.mxu0 0.0
    %935 = vmatmul.mubr.f32.gmra.mrb[0].mxu0 %v556
    %v936 = vpop.f32.mrb[0].mxu0
    %v937 = vadd.f32 %v308, %v936
    %v938 = vpop.f32.mrb[0].mxu0
    %939 = vmatprep.mubr.f32.mxu0 0.0
    %940 = vmatmul.mubr.f32.gmra.mrb[0].mxu0 %v562
    %v941 = vpop.f32.mrb[0].mxu0
    %v942 = vadd.f32 %v309, %v941
    %v943 = vpop.f32.mrb[0].mxu0
    %944 = vmatprep.mubr.f32.mxu0 0.0
    %945 = vmatmul.mubr.f32.gmra.mrb[0].mxu0 %v568
    %v946 = vpop.f32.mrb[0].mxu0
    %v947 = vadd.f32 %v310, %v946
    %v948 = vpop.f32.mrb[0].mxu0
    %949 = vmatprep.mubr.f32.mxu0 0.0
    %950 = vmatmul.mubr.f32.gmra.mrb[0].mxu0 %v574
    %v951 = vpop.f32.mrb[0].mxu0
    %v952 = vadd.f32 %v311, %v951
    %v953 = vpop.f32.mrb[0].mxu0
    %954 = vmatprep.mubr.f32.mxu0 0.0
    %955 = vmatmul.mubr.f32.gmra.mrb[0].mxu0 %v580
    %v956 = vpop.f32.mrb[0].mxu0
    %v957 = vadd.f32 %v312, %v956
    %v958 = vpop.f32.mrb[0].mxu0
    %959 = vdwg.mxu0
    %v960 = vsel %vm786, %v932, -inf
    %961 = vmax.xlane.f32.xlu0 %v960
    %v962 = vpop.xlane.xlu0 %961
    %v963 = vsel %vm786, %v937, -inf
    %964 = vmax.xlane.f32.xlu0 %v963
    %v965 = vpop.xlane.xlu0 %964
    %v966 = vsel %vm786, %v942, -inf
    %967 = vmax.xlane.f32.xlu0 %v966
    %v968 = vpop.xlane.xlu0 %967
    %v969 = vsel %vm786, %v947, -inf
    %970 = vmax.xlane.f32.xlu0 %v969
    %v971 = vpop.xlane.xlu0 %970
    %v972 = vsel %vm786, %v952, -inf
    %973 = vmax.xlane.f32.xlu0 %v972
    %v974 = vpop.xlane.xlu0 %973
    %v975 = vsel %vm786, %v957, -inf
    %976 = vmax.xlane.f32.xlu0 %v975
    %v977 = vpop.xlane.xlu0 %976
    %v978 = vsub.f32 %v932, %v962
    %v979 = vsub.f32 %v937, %v965
    %v980 = vsub.f32 %v942, %v968
    %v981 = vsub.f32 %v947, %v971
    %v982 = vsub.f32 %v952, %v974
    %v983 = vsub.f32 %v957, %v977
    %v984 = vmul.f32 %v978, 1.442695
    %v985 = vpow.pop %v984
    %v986 = vmul.f32 %v979, 1.442695
    %v987 = vpow.pop %v986
    %v988 = vmul.f32 %v980, 1.442695
    %v989 = vpow.pop %v988
    %v990 = vmul.f32 %v981, 1.442695
    %v991 = vpow.pop %v990
    %v992 = vmul.f32 %v982, 1.442695
    %v993 = vpow.pop %v992
    %v994 = vmul.f32 %v983, 1.442695
    %v995 = vpow.pop %v994
    %v996 = vsel %vm786, %v985, 0.0
    %997 = vadd.xlane.f32.xlu0 %v996
    %v998 = vpop.xlane.xlu0 %997
    %v999 = vsel %vm786, %v987, 0.0
    %1000 = vadd.xlane.f32.xlu0 %v999
    %v1001 = vpop.xlane.xlu0 %1000
    %v1002 = vsel %vm786, %v989, 0.0
    %1003 = vadd.xlane.f32.xlu0 %v1002
    %v1004 = vpop.xlane.xlu0 %1003
    %v1005 = vsel %vm786, %v991, 0.0
    %1006 = vadd.xlane.f32.xlu0 %v1005
    %v1007 = vpop.xlane.xlu0 %1006
    %v1008 = vsel %vm786, %v993, 0.0
    %1009 = vadd.xlane.f32.xlu0 %v1008
    %v1010 = vpop.xlane.xlu0 %1009
    %v1011 = vsel %vm786, %v995, 0.0
    %1012 = vadd.xlane.f32.xlu0 %v1011
    %v1013 = vpop.xlane.xlu0 %1012
    %v1014 = vrcp.pop %v998
    %v1015 = vrcp.pop %v1001
    %v1016 = vrcp.pop %v1004
    %v1017 = vrcp.pop %v1007
    %v1018 = vrcp.pop %v1010
    %v1019 = vrcp.pop %v1013
    %v1020 = vmul.f32 %v985, %v1014
    %v1021 = vmul.f32 %v987, %v1015
    %v1022 = vmul.f32 %v989, %v1016
    %v1023 = vmul.f32 %v991, %v1017
    %v1024 = vmul.f32 %v993, %v1018
    %v1025 = vmul.f32 %v995, %v1019
    %v1027 = vsel %vm786, %v1020, 0
    %v1030 = vsel %vm786, %v1021, 0
    %v1033 = vsel %vm786, %v1022, 0
    %v1036 = vsel %vm786, %v1023, 0
    %v1039 = vsel %vm786, %v1024, 0
    %v1042 = vsel %vm786, %v1025, 0
    %1044 = vmatprep.subr.mxu0 0.0
    %1045 = vmatpush1.msra.mxu0 %v859
    %1046 = vmatprep.subr.mxu0 0.0
    %1047 = vmatpush1.msra.mxu0 %v860
    %1048 = vmatprep.subr.mxu0 0.0
    %1049 = vmatpush1.msra.mxu0 %v861
    %1050 = vmatprep.subr.mxu0 0.0
    %1051 = vmatpush1.msra.mxu0 %v862
    %1052 = vmatprep.subr.mxu0 0.0
    %1053 = vmatpush1.msra.mxu0 %v863
    %1054 = vmatprep.subr.mxu0 0.0
    %1055 = vmatpush1.msra.mxu0 %v864
    %1056 = vmatprep.subr.mxu0 0.0
    %1057 = vmatpush1.msra.mxu0 0.0
    %1058 = vmatprep.subr.mxu0 0.0
    %1059 = vmatpush1.msra.mxu0 0.0
    %1060 = vmatprep.subr.mxu0 0.0
    %1061 = vmatpush1.msra.mxu0 0.0
    %1062 = vmatprep.subr.mxu0 0.0
    %1063 = vmatpush1.msra.mxu0 0.0
    %1064 = vmatprep.subr.mxu0 0.0
    %1065 = vmatpush1.msra.mxu0 0.0
    %1066 = vmatprep.subr.mxu0 0.0
    %1067 = vmatpush1.msra.mxu0 0.0
    %1068 = vmatprep.subr.mxu0 0.0
    %1069 = vmatpush1.msra.mxu0 0.0
    %1070 = vmatprep.subr.mxu0 0.0
    %1071 = vmatpush1.msra.mxu0 0.0
    %1072 = vmatprep.subr.mxu0 0.0
    %1073 = vmatpush1.msra.mxu0 0.0
    %1074 = vmatprep.subr.mxu0 0.0
    %1075 = vmatpush1.msra.mxu0 0.0
    %1076 = vmatprep.subr.mxu0 0.0
    %1077 = vmatpush1.msra.mxu0 0.0
    %1078 = vmatprep.subr.mxu0 0.0
    %1079 = vmatpush1.msra.mxu0 0.0
    %1080 = vmatprep.subr.mxu0 0.0
    %1081 = vmatpush1.msra.mxu0 0.0
    %1082 = vmatprep.subr.mxu0 0.0
    %1083 = vmatpush1.msra.mxu0 0.0
    %1084 = vmatprep.subr.mxu0 0.0
    %1085 = vmatpush1.msra.mxu0 0.0
    %1086 = vmatprep.subr.mxu0 0.0
    %1087 = vmatpush1.msra.mxu0 0.0
    %1088 = vmatprep.subr.mxu0 0.0
    %1089 = vmatpush1.msra.mxu0 0.0
    %1090 = vmatprep.subr.mxu0 0.0
    %1091 = vmatpush1.msra.mxu0 0.0
    %1092 = vmatprep.subr.mxu0 0.0
    %1093 = vmatpush1.msra.mxu0 0.0
    %1094 = vmatprep.subr.mxu0 0.0
    %1095 = vmatpush1.msra.mxu0 0.0
    %1096 = vmatprep.subr.mxu0 0.0
    %1097 = vmatpush1.msra.mxu0 0.0
    %1098 = vmatprep.subr.mxu0 0.0
    %1099 = vmatpush1.msra.mxu0 0.0
    %1100 = vmatprep.subr.mxu0 0.0
    %1101 = vmatpush1.msra.mxu0 0.0
    %1102 = vmatprep.subr.mxu0 0.0
    %1103 = vmatpush1.msra.mxu0 0.0
    %1104 = vmatprep.subr.mxu0 0.0
    %1105 = vmatpush1.msra.mxu0 0.0
    %1106 = vmatprep.subr.mxu0 0.0
    %1107 = vmatpush1.msra.mxu0 0.0
    %1108 = vmatprep.mubr.f32.mxu0 0.0
    %1109 = vmatmul.mubr.f32.gmra.mrb[0].mxu0 %v1027
    %v1110 = vpop.f32.mrb[0].mxu0
    %v1111 = vadd.f32 0.0, %v1110
    %v1112 = vpop.f32.mrb[0].mxu0
    %1113 = vmatprep.mubr.f32.mxu0 0.0
    %1114 = vmatmul.mubr.f32.gmra.mrb[0].mxu0 %v1030
    %v1115 = vpop.f32.mrb[0].mxu0
    %v1116 = vadd.f32 0.0, %v1115
    %v1117 = vpop.f32.mrb[0].mxu0
    %1118 = vmatprep.mubr.f32.mxu0 0.0
    %1119 = vmatmul.mubr.f32.gmra.mrb[0].mxu0 %v1033
    %v1120 = vpop.f32.mrb[0].mxu0
    %v1121 = vadd.f32 0.0, %v1120
    %v1122 = vpop.f32.mrb[0].mxu0
    %1123 = vmatprep.mubr.f32.mxu0 0.0
    %1124 = vmatmul.mubr.f32.gmra.mrb[0].mxu0 %v1036
    %v1125 = vpop.f32.mrb[0].mxu0
    %v1126 = vadd.f32 0.0, %v1125
    %v1127 = vpop.f32.mrb[0].mxu0
    %1128 = vmatprep.mubr.f32.mxu0 0.0
    %1129 = vmatmul.mubr.f32.gmra.mrb[0].mxu0 %v1039
    %v1130 = vpop.f32.mrb[0].mxu0
    %v1131 = vadd.f32 0.0, %v1130
    %v1132 = vpop.f32.mrb[0].mxu0
    %1133 = vmatprep.mubr.f32.mxu0 0.0
    %1134 = vmatmul.mubr.f32.gmra.mrb[0].mxu0 %v1042
    %v1135 = vpop.f32.mrb[0].mxu0
    %v1136 = vadd.f32 0.0, %v1135
    %v1137 = vpop.f32.mrb[0].mxu0
    %1138 = vdwg.mxu0
    %v1140 = vsel %vm786, %v847, 0
    %v1143 = vsel %vm786, %v848, 0
    %v1146 = vsel %vm786, %v849, 0
    %v1149 = vsel %vm786, %v850, 0
    %v1152 = vsel %vm786, %v851, 0
    %v1155 = vsel %vm786, %v852, 0
    %1157 = vmatprep.subr.mxu0 0.0
    %1158 = vmatpush1.msra.mxu0 %v685
    %1159 = vmatprep.subr.mxu0 0.0
    %1160 = vmatpush1.msra.mxu0 %v686
    %1161 = vmatprep.subr.mxu0 0.0
    %1162 = vmatpush1.msra.mxu0 %v687
    %1163 = vmatprep.subr.mxu0 0.0
    %1164 = vmatpush1.msra.mxu0 %v688
    %1165 = vmatprep.subr.mxu0 0.0
    %1166 = vmatpush1.msra.mxu0 %v689
    %1167 = vmatprep.subr.mxu0 0.0
    %1168 = vmatpush1.msra.mxu0 %v690
    %1169 = vmatprep.subr.mxu0 0.0
    %1170 = vmatpush1.msra.mxu0 0.0
    %1171 = vmatprep.subr.mxu0 0.0
    %1172 = vmatpush1.msra.mxu0 0.0
    %1173 = vmatprep.subr.mxu0 0.0
    %1174 = vmatpush1.msra.mxu0 0.0
    %1175 = vmatprep.subr.mxu0 0.0
    %1176 = vmatpush1.msra.mxu0 0.0
    %1177 = vmatprep.subr.mxu0 0.0
    %1178 = vmatpush1.msra.mxu0 0.0
    %1179 = vmatprep.subr.mxu0 0.0
    %1180 = vmatpush1.msra.mxu0 0.0
    %1181 = vmatprep.subr.mxu0 0.0
    %1182 = vmatpush1.msra.mxu0 0.0
    %1183 = vmatprep.subr.mxu0 0.0
    %1184 = vmatpush1.msra.mxu0 0.0
    %1185 = vmatprep.subr.mxu0 0.0
    %1186 = vmatpush1.msra.mxu0 0.0
    %1187 = vmatprep.subr.mxu0 0.0
    %1188 = vmatpush1.msra.mxu0 0.0
    %1189 = vmatprep.subr.mxu0 0.0
    %1190 = vmatpush1.msra.mxu0 0.0
    %1191 = vmatprep.subr.mxu0 0.0
    %1192 = vmatpush1.msra.mxu0 0.0
    %1193 = vmatprep.subr.mxu0 0.0
    %1194 = vmatpush1.msra.mxu0 0.0
    %1195 = vmatprep.subr.mxu0 0.0
    %1196 = vmatpush1.msra.mxu0 0.0
    %1197 = vmatprep.subr.mxu0 0.0
    %1198 = vmatpush1.msra.mxu0 0.0
    %1199 = vmatprep.subr.mxu0 0.0
    %1200 = vmatpush1.msra.mxu0 0.0
    %1201 = vmatprep.subr.mxu0 0.0
    %1202 = vmatpush1.msra.mxu0 0.0
    %1203 = vmatprep.subr.mxu0 0.0
    %1204 = vmatpush1.msra.mxu0 0.0
    %1205 = vmatprep.subr.mxu0 0.0
    %1206 = vmatpush1.msra.mxu0 0.0
    %1207 = vmatprep.subr.mxu0 0.0
    %1208 = vmatpush1.msra.mxu0 0.0
    %1209 = vmatprep.subr.mxu0 0.0
    %1210 = vmatpush1.msra.mxu0 0.0
    %1211 = vmatprep.subr.mxu0 0.0
    %1212 = vmatpush1.msra.mxu0 0.0
    %1213 = vmatprep.subr.mxu0 0.0
    %1214 = vmatpush1.msra.mxu0 0.0
    %1215 = vmatprep.subr.mxu0 0.0
    %1216 = vmatpush1.msra.mxu0 0.0
    %1217 = vmatprep.subr.mxu0 0.0
    %1218 = vmatpush1.msra.mxu0 0.0
    %1219 = vmatprep.subr.mxu0 0.0
    %1220 = vmatpush1.msra.mxu0 0.0
    %1221 = vmatprep.mubr.f32.mxu0 0.0
    %1222 = vmatmul.mubr.f32.gmra.mrb[0].mxu0 %v1140
    %v1223 = vpop.f32.mrb[0].mxu0
    %v1224 = vadd.f32 %v1111, %v1223
    %v1225 = vpop.f32.mrb[0].mxu0
    %1226 = vmatprep.mubr.f32.mxu0 0.0
    %1227 = vmatmul.mubr.f32.gmra.mrb[0].mxu0 %v1143
    %v1228 = vpop.f32.mrb[0].mxu0
    %v1229 = vadd.f32 %v1116, %v1228
    %v1230 = vpop.f32.mrb[0].mxu0
    %1231 = vmatprep.mubr.f32.mxu0 0.0
    %1232 = vmatmul.mubr.f32.gmra.mrb[0].mxu0 %v1146
    %v1233 = vpop.f32.mrb[0].mxu0
    %v1234 = vadd.f32 %v1121, %v1233
    %v1235 = vpop.f32.mrb[0].mxu0
    %1236 = vmatprep.mubr.f32.mxu0 0.0
    %1237 = vmatmul.mubr.f32.gmra.mrb[0].mxu0 %v1149
    %v1238 = vpop.f32.mrb[0].mxu0
    %v1239 = vadd.f32 %v1126, %v1238
    %v1240 = vpop.f32.mrb[0].mxu0
    %1241 = vmatprep.mubr.f32.mxu0 0.0
    %1242 = vmatmul.mubr.f32.gmra.mrb[0].mxu0 %v1152
    %v1243 = vpop.f32.mrb[0].mxu0
    %v1244 = vadd.f32 %v1131, %v1243
    %v1245 = vpop.f32.mrb[0].mxu0
    %1246 = vmatprep.mubr.f32.mxu0 0.0
    %1247 = vmatmul.mubr.f32.gmra.mrb[0].mxu0 %v1155
    %v1248 = vpop.f32.mrb[0].mxu0
    %v1249 = vadd.f32 %v1136, %v1248
    %v1250 = vpop.f32.mrb[0].mxu0
    %1251 = vdwg.mxu0
    %v1252 = vmul.f32 %v552, %v301
    %v1253 = vmul.f32 %v558, %v301
    %v1254 = vmul.f32 %v564, %v301
    %v1255 = vmul.f32 %v570, %v301
    %v1256 = vmul.f32 %v576, %v301
    %v1257 = vmul.f32 %v582, %v301
    %v1258 = vmul.f32 %v651, %v301
    %v1259 = vmul.f32 %v656, %v301
    %v1260 = vmul.f32 %v661, %v301
    %v1261 = vmul.f32 %v666, %v301
    %v1262 = vmul.f32 %v671, %v301
    %v1263 = vmul.f32 %v676, %v301
    %1264 = vmatprep.subr.mxu0 0.0
    %1265 = vmatpush1.xpose.msra.mxu0 %v1252
    %1266 = vmatprep.subr.mxu0 0.0
    %1267 = vmatpush1.xpose.msra.mxu0 %v1253
    %1268 = vmatprep.subr.mxu0 0.0
    %1269 = vmatpush1.xpose.msra.mxu0 %v1254
    %1270 = vmatprep.subr.mxu0 0.0
    %1271 = vmatpush1.xpose.msra.mxu0 %v1255
    %1272 = vmatprep.subr.mxu0 0.0
    %1273 = vmatpush1.xpose.msra.mxu0 %v1256
    %1274 = vmatprep.subr.mxu0 0.0
    %1275 = vmatpush1.xpose.msra.mxu0 %v1257
    %1276 = vmatprep.subr.mxu0 0.0
    %1277 = vmatpush1.xpose.msra.mxu0 0.0
    %1278 = vmatprep.subr.mxu0 0.0
    %1279 = vmatpush1.xpose.msra.mxu0 0.0
    %1280 = vmatprep.subr.mxu0 0.0
    %1281 = vmatpush1.xpose.msra.mxu0 0.0
    %1282 = vmatprep.subr.mxu0 0.0
    %1283 = vmatpush1.xpose.msra.mxu0 0.0
    %1284 = vmatprep.subr.mxu0 0.0
    %1285 = vmatpush1.xpose.msra.mxu0 0.0
    %1286 = vmatprep.subr.mxu0 0.0
    %1287 = vmatpush1.xpose.msra.mxu0 0.0
    %1288 = vmatprep.subr.mxu0 0.0
    %1289 = vmatpush1.xpose.msra.mxu0 0.0
    %1290 = vmatprep.subr.mxu0 0.0
    %1291 = vmatpush1.xpose.msra.mxu0 0.0
    %1292 = vmatprep.subr.mxu0 0.0
    %1293 = vmatpush1.xpose.msra.mxu0 0.0
    %1294 = vmatprep.subr.mxu0 0.0
    %1295 = vmatpush1.xpose.msra.mxu0 0.0
    %1296 = vmatprep.subr.mxu0 0.0
    %1297 = vmatpush1.xpose.msra.mxu0 0.0
    %1298 = vmatprep.subr.mxu0 0.0
    %1299 = vmatpush1.xpose.msra.mxu0 0.0
    %1300 = vmatprep.subr.mxu0 0.0
    %1301 = vmatpush1.xpose.msra.mxu0 0.0
    %1302 = vmatprep.subr.mxu0 0.0
    %1303 = vmatpush1.xpose.msra.mxu0 0.0
    %1304 = vmatprep.subr.mxu0 0.0
    %1305 = vmatpush1.xpose.msra.mxu0 0.0
    %1306 = vmatprep.subr.mxu0 0.0
    %1307 = vmatpush1.xpose.msra.mxu0 0.0
    %1308 = vmatprep.subr.mxu0 0.0
    %1309 = vmatpush1.xpose.msra.mxu0 0.0
    %1310 = vmatprep.subr.mxu0 0.0
    %1311 = vmatpush1.xpose.msra.mxu0 0.0
    %1312 = vmatprep.subr.mxu0 0.0
    %1313 = vmatpush1.xpose.msra.mxu0 0.0
    %1314 = vmatprep.subr.mxu0 0.0
    %1315 = vmatpush1.xpose.msra.mxu0 0.0
    %1316 = vmatprep.subr.mxu0 0.0
    %1317 = vmatpush1.xpose.msra.mxu0 0.0
    %1318 = vmatprep.subr.mxu0 0.0
    %1319 = vmatpush1.xpose.msra.mxu0 0.0
    %1320 = vmatprep.subr.mxu0 0.0
    %1321 = vmatpush1.xpose.msra.mxu0 0.0
    %1322 = vmatprep.subr.mxu0 0.0
    %1323 = vmatpush1.xpose.msra.mxu0 0.0
    %1324 = vmatprep.subr.mxu0 0.0
    %1325 = vmatpush1.xpose.msra.mxu0 0.0
    %1326 = vmatprep.subr.mxu0 0.0
    %1327 = vmatpush1.xpose.msra.mxu0 0.0
    %1328 = vmatprep.mubr.f32.mxu0 0.0
    %1329 = vmatmul.mubr.f32.gmra.mrb[0].mxu0 %v550
    %v1330 = vpop.f32.mrb[0].mxu0
    %v1331 = vadd.f32 %v307, %v1330
    %v1332 = vpop.f32.mrb[0].mxu0
    %1333 = vmatprep.mubr.f32.mxu0 0.0
    %1334 = vmatmul.mubr.f32.gmra.mrb[0].mxu0 %v556
    %v1335 = vpop.f32.mrb[0].mxu0
    %v1336 = vadd.f32 %v308, %v1335
    %v1337 = vpop.f32.mrb[0].mxu0
    %1338 = vmatprep.mubr.f32.mxu0 0.0
    %1339 = vmatmul.mubr.f32.gmra.mrb[0].mxu0 %v562
    %v1340 = vpop.f32.mrb[0].mxu0
    %v1341 = vadd.f32 %v309, %v1340
    %v1342 = vpop.f32.mrb[0].mxu0
    %1343 = vmatprep.mubr.f32.mxu0 0.0
    %1344 = vmatmul.mubr.f32.gmra.mrb[0].mxu0 %v568
    %v1345 = vpop.f32.mrb[0].mxu0
    %v1346 = vadd.f32 %v310, %v1345
    %v1347 = vpop.f32.mrb[0].mxu0
    %1348 = vmatprep.mubr.f32.mxu0 0.0
    %1349 = vmatmul.mubr.f32.gmra.mrb[0].mxu0 %v574
    %v1350 = vpop.f32.mrb[0].mxu0
    %v1351 = vadd.f32 %v311, %v1350
    %v1352 = vpop.f32.mrb[0].mxu0
    %1353 = vmatprep.mubr.f32.mxu0 0.0
    %1354 = vmatmul.mubr.f32.gmra.mrb[0].mxu0 %v580
    %v1355 = vpop.f32.mrb[0].mxu0
    %v1356 = vadd.f32 %v312, %v1355
    %v1357 = vpop.f32.mrb[0].mxu0
    %1358 = vdwg.mxu0
    %v1359 = vsel %vm786, %v1331, -inf
    %1360 = vmax.xlane.f32.xlu0 %v1359
    %v1361 = vpop.xlane.xlu0 %1360
    %v1362 = vsel %vm786, %v1336, -inf
    %1363 = vmax.xlane.f32.xlu0 %v1362
    %v1364 = vpop.xlane.xlu0 %1363
    %v1365 = vsel %vm786, %v1341, -inf
    %1366 = vmax.xlane.f32.xlu0 %v1365
    %v1367 = vpop.xlane.xlu0 %1366
    %v1368 = vsel %vm786, %v1346, -inf
    %1369 = vmax.xlane.f32.xlu0 %v1368
    %v1370 = vpop.xlane.xlu0 %1369
    %v1371 = vsel %vm786, %v1351, -inf
    %1372 = vmax.xlane.f32.xlu0 %v1371
    %v1373 = vpop.xlane.xlu0 %1372
    %v1374 = vsel %vm786, %v1356, -inf
    %1375 = vmax.xlane.f32.xlu0 %v1374
    %v1376 = vpop.xlane.xlu0 %1375
    %v1377 = vsub.f32 %v1331, %v1361
    %v1378 = vsub.f32 %v1336, %v1364
    %v1379 = vsub.f32 %v1341, %v1367
    %v1380 = vsub.f32 %v1346, %v1370
    %v1381 = vsub.f32 %v1351, %v1373
    %v1382 = vsub.f32 %v1356, %v1376
    %v1383 = vmul.f32 %v1377, 1.442695
    %v1384 = vpow.pop %v1383
    %v1385 = vmul.f32 %v1378, 1.442695
    %v1386 = vpow.pop %v1385
    %v1387 = vmul.f32 %v1379, 1.442695
    %v1388 = vpow.pop %v1387
    %v1389 = vmul.f32 %v1380, 1.442695
    %v1390 = vpow.pop %v1389
    %v1391 = vmul.f32 %v1381, 1.442695
    %v1392 = vpow.pop %v1391
    %v1393 = vmul.f32 %v1382, 1.442695
    %v1394 = vpow.pop %v1393
    %v1395 = vsel %vm786, %v1384, 0.0
    %1396 = vadd.xlane.f32.xlu0 %v1395
    %v1397 = vpop.xlane.xlu0 %1396
    %v1398 = vsel %vm786, %v1386, 0.0
    %1399 = vadd.xlane.f32.xlu0 %v1398
    %v1400 = vpop.xlane.xlu0 %1399
    %v1401 = vsel %vm786, %v1388, 0.0
    %1402 = vadd.xlane.f32.xlu0 %v1401
    %v1403 = vpop.xlane.xlu0 %1402
    %v1404 = vsel %vm786, %v1390, 0.0
    %1405 = vadd.xlane.f32.xlu0 %v1404
    %v1406 = vpop.xlane.xlu0 %1405
    %v1407 = vsel %vm786, %v1392, 0.0
    %1408 = vadd.xlane.f32.xlu0 %v1407
    %v1409 = vpop.xlane.xlu0 %1408
    %v1410 = vsel %vm786, %v1394, 0.0
    %1411 = vadd.xlane.f32.xlu0 %v1410
    %v1412 = vpop.xlane.xlu0 %1411
    %v1413 = vrcp.pop %v1397
    %v1414 = vrcp.pop %v1400
    %v1415 = vrcp.pop %v1403
    %v1416 = vrcp.pop %v1406
    %v1417 = vrcp.pop %v1409
    %v1418 = vrcp.pop %v1412
    %v1419 = vmul.f32 %v1384, %v1413
    %v1420 = vmul.f32 %v1386, %v1414
    %v1421 = vmul.f32 %v1388, %v1415
    %v1422 = vmul.f32 %v1390, %v1416
    %v1423 = vmul.f32 %v1392, %v1417
    %v1424 = vmul.f32 %v1394, %v1418
    %v1426 = vsel %vm786, %v1419, 0
    %v1429 = vsel %vm786, %v1420, 0
    %v1432 = vsel %vm786, %v1421, 0
    %v1435 = vsel %vm786, %v1422, 0
    %v1438 = vsel %vm786, %v1423, 0
    %v1441 = vsel %vm786, %v1424, 0
    %1443 = vmatprep.subr.mxu0 0.0
    %1444 = vmatpush1.msra.mxu0 %v1258
    %1445 = vmatprep.subr.mxu0 0.0
    %1446 = vmatpush1.msra.mxu0 %v1259
    %1447 = vmatprep.subr.mxu0 0.0
    %1448 = vmatpush1.msra.mxu0 %v1260
    %1449 = vmatprep.subr.mxu0 0.0
    %1450 = vmatpush1.msra.mxu0 %v1261
    %1451 = vmatprep.subr.mxu0 0.0
    %1452 = vmatpush1.msra.mxu0 %v1262
    %1453 = vmatprep.subr.mxu0 0.0
    %1454 = vmatpush1.msra.mxu0 %v1263
    %1455 = vmatprep.subr.mxu0 0.0
    %1456 = vmatpush1.msra.mxu0 0.0
    %1457 = vmatprep.subr.mxu0 0.0
    %1458 = vmatpush1.msra.mxu0 0.0
    %1459 = vmatprep.subr.mxu0 0.0
    %1460 = vmatpush1.msra.mxu0 0.0
    %1461 = vmatprep.subr.mxu0 0.0
    %1462 = vmatpush1.msra.mxu0 0.0
    %1463 = vmatprep.subr.mxu0 0.0
    %1464 = vmatpush1.msra.mxu0 0.0
    %1465 = vmatprep.subr.mxu0 0.0
    %1466 = vmatpush1.msra.mxu0 0.0
    %1467 = vmatprep.subr.mxu0 0.0
    %1468 = vmatpush1.msra.mxu0 0.0
    %1469 = vmatprep.subr.mxu0 0.0
    %1470 = vmatpush1.msra.mxu0 0.0
    %1471 = vmatprep.subr.mxu0 0.0
    %1472 = vmatpush1.msra.mxu0 0.0
    %1473 = vmatprep.subr.mxu0 0.0
    %1474 = vmatpush1.msra.mxu0 0.0
    %1475 = vmatprep.subr.mxu0 0.0
    %1476 = vmatpush1.msra.mxu0 0.0
    %1477 = vmatprep.subr.mxu0 0.0
    %1478 = vmatpush1.msra.mxu0 0.0
    %1479 = vmatprep.subr.mxu0 0.0
    %1480 = vmatpush1.msra.mxu0 0.0
    %1481 = vmatprep.subr.mxu0 0.0
    %1482 = vmatpush1.msra.mxu0 0.0
    %1483 = vmatprep.subr.mxu0 0.0
    %1484 = vmatpush1.msra.mxu0 0.0
    %1485 = vmatprep.subr.mxu0 0.0
    %1486 = vmatpush1.msra.mxu0 0.0
    %1487 = vmatprep.subr.mxu0 0.0
    %1488 = vmatpush1.msra.mxu0 0.0
    %1489 = vmatprep.subr.mxu0 0.0
    %1490 = vmatpush1.msra.mxu0 0.0
    %1491 = vmatprep.subr.mxu0 0.0
    %1492 = vmatpush1.msra.mxu0 0.0
    %1493 = vmatprep.subr.mxu0 0.0
    %1494 = vmatpush1.msra.mxu0 0.0
    %1495 = vmatprep.subr.mxu0 0.0
    %1496 = vmatpush1.msra.mxu0 0.0
    %1497 = vmatprep.subr.mxu0 0.0
    %1498 = vmatpush1.msra.mxu0 0.0
    %1499 = vmatprep.subr.mxu0 0.0
    %1500 = vmatpush1.msra.mxu0 0.0
    %1501 = vmatprep.subr.mxu0 0.0
    %1502 = vmatpush1.msra.mxu0 0.0
    %1503 = vmatprep.subr.mxu0 0.0
    %1504 = vmatpush1.msra.mxu0 0.0
    %1505 = vmatprep.subr.mxu0 0.0
    %1506 = vmatpush1.msra.mxu0 0.0
    %1507 = vmatprep.mubr.f32.mxu0 0.0
    %1508 = vmatmul.mubr.f32.gmra.mrb[0].mxu0 %v1426
    %v1509 = vpop.f32.mrb[0].mxu0
    %v1510 = vadd.f32 0.0, %v1509
    %v1511 = vpop.f32.mrb[0].mxu0
    %1512 = vmatprep.mubr.f32.mxu0 0.0
    %1513 = vmatmul.mubr.f32.gmra.mrb[0].mxu0 %v1429
    %v1514 = vpop.f32.mrb[0].mxu0
    %v1515 = vadd.f32 0.0, %v1514
    %v1516 = vpop.f32.mrb[0].mxu0
    %1517 = vmatprep.mubr.f32.mxu0 0.0
    %1518 = vmatmul.mubr.f32.gmra.mrb[0].mxu0 %v1432
    %v1519 = vpop.f32.mrb[0].mxu0
    %v1520 = vadd.f32 0.0, %v1519
    %v1521 = vpop.f32.mrb[0].mxu0
    %1522 = vmatprep.mubr.f32.mxu0 0.0
    %1523 = vmatmul.mubr.f32.gmra.mrb[0].mxu0 %v1435
    %v1524 = vpop.f32.mrb[0].mxu0
    %v1525 = vadd.f32 0.0, %v1524
    %v1526 = vpop.f32.mrb[0].mxu0
    %1527 = vmatprep.mubr.f32.mxu0 0.0
    %1528 = vmatmul.mubr.f32.gmra.mrb[0].mxu0 %v1438
    %v1529 = vpop.f32.mrb[0].mxu0
    %v1530 = vadd.f32 0.0, %v1529
    %v1531 = vpop.f32.mrb[0].mxu0
    %1532 = vmatprep.mubr.f32.mxu0 0.0
    %1533 = vmatmul.mubr.f32.gmra.mrb[0].mxu0 %v1441
    %v1534 = vpop.f32.mrb[0].mxu0
    %v1535 = vadd.f32 0.0, %v1534
    %v1536 = vpop.f32.mrb[0].mxu0
    %1537 = vdwg.mxu0
    %v1538 = vadd.f32 %v1224, %v1510
    %v1539 = vadd.f32 %v1229, %v1515
    %v1540 = vadd.f32 %v1234, %v1520
    %v1541 = vadd.f32 %v1239, %v1525
    %v1542 = vadd.f32 %v1244, %v1530
    %v1543 = vadd.f32 %v1249, %v1535
    %v1544 = vmul.f32 %v552, %v306
    %v1545 = vmul.f32 %v558, %v306
    %v1546 = vmul.f32 %v564, %v306
    %v1547 = vmul.f32 %v570, %v306
    %v1548 = vmul.f32 %v576, %v306
    %v1549 = vmul.f32 %v582, %v306
    %v1550 = vmul.f32 %v651, %v306
    %v1551 = vmul.f32 %v656, %v306
    %v1552 = vmul.f32 %v661, %v306
    %v1553 = vmul.f32 %v666, %v306
    %v1554 = vmul.f32 %v671, %v306
    %v1555 = vmul.f32 %v676, %v306
    %1556 = vmatprep.subr.mxu0 0.0
    %1557 = vmatpush1.xpose.msra.mxu0 %v1544
    %1558 = vmatprep.subr.mxu0 0.0
    %1559 = vmatpush1.xpose.msra.mxu0 %v1545
    %1560 = vmatprep.subr.mxu0 0.0
    %1561 = vmatpush1.xpose.msra.mxu0 %v1546
    %1562 = vmatprep.subr.mxu0 0.0
    %1563 = vmatpush1.xpose.msra.mxu0 %v1547
    %1564 = vmatprep.subr.mxu0 0.0
    %1565 = vmatpush1.xpose.msra.mxu0 %v1548
    %1566 = vmatprep.subr.mxu0 0.0
    %1567 = vmatpush1.xpose.msra.mxu0 %v1549
    %1568 = vmatprep.subr.mxu0 0.0
    %1569 = vmatpush1.xpose.msra.mxu0 0.0
    %1570 = vmatprep.subr.mxu0 0.0
    %1571 = vmatpush1.xpose.msra.mxu0 0.0
    %1572 = vmatprep.subr.mxu0 0.0
    %1573 = vmatpush1.xpose.msra.mxu0 0.0
    %1574 = vmatprep.subr.mxu0 0.0
    %1575 = vmatpush1.xpose.msra.mxu0 0.0
    %1576 = vmatprep.subr.mxu0 0.0
    %1577 = vmatpush1.xpose.msra.mxu0 0.0
    %1578 = vmatprep.subr.mxu0 0.0
    %1579 = vmatpush1.xpose.msra.mxu0 0.0
    %1580 = vmatprep.subr.mxu0 0.0
    %1581 = vmatpush1.xpose.msra.mxu0 0.0
    %1582 = vmatprep.subr.mxu0 0.0
    %1583 = vmatpush1.xpose.msra.mxu0 0.0
    %1584 = vmatprep.subr.mxu0 0.0
    %1585 = vmatpush1.xpose.msra.mxu0 0.0
    %1586 = vmatprep.subr.mxu0 0.0
    %1587 = vmatpush1.xpose.msra.mxu0 0.0
    %1588 = vmatprep.subr.mxu0 0.0
    %1589 = vmatpush1.xpose.msra.mxu0 0.0
    %1590 = vmatprep.subr.mxu0 0.0
    %1591 = vmatpush1.xpose.msra.mxu0 0.0
    %1592 = vmatprep.subr.mxu0 0.0
    %1593 = vmatpush1.xpose.msra.mxu0 0.0
    %1594 = vmatprep.subr.mxu0 0.0
    %1595 = vmatpush1.xpose.msra.mxu0 0.0
    %1596 = vmatprep.subr.mxu0 0.0
    %1597 = vmatpush1.xpose.msra.mxu0 0.0
    %1598 = vmatprep.subr.mxu0 0.0
    %1599 = vmatpush1.xpose.msra.mxu0 0.0
    %1600 = vmatprep.subr.mxu0 0.0
    %1601 = vmatpush1.xpose.msra.mxu0 0.0
    %1602 = vmatprep.subr.mxu0 0.0
    %1603 = vmatpush1.xpose.msra.mxu0 0.0
    %1604 = vmatprep.subr.mxu0 0.0
    %1605 = vmatpush1.xpose.msra.mxu0 0.0
    %1606 = vmatprep.subr.mxu0 0.0
    %1607 = vmatpush1.xpose.msra.mxu0 0.0
    %1608 = vmatprep.subr.mxu0 0.0
    %1609 = vmatpush1.xpose.msra.mxu0 0.0
    %1610 = vmatprep.subr.mxu0 0.0
    %1611 = vmatpush1.xpose.msra.mxu0 0.0
    %1612 = vmatprep.subr.mxu0 0.0
    %1613 = vmatpush1.xpose.msra.mxu0 0.0
    %1614 = vmatprep.subr.mxu0 0.0
    %1615 = vmatpush1.xpose.msra.mxu0 0.0
    %1616 = vmatprep.subr.mxu0 0.0
    %1617 = vmatpush1.xpose.msra.mxu0 0.0
    %1618 = vmatprep.subr.mxu0 0.0
    %1619 = vmatpush1.xpose.msra.mxu0 0.0
    %1620 = vmatprep.mubr.f32.mxu0 0.0
    %1621 = vmatmul.mubr.f32.gmra.mrb[0].mxu0 %v550
    %v1622 = vpop.f32.mrb[0].mxu0
    %v1623 = vadd.f32 %v307, %v1622
    %v1624 = vpop.f32.mrb[0].mxu0
    %1625 = vmatprep.mubr.f32.mxu0 0.0
    %1626 = vmatmul.mubr.f32.gmra.mrb[0].mxu0 %v556
    %v1627 = vpop.f32.mrb[0].mxu0
    %v1628 = vadd.f32 %v308, %v1627
    %v1629 = vpop.f32.mrb[0].mxu0
    %1630 = vmatprep.mubr.f32.mxu0 0.0
    %1631 = vmatmul.mubr.f32.gmra.mrb[0].mxu0 %v562
    %v1632 = vpop.f32.mrb[0].mxu0
    %v1633 = vadd.f32 %v309, %v1632
    %v1634 = vpop.f32.mrb[0].mxu0
    %1635 = vmatprep.mubr.f32.mxu0 0.0
    %1636 = vmatmul.mubr.f32.gmra.mrb[0].mxu0 %v568
    %v1637 = vpop.f32.mrb[0].mxu0
    %v1638 = vadd.f32 %v310, %v1637
    %v1639 = vpop.f32.mrb[0].mxu0
    %1640 = vmatprep.mubr.f32.mxu0 0.0
    %1641 = vmatmul.mubr.f32.gmra.mrb[0].mxu0 %v574
    %v1642 = vpop.f32.mrb[0].mxu0
    %v1643 = vadd.f32 %v311, %v1642
    %v1644 = vpop.f32.mrb[0].mxu0
    %1645 = vmatprep.mubr.f32.mxu0 0.0
    %1646 = vmatmul.mubr.f32.gmra.mrb[0].mxu0 %v580
    %v1647 = vpop.f32.mrb[0].mxu0
    %v1648 = vadd.f32 %v312, %v1647
    %v1649 = vpop.f32.mrb[0].mxu0
    %1650 = vdwg.mxu0
    %v1651 = vsel %vm786, %v1623, -inf
    %1652 = vmax.xlane.f32.xlu0 %v1651
    %v1653 = vpop.xlane.xlu0 %1652
    %v1654 = vsel %vm786, %v1628, -inf
    %1655 = vmax.xlane.f32.xlu0 %v1654
    %v1656 = vpop.xlane.xlu0 %1655
    %v1657 = vsel %vm786, %v1633, -inf
    %1658 = vmax.xlane.f32.xlu0 %v1657
    %v1659 = vpop.xlane.xlu0 %1658
    %v1660 = vsel %vm786, %v1638, -inf
    %1661 = vmax.xlane.f32.xlu0 %v1660
    %v1662 = vpop.xlane.xlu0 %1661
    %v1663 = vsel %vm786, %v1643, -inf
    %1664 = vmax.xlane.f32.xlu0 %v1663
    %v1665 = vpop.xlane.xlu0 %1664
    %v1666 = vsel %vm786, %v1648, -inf
    %1667 = vmax.xlane.f32.xlu0 %v1666
    %v1668 = vpop.xlane.xlu0 %1667
    %v1669 = vsub.f32 %v1623, %v1653
    %v1670 = vsub.f32 %v1628, %v1656
    %v1671 = vsub.f32 %v1633, %v1659
    %v1672 = vsub.f32 %v1638, %v1662
    %v1673 = vsub.f32 %v1643, %v1665
    %v1674 = vsub.f32 %v1648, %v1668
    %v1675 = vmul.f32 %v1669, 1.442695
    %v1676 = vpow.pop %v1675
    %v1677 = vmul.f32 %v1670, 1.442695
    %v1678 = vpow.pop %v1677
    %v1679 = vmul.f32 %v1671, 1.442695
    %v1680 = vpow.pop %v1679
    %v1681 = vmul.f32 %v1672, 1.442695
    %v1682 = vpow.pop %v1681
    %v1683 = vmul.f32 %v1673, 1.442695
    %v1684 = vpow.pop %v1683
    %v1685 = vmul.f32 %v1674, 1.442695
    %v1686 = vpow.pop %v1685
    %v1687 = vsel %vm786, %v1676, 0.0
    %1688 = vadd.xlane.f32.xlu0 %v1687
    %v1689 = vpop.xlane.xlu0 %1688
    %v1690 = vsel %vm786, %v1678, 0.0
    %1691 = vadd.xlane.f32.xlu0 %v1690
    %v1692 = vpop.xlane.xlu0 %1691
    %v1693 = vsel %vm786, %v1680, 0.0
    %1694 = vadd.xlane.f32.xlu0 %v1693
    %v1695 = vpop.xlane.xlu0 %1694
    %v1696 = vsel %vm786, %v1682, 0.0
    %1697 = vadd.xlane.f32.xlu0 %v1696
    %v1698 = vpop.xlane.xlu0 %1697
    %v1699 = vsel %vm786, %v1684, 0.0
    %1700 = vadd.xlane.f32.xlu0 %v1699
    %v1701 = vpop.xlane.xlu0 %1700
    %v1702 = vsel %vm786, %v1686, 0.0
    %1703 = vadd.xlane.f32.xlu0 %v1702
    %v1704 = vpop.xlane.xlu0 %1703
    %v1705 = vrcp.pop %v1689
    %v1706 = vrcp.pop %v1692
    %v1707 = vrcp.pop %v1695
    %v1708 = vrcp.pop %v1698
    %v1709 = vrcp.pop %v1701
    %v1710 = vrcp.pop %v1704
    %v1711 = vmul.f32 %v1676, %v1705
    %v1712 = vmul.f32 %v1678, %v1706
    %v1713 = vmul.f32 %v1680, %v1707
    %v1714 = vmul.f32 %v1682, %v1708
    %v1715 = vmul.f32 %v1684, %v1709
    %v1716 = vmul.f32 %v1686, %v1710
    %v1718 = vsel %vm786, %v1711, 0
    %v1721 = vsel %vm786, %v1712, 0
    %v1724 = vsel %vm786, %v1713, 0
    %v1727 = vsel %vm786, %v1714, 0
    %v1730 = vsel %vm786, %v1715, 0
    %v1733 = vsel %vm786, %v1716, 0
    %1735 = vmatprep.subr.mxu0 0.0
    %1736 = vmatpush1.msra.mxu0 %v1550
    %1737 = vmatprep.subr.mxu0 0.0
    %1738 = vmatpush1.msra.mxu0 %v1551
    %1739 = vmatprep.subr.mxu0 0.0
    %1740 = vmatpush1.msra.mxu0 %v1552
    %1741 = vmatprep.subr.mxu0 0.0
    %1742 = vmatpush1.msra.mxu0 %v1553
    %1743 = vmatprep.subr.mxu0 0.0
    %1744 = vmatpush1.msra.mxu0 %v1554
    %1745 = vmatprep.subr.mxu0 0.0
    %1746 = vmatpush1.msra.mxu0 %v1555
    %1747 = vmatprep.subr.mxu0 0.0
    %1748 = vmatpush1.msra.mxu0 0.0
    %1749 = vmatprep.subr.mxu0 0.0
    %1750 = vmatpush1.msra.mxu0 0.0
    %1751 = vmatprep.subr.mxu0 0.0
    %1752 = vmatpush1.msra.mxu0 0.0
    %1753 = vmatprep.subr.mxu0 0.0
    %1754 = vmatpush1.msra.mxu0 0.0
    %1755 = vmatprep.subr.mxu0 0.0
    %1756 = vmatpush1.msra.mxu0 0.0
    %1757 = vmatprep.subr.mxu0 0.0
    %1758 = vmatpush1.msra.mxu0 0.0
    %1759 = vmatprep.subr.mxu0 0.0
    %1760 = vmatpush1.msra.mxu0 0.0
    %1761 = vmatprep.subr.mxu0 0.0
    %1762 = vmatpush1.msra.mxu0 0.0
    %1763 = vmatprep.subr.mxu0 0.0
    %1764 = vmatpush1.msra.mxu0 0.0
    %1765 = vmatprep.subr.mxu0 0.0
    %1766 = vmatpush1.msra.mxu0 0.0
    %1767 = vmatprep.subr.mxu0 0.0
    %1768 = vmatpush1.msra.mxu0 0.0
    %1769 = vmatprep.subr.mxu0 0.0
    %1770 = vmatpush1.msra.mxu0 0.0
    %1771 = vmatprep.subr.mxu0 0.0
    %1772 = vmatpush1.msra.mxu0 0.0
    %1773 = vmatprep.subr.mxu0 0.0
    %1774 = vmatpush1.msra.mxu0 0.0
    %1775 = vmatprep.subr.mxu0 0.0
    %1776 = vmatpush1.msra.mxu0 0.0
    %1777 = vmatprep.subr.mxu0 0.0
    %1778 = vmatpush1.msra.mxu0 0.0
    %1779 = vmatprep.subr.mxu0 0.0
    %1780 = vmatpush1.msra.mxu0 0.0
    %1781 = vmatprep.subr.mxu0 0.0
    %1782 = vmatpush1.msra.mxu0 0.0
    %1783 = vmatprep.subr.mxu0 0.0
    %1784 = vmatpush1.msra.mxu0 0.0
    %1785 = vmatprep.subr.mxu0 0.0
    %1786 = vmatpush1.msra.mxu0 0.0
    %1787 = vmatprep.subr.mxu0 0.0
    %1788 = vmatpush1.msra.mxu0 0.0
    %1789 = vmatprep.subr.mxu0 0.0
    %1790 = vmatpush1.msra.mxu0 0.0
    %1791 = vmatprep.subr.mxu0 0.0
    %1792 = vmatpush1.msra.mxu0 0.0
    %1793 = vmatprep.subr.mxu0 0.0
    %1794 = vmatpush1.msra.mxu0 0.0
    %1795 = vmatprep.subr.mxu0 0.0
    %1796 = vmatpush1.msra.mxu0 0.0
    %1797 = vmatprep.subr.mxu0 0.0
    %1798 = vmatpush1.msra.mxu0 0.0
    %1799 = vmatprep.mubr.f32.mxu0 0.0
    %1800 = vmatmul.mubr.f32.gmra.mrb[0].mxu0 %v1718
    %v1801 = vpop.f32.mrb[0].mxu0
    %v1802 = vadd.f32 0.0, %v1801
    %v1803 = vpop.f32.mrb[0].mxu0
    %1804 = vmatprep.mubr.f32.mxu0 0.0
    %1805 = vmatmul.mubr.f32.gmra.mrb[0].mxu0 %v1721
    %v1806 = vpop.f32.mrb[0].mxu0
    %v1807 = vadd.f32 0.0, %v1806
    %v1808 = vpop.f32.mrb[0].mxu0
    %1809 = vmatprep.mubr.f32.mxu0 0.0
    %1810 = vmatmul.mubr.f32.gmra.mrb[0].mxu0 %v1724
    %v1811 = vpop.f32.mrb[0].mxu0
    %v1812 = vadd.f32 0.0, %v1811
    %v1813 = vpop.f32.mrb[0].mxu0
    %1814 = vmatprep.mubr.f32.mxu0 0.0
    %1815 = vmatmul.mubr.f32.gmra.mrb[0].mxu0 %v1727
    %v1816 = vpop.f32.mrb[0].mxu0
    %v1817 = vadd.f32 0.0, %v1816
    %v1818 = vpop.f32.mrb[0].mxu0
    %1819 = vmatprep.mubr.f32.mxu0 0.0
    %1820 = vmatmul.mubr.f32.gmra.mrb[0].mxu0 %v1730
    %v1821 = vpop.f32.mrb[0].mxu0
    %v1822 = vadd.f32 0.0, %v1821
    %v1823 = vpop.f32.mrb[0].mxu0
    %1824 = vmatprep.mubr.f32.mxu0 0.0
    %1825 = vmatmul.mubr.f32.gmra.mrb[0].mxu0 %v1733
    %v1826 = vpop.f32.mrb[0].mxu0
    %v1827 = vadd.f32 0.0, %v1826
    %v1828 = vpop.f32.mrb[0].mxu0
    %1829 = vdwg.mxu0
    %v1830 = vadd.f32 %v1538, %v1802
    %v1831 = vadd.f32 %v1539, %v1807
    %v1832 = vadd.f32 %v1540, %v1812
    %v1833 = vadd.f32 %v1541, %v1817
    %v1834 = vadd.f32 %v1542, %v1822
    %v1835 = vadd.f32 %v1543, %v1827
    %v1836 = vld [vmem:[%s17] sm:$0xff]
    %v1837 = vld [vmem:[%s17 + $0x8] sm:$0xff]
    %v1838 = vld [vmem:[%s17 + $0x10] sm:$0xff]
    %v1839 = vld [vmem:[%s17 + $0x18] sm:$0xff]
    %v1840 = vld [vmem:[%s17 + $0x20] sm:$0xff]
    %v1841 = vld [vmem:[%s17 + $0x28] sm:$0xff]
    %v1842 = vld [vmem:[%s17 + $0x30] sm:$0xff]
    %v1843 = vld [vmem:[%s17 + $0x38] sm:$0xff]
    %v1844 = vld [vmem:[%s17 + $0x40] sm:$0xff]
    %v1845 = vld [vmem:[%s17 + $0x48] sm:$0xff]
    %v1846 = vld [vmem:[%s17 + $0x50] sm:$0xff]
    %v1847 = vld [vmem:[%s17 + $0x58] sm:$0xff]
    %v1848 = vld [vmem:[%s17 + $0x60] sm:$0xff]
    %v1849 = vld [vmem:[%s17 + $0x68] sm:$0xff]
    %v1850 = vld [vmem:[%s17 + $0x70] sm:$0xff]
    %v1851 = vld [vmem:[%s17 + $0x78] sm:$0xff]
    %v1852 = vld [vmem:[%s19] sm:$0x1]
    %v1854 = vlaneseq
    %v1855 = vshrl.u32 %v1854, 7
    %v1856 = vsub.s32 0, %v1855
    %v1857 = vrot.slane %v1852, %v1856
    %1859 = vmatprep.subr.mxu0 0.0
    %1860 = vmatpush1.msra.mxu0 %v1836
    %1861 = vmatprep.subr.mxu0 0.0
    %1862 = vmatpush1.msra.mxu0 %v1837
    %1863 = vmatprep.subr.mxu0 0.0
    %1864 = vmatpush1.msra.mxu0 %v1838
    %1865 = vmatprep.subr.mxu0 0.0
    %1866 = vmatpush1.msra.mxu0 %v1839
    %1867 = vmatprep.subr.mxu0 0.0
    %1868 = vmatpush1.msra.mxu0 %v1840
    %1869 = vmatprep.subr.mxu0 0.0
    %1870 = vmatpush1.msra.mxu0 %v1841
    %1871 = vmatprep.subr.mxu0 0.0
    %1872 = vmatpush1.msra.mxu0 %v1842
    %1873 = vmatprep.subr.mxu0 0.0
    %1874 = vmatpush1.msra.mxu0 %v1843
    %1875 = vmatprep.subr.mxu0 0.0
    %1876 = vmatpush1.msra.mxu0 %v1844
    %1877 = vmatprep.subr.mxu0 0.0
    %1878 = vmatpush1.msra.mxu0 %v1845
    %1879 = vmatprep.subr.mxu0 0.0
    %1880 = vmatpush1.msra.mxu0 %v1846
    %1881 = vmatprep.subr.mxu0 0.0
    %1882 = vmatpush1.msra.mxu0 %v1847
    %1883 = vmatprep.subr.mxu0 0.0
    %1884 = vmatpush1.msra.mxu0 %v1848
    %1885 = vmatprep.subr.mxu0 0.0
    %1886 = vmatpush1.msra.mxu0 %v1849
    %1887 = vmatprep.subr.mxu0 0.0
    %1888 = vmatpush1.msra.mxu0 %v1850
    %1889 = vmatprep.subr.mxu0 0.0
    %1890 = vmatpush1.msra.mxu0 %v1851
    %1891 = vmatprep.subr.mxu0 0.0
    %1892 = vmatpush1.msra.mxu0 0.0
    %1893 = vmatprep.subr.mxu0 0.0
    %1894 = vmatpush1.msra.mxu0 0.0
    %1895 = vmatprep.subr.mxu0 0.0
    %1896 = vmatpush1.msra.mxu0 0.0
    %1897 = vmatprep.subr.mxu0 0.0
    %1898 = vmatpush1.msra.mxu0 0.0
    %1899 = vmatprep.subr.mxu0 0.0
    %1900 = vmatpush1.msra.mxu0 0.0
    %1901 = vmatprep.subr.mxu0 0.0
    %1902 = vmatpush1.msra.mxu0 0.0
    %1903 = vmatprep.subr.mxu0 0.0
    %1904 = vmatpush1.msra.mxu0 0.0
    %1905 = vmatprep.subr.mxu0 0.0
    %1906 = vmatpush1.msra.mxu0 0.0
    %1907 = vmatprep.subr.mxu0 0.0
    %1908 = vmatpush1.msra.mxu0 0.0
    %1909 = vmatprep.subr.mxu0 0.0
    %1910 = vmatpush1.msra.mxu0 0.0
    %1911 = vmatprep.subr.mxu0 0.0
    %1912 = vmatpush1.msra.mxu0 0.0
    %1913 = vmatprep.subr.mxu0 0.0
    %1914 = vmatpush1.msra.mxu0 0.0
    %1915 = vmatprep.subr.mxu0 0.0
    %1916 = vmatpush1.msra.mxu0 0.0
    %1917 = vmatprep.subr.mxu0 0.0
    %1918 = vmatpush1.msra.mxu0 0.0
    %1919 = vmatprep.subr.mxu0 0.0
    %1920 = vmatpush1.msra.mxu0 0.0
    %1921 = vmatprep.subr.mxu0 0.0
    %1922 = vmatpush1.msra.mxu0 0.0
    %1923 = vmatprep.mubr.f32.mxu0 0.0
    %1924 = vmatmul.mubr.f32.gmra.mrb[0].mxu0 %v1830
    %v1925 = vpop.f32.mrb[0].mxu0
    %v1926 = vadd.f32 %v1857, %v1925
    %v1927 = vpop.f32.mrb[0].mxu0
    %1928 = vmatprep.mubr.f32.mxu0 0.0
    %1929 = vmatmul.mubr.f32.gmra.mrb[0].mxu0 %v1831
    %v1930 = vpop.f32.mrb[0].mxu0
    %v1931 = vadd.f32 %v1857, %v1930
    %v1932 = vpop.f32.mrb[0].mxu0
    %1933 = vmatprep.mubr.f32.mxu0 0.0
    %1934 = vmatmul.mubr.f32.gmra.mrb[0].mxu0 %v1832
    %v1935 = vpop.f32.mrb[0].mxu0
    %v1936 = vadd.f32 %v1857, %v1935
    %v1937 = vpop.f32.mrb[0].mxu0
    %1938 = vmatprep.mubr.f32.mxu0 0.0
    %1939 = vmatmul.mubr.f32.gmra.mrb[0].mxu0 %v1833
    %v1940 = vpop.f32.mrb[0].mxu0
    %v1941 = vadd.f32 %v1857, %v1940
    %v1942 = vpop.f32.mrb[0].mxu0
    %1943 = vmatprep.mubr.f32.mxu0 0.0
    %1944 = vmatmul.mubr.f32.gmra.mrb[0].mxu0 %v1834
    %v1945 = vpop.f32.mrb[0].mxu0
    %v1946 = vadd.f32 %v1857, %v1945
    %v1947 = vpop.f32.mrb[0].mxu0
    %1948 = vmatprep.mubr.f32.mxu0 0.0
    %1949 = vmatmul.mubr.f32.gmra.mrb[0].mxu0 %v1835
    %v1950 = vpop.f32.mrb[0].mxu0
    %v1951 = vadd.f32 %v1857, %v1950
    %v1952 = vpop.f32.mrb[0].mxu0
    %1953 = vdwg.mxu0
    %v1954 = vadd.f32 %v257, %v1926
    %v1955 = vadd.f32 %v262, %v1931
    %v1956 = vadd.f32 %v267, %v1936
    %v1957 = vadd.f32 %v272, %v1941
    %v1958 = vadd.f32 %v277, %v1946
    %v1959 = vadd.f32 %v282, %v1951
    %v1960 = vld [vmem:[%s21] sm:$0x1]
    %v1961 = vld [vmem:[%s23] sm:$0x1]
    %1962 = vadd.xlane.f32.xlu0 %v1954
    %v1963 = vpop.xlane.xlu0 %1962
    %1964 = vadd.xlane.f32.xlu0 %v1955
    %v1965 = vpop.xlane.xlu0 %1964
    %1966 = vadd.xlane.f32.xlu0 %v1956
    %v1967 = vpop.xlane.xlu0 %1966
    %1968 = vadd.xlane.f32.xlu0 %v1957
    %v1969 = vpop.xlane.xlu0 %1968
    %1970 = vadd.xlane.f32.xlu0 %v1958
    %v1971 = vpop.xlane.xlu0 %1970
    %1972 = vadd.xlane.f32.xlu0 %v1959
    %v1973 = vpop.xlane.xlu0 %1972
    %v1974 = vmul.f32 %v1954, %v1954
    %v1975 = vmul.f32 %v1955, %v1955
    %v1976 = vmul.f32 %v1956, %v1956
    %v1977 = vmul.f32 %v1957, %v1957
    %v1978 = vmul.f32 %v1958, %v1958
    %v1979 = vmul.f32 %v1959, %v1959
    %1980 = vadd.xlane.f32.xlu0 %v1974
    %v1981 = vpop.xlane.xlu0 %1980
    %1982 = vadd.xlane.f32.xlu0 %v1975
    %v1983 = vpop.xlane.xlu0 %1982
    %1984 = vadd.xlane.f32.xlu0 %v1976
    %v1985 = vpop.xlane.xlu0 %1984
    %1986 = vadd.xlane.f32.xlu0 %v1977
    %v1987 = vpop.xlane.xlu0 %1986
    %1988 = vadd.xlane.f32.xlu0 %v1978
    %v1989 = vpop.xlane.xlu0 %1988
    %1990 = vadd.xlane.f32.xlu0 %v1979
    %v1991 = vpop.xlane.xlu0 %1990
    %v1992 = vmul.f32 %v1963, %v345
    %v1993 = vmul.f32 %v1965, %v345
    %v1994 = vmul.f32 %v1967, %v345
    %v1995 = vmul.f32 %v1969, %v345
    %v1996 = vmul.f32 %v1971, %v345
    %v1997 = vmul.f32 %v1973, %v345
    %v1998 = vmul.f32 %v1981, %v345
    %v1999 = vmul.f32 %v1983, %v345
    %v2000 = vmul.f32 %v1985, %v345
    %v2001 = vmul.f32 %v1987, %v345
    %v2002 = vmul.f32 %v1989, %v345
    %v2003 = vmul.f32 %v1991, %v345
    %v2004 = vmul.f32 %v1992, %v1992
    %v2005 = vmul.f32 %v1993, %v1993
    %v2006 = vmul.f32 %v1994, %v1994
    %v2007 = vmul.f32 %v1995, %v1995
    %v2008 = vmul.f32 %v1996, %v1996
    %v2009 = vmul.f32 %v1997, %v1997
    %v2010 = vsub.f32 %v1998, %v2004
    %v2011 = vsub.f32 %v1999, %v2005
    %v2012 = vsub.f32 %v2000, %v2006
    %v2013 = vsub.f32 %v2001, %v2007
    %v2014 = vsub.f32 %v2002, %v2008
    %v2015 = vsub.f32 %v2003, %v2009
    %v2016 = vsub.f32 %v1954, %v1992
    %v2017 = vsub.f32 %v1955, %v1993
    %v2018 = vsub.f32 %v1956, %v1994
    %v2019 = vsub.f32 %v1957, %v1995
    %v2020 = vsub.f32 %v1958, %v1996
    %v2021 = vsub.f32 %v1959, %v1997
    %v2022 = vadd.f32 %v2010, 1e-05
    %v2023 = vadd.f32 %v2011, 1e-05
    %v2024 = vadd.f32 %v2012, 1e-05
    %v2025 = vadd.f32 %v2013, 1e-05
    %v2026 = vadd.f32 %v2014, 1e-05
    %v2027 = vadd.f32 %v2015, 1e-05
    %v2028 = vrsqrt.pop %v2022
    %v2029 = vrsqrt.pop %v2023
    %v2030 = vrsqrt.pop %v2024
    %v2031 = vrsqrt.pop %v2025
    %v2032 = vrsqrt.pop %v2026
    %v2033 = vrsqrt.pop %v2027
    %v2034 = vmul.f32 %v2016, %v2028
    %v2035 = vmul.f32 %v2017, %v2029
    %v2036 = vmul.f32 %v2018, %v2030
    %v2037 = vmul.f32 %v2019, %v2031
    %v2038 = vmul.f32 %v2020, %v2032
    %v2039 = vmul.f32 %v2021, %v2033
    %v2041 = vlaneseq
    %v2042 = vshrl.u32 %v2041, 7
    %v2043 = vsub.s32 0, %v2042
    %v2044 = vrot.slane %v1960, %v2043
    %v2046 = vmul.f32 %v2034, %v2044
    %v2047 = vmul.f32 %v2035, %v2044
    %v2048 = vmul.f32 %v2036, %v2044
    %v2049 = vmul.f32 %v2037, %v2044
    %v2050 = vmul.f32 %v2038, %v2044
    %v2051 = vmul.f32 %v2039, %v2044
    %v2053 = vlaneseq
    %v2054 = vshrl.u32 %v2053, 7
    %v2055 = vsub.s32 0, %v2054
    %v2056 = vrot.slane %v1961, %v2055
    %v2058 = vadd.f32 %v2046, %v2056
    %v2059 = vadd.f32 %v2047, %v2056
    %v2060 = vadd.f32 %v2048, %v2056
    %v2061 = vadd.f32 %v2049, %v2056
    %v2062 = vadd.f32 %v2050, %v2056
    %v2063 = vadd.f32 %v2051, %v2056
    %v2064 = vld [vmem:[%s25] sm:$0xff]
    %v2065 = vld [vmem:[%s25 + $0x8] sm:$0xff]
    %v2066 = vld [vmem:[%s25 + $0x10] sm:$0xff]
    %v2067 = vld [vmem:[%s25 + $0x18] sm:$0xff]
    %v2068 = vld [vmem:[%s25 + $0x20] sm:$0xff]
    %v2069 = vld [vmem:[%s25 + $0x28] sm:$0xff]
    %v2070 = vld [vmem:[%s25 + $0x30] sm:$0xff]
    %v2071 = vld [vmem:[%s25 + $0x38] sm:$0xff]
    %v2072 = vld [vmem:[%s25 + $0x40] sm:$0xff]
    %v2073 = vld [vmem:[%s25 + $0x48] sm:$0xff]
    %v2074 = vld [vmem:[%s25 + $0x50] sm:$0xff]
    %v2075 = vld [vmem:[%s25 + $0x58] sm:$0xff]
    %v2076 = vld [vmem:[%s25 + $0x60] sm:$0xff]
    %v2077 = vld [vmem:[%s25 + $0x68] sm:$0xff]
    %v2078 = vld [vmem:[%s25 + $0x70] sm:$0xff]
    %v2079 = vld [vmem:[%s25 + $0x78] sm:$0xff]
    %v2080 = vld [vmem:[%s27] sm:$0x1]
    %v2082 = vlaneseq
    %v2083 = vshrl.u32 %v2082, 7
    %v2084 = vsub.s32 0, %v2083
    %v2085 = vrot.slane %v2080, %v2084
    %2087 = vmatprep.subr.mxu0 0.0
    %2088 = vmatpush1.msra.mxu0 %v2064
    %2089 = vmatprep.subr.mxu0 0.0
    %2090 = vmatpush1.msra.mxu0 %v2065
    %2091 = vmatprep.subr.mxu0 0.0
    %2092 = vmatpush1.msra.mxu0 %v2066
    %2093 = vmatprep.subr.mxu0 0.0
    %2094 = vmatpush1.msra.mxu0 %v2067
    %2095 = vmatprep.subr.mxu0 0.0
    %2096 = vmatpush1.msra.mxu0 %v2068
    %2097 = vmatprep.subr.mxu0 0.0
    %2098 = vmatpush1.msra.mxu0 %v2069
    %2099 = vmatprep.subr.mxu0 0.0
    %2100 = vmatpush1.msra.mxu0 %v2070
    %2101 = vmatprep.subr.mxu0 0.0
    %2102 = vmatpush1.msra.mxu0 %v2071
    %2103 = vmatprep.subr.mxu0 0.0
    %2104 = vmatpush1.msra.mxu0 %v2072
    %2105 = vmatprep.subr.mxu0 0.0
    %2106 = vmatpush1.msra.mxu0 %v2073
    %2107 = vmatprep.subr.mxu0 0.0
    %2108 = vmatpush1.msra.mxu0 %v2074
    %2109 = vmatprep.subr.mxu0 0.0
    %2110 = vmatpush1.msra.mxu0 %v2075
    %2111 = vmatprep.subr.mxu0 0.0
    %2112 = vmatpush1.msra.mxu0 %v2076
    %2113 = vmatprep.subr.mxu0 0.0
    %2114 = vmatpush1.msra.mxu0 %v2077
    %2115 = vmatprep.subr.mxu0 0.0
    %2116 = vmatpush1.msra.mxu0 %v2078
    %2117 = vmatprep.subr.mxu0 0.0
    %2118 = vmatpush1.msra.mxu0 %v2079
    %2119 = vmatprep.subr.mxu0 0.0
    %2120 = vmatpush1.msra.mxu0 0.0
    %2121 = vmatprep.subr.mxu0 0.0
    %2122 = vmatpush1.msra.mxu0 0.0
    %2123 = vmatprep.subr.mxu0 0.0
    %2124 = vmatpush1.msra.mxu0 0.0
    %2125 = vmatprep.subr.mxu0 0.0
    %2126 = vmatpush1.msra.mxu0 0.0
    %2127 = vmatprep.subr.mxu0 0.0
    %2128 = vmatpush1.msra.mxu0 0.0
    %2129 = vmatprep.subr.mxu0 0.0
    %2130 = vmatpush1.msra.mxu0 0.0
    %2131 = vmatprep.subr.mxu0 0.0
    %2132 = vmatpush1.msra.mxu0 0.0
    %2133 = vmatprep.subr.mxu0 0.0
    %2134 = vmatpush1.msra.mxu0 0.0
    %2135 = vmatprep.subr.mxu0 0.0
    %2136 = vmatpush1.msra.mxu0 0.0
    %2137 = vmatprep.subr.mxu0 0.0
    %2138 = vmatpush1.msra.mxu0 0.0
    %2139 = vmatprep.subr.mxu0 0.0
    %2140 = vmatpush1.msra.mxu0 0.0
    %2141 = vmatprep.subr.mxu0 0.0
    %2142 = vmatpush1.msra.mxu0 0.0
    %2143 = vmatprep.subr.mxu0 0.0
    %2144 = vmatpush1.msra.mxu0 0.0
    %2145 = vmatprep.subr.mxu0 0.0
    %2146 = vmatpush1.msra.mxu0 0.0
    %2147 = vmatprep.subr.mxu0 0.0
    %2148 = vmatpush1.msra.mxu0 0.0
    %2149 = vmatprep.subr.mxu0 0.0
    %2150 = vmatpush1.msra.mxu0 0.0
    %2151 = vmatprep.mubr.f32.mxu0 0.0
    %2152 = vmatmul.mubr.f32.gmra.mrb[0].mxu0 %v2058
    %v2153 = vpop.f32.mrb[0].mxu0
    %v2154 = vadd.f32 %v2085, %v2153
    %v2155 = vpop.f32.mrb[0].mxu0
    %2156 = vmatprep.mubr.f32.mxu0 0.0
    %2157 = vmatmul.mubr.f32.gmra.mrb[0].mxu0 %v2059
    %v2158 = vpop.f32.mrb[0].mxu0
    %v2159 = vadd.f32 %v2085, %v2158
    %v2160 = vpop.f32.mrb[0].mxu0
    %2161 = vmatprep.mubr.f32.mxu0 0.0
    %2162 = vmatmul.mubr.f32.gmra.mrb[0].mxu0 %v2060
    %v2163 = vpop.f32.mrb[0].mxu0
    %v2164 = vadd.f32 %v2085, %v2163
    %v2165 = vpop.f32.mrb[0].mxu0
    %2166 = vmatprep.mubr.f32.mxu0 0.0
    %2167 = vmatmul.mubr.f32.gmra.mrb[0].mxu0 %v2061
    %v2168 = vpop.f32.mrb[0].mxu0
    %v2169 = vadd.f32 %v2085, %v2168
    %v2170 = vpop.f32.mrb[0].mxu0
    %2171 = vmatprep.mubr.f32.mxu0 0.0
    %2172 = vmatmul.mubr.f32.gmra.mrb[0].mxu0 %v2062
    %v2173 = vpop.f32.mrb[0].mxu0
    %v2174 = vadd.f32 %v2085, %v2173
    %v2175 = vpop.f32.mrb[0].mxu0
    %2176 = vmatprep.mubr.f32.mxu0 0.0
    %2177 = vmatmul.mubr.f32.gmra.mrb[0].mxu0 %v2063
    %v2178 = vpop.f32.mrb[0].mxu0
    %v2179 = vadd.f32 %v2085, %v2178
    %v2180 = vpop.f32.mrb[0].mxu0
    %2181 = vdwg.mxu0
    %v2182 = vmul.f32 %v2154, %v2154
    %v2183 = vmul.f32 %v2159, %v2159
    %v2184 = vmul.f32 %v2164, %v2164
    %v2185 = vmul.f32 %v2169, %v2169
    %v2186 = vmul.f32 %v2174, %v2174
    %v2187 = vmul.f32 %v2179, %v2179
    %v2188 = vmul.f32 %v2154, %v2182
    %v2189 = vmul.f32 %v2159, %v2183
    %v2190 = vmul.f32 %v2164, %v2184
    %v2191 = vmul.f32 %v2169, %v2185
    %v2192 = vmul.f32 %v2174, %v2186
    %v2193 = vmul.f32 %v2179, %v2187
    %v2194 = vmul.f32 %v2188, 0.044715
    %v2195 = vmul.f32 %v2189, 0.044715
    %v2196 = vmul.f32 %v2190, 0.044715
    %v2197 = vmul.f32 %v2191, 0.044715
    %v2198 = vmul.f32 %v2192, 0.044715
    %v2199 = vmul.f32 %v2193, 0.044715
    %v2200 = vadd.f32 %v2154, %v2194
    %v2201 = vadd.f32 %v2159, %v2195
    %v2202 = vadd.f32 %v2164, %v2196
    %v2203 = vadd.f32 %v2169, %v2197
    %v2204 = vadd.f32 %v2174, %v2198
    %v2205 = vadd.f32 %v2179, %v2199
    %v2206 = vmul.f32 %v2200, 0.7978846
    %v2207 = vmul.f32 %v2201, 0.7978846
    %v2208 = vmul.f32 %v2202, 0.7978846
    %v2209 = vmul.f32 %v2203, 0.7978846
    %v2210 = vmul.f32 %v2204, 0.7978846
    %v2211 = vmul.f32 %v2205, 0.7978846
    %v2212 = vtanh.pop %v2206
    %v2213 = vtanh.pop %v2207
    %v2214 = vtanh.pop %v2208
    %v2215 = vtanh.pop %v2209
    %v2216 = vtanh.pop %v2210
    %v2217 = vtanh.pop %v2211
    %v2218 = vadd.f32 %v2212, 1.0
    %v2219 = vadd.f32 %v2213, 1.0
    %v2220 = vadd.f32 %v2214, 1.0
    %v2221 = vadd.f32 %v2215, 1.0
    %v2222 = vadd.f32 %v2216, 1.0
    %v2223 = vadd.f32 %v2217, 1.0
    %v2224 = vmul.f32 %v2218, 0.5
    %v2225 = vmul.f32 %v2219, 0.5
    %v2226 = vmul.f32 %v2220, 0.5
    %v2227 = vmul.f32 %v2221, 0.5
    %v2228 = vmul.f32 %v2222, 0.5
    %v2229 = vmul.f32 %v2223, 0.5
    %v2230 = vmul.f32 %v2154, %v2224
    %v2231 = vmul.f32 %v2159, %v2225
    %v2232 = vmul.f32 %v2164, %v2226
    %v2233 = vmul.f32 %v2169, %v2227
    %v2234 = vmul.f32 %v2174, %v2228
    %v2235 = vmul.f32 %v2179, %v2229
    %v2236 = vld [vmem:[%s29] sm:$0xff]
    %v2237 = vld [vmem:[%s29 + $0x8] sm:$0xff]
    %v2238 = vld [vmem:[%s29 + $0x10] sm:$0xff]
    %v2239 = vld [vmem:[%s29 + $0x18] sm:$0xff]
    %v2240 = vld [vmem:[%s29 + $0x20] sm:$0xff]
    %v2241 = vld [vmem:[%s29 + $0x28] sm:$0xff]
    %v2242 = vld [vmem:[%s29 + $0x30] sm:$0xff]
    %v2243 = vld [vmem:[%s29 + $0x38] sm:$0xff]
    %v2244 = vld [vmem:[%s29 + $0x40] sm:$0xff]
    %v2245 = vld [vmem:[%s29 + $0x48] sm:$0xff]
    %v2246 = vld [vmem:[%s29 + $0x50] sm:$0xff]
    %v2247 = vld [vmem:[%s29 + $0x58] sm:$0xff]
    %v2248 = vld [vmem:[%s29 + $0x60] sm:$0xff]
    %v2249 = vld [vmem:[%s29 + $0x68] sm:$0xff]
    %v2250 = vld [vmem:[%s29 + $0x70] sm:$0xff]
    %v2251 = vld [vmem:[%s29 + $0x78] sm:$0xff]
    %v2252 = vld [vmem:[%s31] sm:$0x1]
    %v2254 = vlaneseq
    %v2255 = vshrl.u32 %v2254, 7
    %v2256 = vsub.s32 0, %v2255
    %v2257 = vrot.slane %v2252, %v2256
    %2259 = vmatprep.subr.mxu0 0.0
    %2260 = vmatpush1.msra.mxu0 %v2236
    %2261 = vmatprep.subr.mxu0 0.0
    %2262 = vmatpush1.msra.mxu0 %v2237
    %2263 = vmatprep.subr.mxu0 0.0
    %2264 = vmatpush1.msra.mxu0 %v2238
    %2265 = vmatprep.subr.mxu0 0.0
    %2266 = vmatpush1.msra.mxu0 %v2239
    %2267 = vmatprep.subr.mxu0 0.0
    %2268 = vmatpush1.msra.mxu0 %v2240
    %2269 = vmatprep.subr.mxu0 0.0
    %2270 = vmatpush1.msra.mxu0 %v2241
    %2271 = vmatprep.subr.mxu0 0.0
    %2272 = vmatpush1.msra.mxu0 %v2242
    %2273 = vmatprep.subr.mxu0 0.0
    %2274 = vmatpush1.msra.mxu0 %v2243
    %2275 = vmatprep.subr.mxu0 0.0
    %2276 = vmatpush1.msra.mxu0 %v2244
    %2277 = vmatprep.subr.mxu0 0.0
    %2278 = vmatpush1.msra.mxu0 %v2245
    %2279 = vmatprep.subr.mxu0 0.0
    %2280 = vmatpush1.msra.mxu0 %v2246
    %2281 = vmatprep.subr.mxu0 0.0
    %2282 = vmatpush1.msra.mxu0 %v2247
    %2283 = vmatprep.subr.mxu0 0.0
    %2284 = vmatpush1.msra.mxu0 %v2248
    %2285 = vmatprep.subr.mxu0 0.0
    %2286 = vmatpush1.msra.mxu0 %v2249
    %2287 = vmatprep.subr.mxu0 0.0
    %2288 = vmatpush1.msra.mxu0 %v2250
    %2289 = vmatprep.subr.mxu0 0.0
    %2290 = vmatpush1.msra.mxu0 %v2251
    %2291 = vmatprep.subr.mxu0 0.0
    %2292 = vmatpush1.msra.mxu0 0.0
    %2293 = vmatprep.subr.mxu0 0.0
    %2294 = vmatpush1.msra.mxu0 0.0
    %2295 = vmatprep.subr.mxu0 0.0
    %2296 = vmatpush1.msra.mxu0 0.0
    %2297 = vmatprep.subr.mxu0 0.0
    %2298 = vmatpush1.msra.mxu0 0.0
    %2299 = vmatprep.subr.mxu0 0.0
    %2300 = vmatpush1.msra.mxu0 0.0
    %2301 = vmatprep.subr.mxu0 0.0
    %2302 = vmatpush1.msra.mxu0 0.0
    %2303 = vmatprep.subr.mxu0 0.0
    %2304 = vmatpush1.msra.mxu0 0.0
    %2305 = vmatprep.subr.mxu0 0.0
    %2306 = vmatpush1.msra.mxu0 0.0
    %2307 = vmatprep.subr.mxu0 0.0
    %2308 = vmatpush1.msra.mxu0 0.0
    %2309 = vmatprep.subr.mxu0 0.0
    %2310 = vmatpush1.msra.mxu0 0.0
    %2311 = vmatprep.subr.mxu0 0.0
    %2312 = vmatpush1.msra.mxu0 0.0
    %2313 = vmatprep.subr.mxu0 0.0
    %2314 = vmatpush1.msra.mxu0 0.0
    %2315 = vmatprep.subr.mxu0 0.0
    %2316 = vmatpush1.msra.mxu0 0.0
    %2317 = vmatprep.subr.mxu0 0.0
    %2318 = vmatpush1.msra.mxu0 0.0
    %2319 = vmatprep.subr.mxu0 0.0
    %2320 = vmatpush1.msra.mxu0 0.0
    %2321 = vmatprep.subr.mxu0 0.0
    %2322 = vmatpush1.msra.mxu0 0.0
    %2323 = vmatprep.mubr.f32.mxu0 0.0
    %2324 = vmatmul.mubr.f32.gmra.mrb[0].mxu0 %v2230
    %v2325 = vpop.f32.mrb[0].mxu0
    %v2326 = vadd.f32 %v2257, %v2325
    %v2327 = vpop.f32.mrb[0].mxu0
    %2328 = vmatprep.mubr.f32.mxu0 0.0
    %2329 = vmatmul.mubr.f32.gmra.mrb[0].mxu0 %v2231
    %v2330 = vpop.f32.mrb[0].mxu0
    %v2331 = vadd.f32 %v2257, %v2330
    %v2332 = vpop.f32.mrb[0].mxu0
    %2333 = vmatprep.mubr.f32.mxu0 0.0
    %2334 = vmatmul.mubr.f32.gmra.mrb[0].mxu0 %v2232
    %v2335 = vpop.f32.mrb[0].mxu0
    %v2336 = vadd.f32 %v2257, %v2335
    %v2337 = vpop.f32.mrb[0].mxu0
    %2338 = vmatprep.mubr.f32.mxu0 0.0
    %2339 = vmatmul.mubr.f32.gmra.mrb[0].mxu0 %v2233
    %v2340 = vpop.f32.mrb[0].mxu0
    %v2341 = vadd.f32 %v2257, %v2340
    %v2342 = vpop.f32.mrb[0].mxu0
    %2343 = vmatprep.mubr.f32.mxu0 0.0
    %2344 = vmatmul.mubr.f32.gmra.mrb[0].mxu0 %v2234
    %v2345 = vpop.f32.mrb[0].mxu0
    %v2346 = vadd.f32 %v2257, %v2345
    %v2347 = vpop.f32.mrb[0].mxu0
    %2348 = vmatprep.mubr.f32.mxu0 0.0
    %2349 = vmatmul.mubr.f32.gmra.mrb[0].mxu0 %v2235
    %v2350 = vpop.f32.mrb[0].mxu0
    %v2351 = vadd.f32 %v2257, %v2350
    %v2352 = vpop.f32.mrb[0].mxu0
    %2353 = vdwg.mxu0
    %v2354 = vadd.f32 %v1954, %v2326
    %v2355 = vadd.f32 %v1955, %v2331
    %v2356 = vadd.f32 %v1956, %v2336
    %v2357 = vadd.f32 %v1957, %v2341
    %v2358 = vadd.f32 %v1958, %v2346
    %v2359 = vadd.f32 %v1959, %v2351
    %v2360 = vld [vmem:[%s33] sm:$0x1]
    %v2361 = vld [vmem:[%s35] sm:$0x1]
    %2362 = vadd.xlane.f32.xlu0 %v2354
    %v2363 = vpop.xlane.xlu0 %2362
    %2364 = vadd.xlane.f32.xlu0 %v2355
    %v2365 = vpop.xlane.xlu0 %2364
    %2366 = vadd.xlane.f32.xlu0 %v2356
    %v2367 = vpop.xlane.xlu0 %2366
    %2368 = vadd.xlane.f32.xlu0 %v2357
    %v2369 = vpop.xlane.xlu0 %2368
    %2370 = vadd.xlane.f32.xlu0 %v2358
    %v2371 = vpop.xlane.xlu0 %2370
    %2372 = vadd.xlane.f32.xlu0 %v2359
    %v2373 = vpop.xlane.xlu0 %2372
    %v2374 = vmul.f32 %v2354, %v2354
    %v2375 = vmul.f32 %v2355, %v2355
    %v2376 = vmul.f32 %v2356, %v2356
    %v2377 = vmul.f32 %v2357, %v2357
    %v2378 = vmul.f32 %v2358, %v2358
    %v2379 = vmul.f32 %v2359, %v2359
    %2380 = vadd.xlane.f32.xlu0 %v2374
    %v2381 = vpop.xlane.xlu0 %2380
    %2382 = vadd.xlane.f32.xlu0 %v2375
    %v2383 = vpop.xlane.xlu0 %2382
    %2384 = vadd.xlane.f32.xlu0 %v2376
    %v2385 = vpop.xlane.xlu0 %2384
    %2386 = vadd.xlane.f32.xlu0 %v2377
    %v2387 = vpop.xlane.xlu0 %2386
    %2388 = vadd.xlane.f32.xlu0 %v2378
    %v2389 = vpop.xlane.xlu0 %2388
    %2390 = vadd.xlane.f32.xlu0 %v2379
    %v2391 = vpop.xlane.xlu0 %2390
    %v2392 = vmul.f32 %v2363, %v345
    %v2393 = vmul.f32 %v2365, %v345
    %v2394 = vmul.f32 %v2367, %v345
    %v2395 = vmul.f32 %v2369, %v345
    %v2396 = vmul.f32 %v2371, %v345
    %v2397 = vmul.f32 %v2373, %v345
    %v2398 = vmul.f32 %v2381, %v345
    %v2399 = vmul.f32 %v2383, %v345
    %v2400 = vmul.f32 %v2385, %v345
    %v2401 = vmul.f32 %v2387, %v345
    %v2402 = vmul.f32 %v2389, %v345
    %v2403 = vmul.f32 %v2391, %v345
    %v2404 = vmul.f32 %v2392, %v2392
    %v2405 = vmul.f32 %v2393, %v2393
    %v2406 = vmul.f32 %v2394, %v2394
    %v2407 = vmul.f32 %v2395, %v2395
    %v2408 = vmul.f32 %v2396, %v2396
    %v2409 = vmul.f32 %v2397, %v2397
    %v2410 = vsub.f32 %v2398, %v2404
    %v2411 = vsub.f32 %v2399, %v2405
    %v2412 = vsub.f32 %v2400, %v2406
    %v2413 = vsub.f32 %v2401, %v2407
    %v2414 = vsub.f32 %v2402, %v2408
    %v2415 = vsub.f32 %v2403, %v2409
    %v2416 = vsub.f32 %v2354, %v2392
    %v2417 = vsub.f32 %v2355, %v2393
    %v2418 = vsub.f32 %v2356, %v2394
    %v2419 = vsub.f32 %v2357, %v2395
    %v2420 = vsub.f32 %v2358, %v2396
    %v2421 = vsub.f32 %v2359, %v2397
    %v2422 = vadd.f32 %v2410, 1e-05
    %v2423 = vadd.f32 %v2411, 1e-05
    %v2424 = vadd.f32 %v2412, 1e-05
    %v2425 = vadd.f32 %v2413, 1e-05
    %v2426 = vadd.f32 %v2414, 1e-05
    %v2427 = vadd.f32 %v2415, 1e-05
    %v2428 = vrsqrt.pop %v2422
    %v2429 = vrsqrt.pop %v2423
    %v2430 = vrsqrt.pop %v2424
    %v2431 = vrsqrt.pop %v2425
    %v2432 = vrsqrt.pop %v2426
    %v2433 = vrsqrt.pop %v2427
    %v2434 = vmul.f32 %v2416, %v2428
    %v2435 = vmul.f32 %v2417, %v2429
    %v2436 = vmul.f32 %v2418, %v2430
    %v2437 = vmul.f32 %v2419, %v2431
    %v2438 = vmul.f32 %v2420, %v2432
    %v2439 = vmul.f32 %v2421, %v2433
    %v2441 = vlaneseq
    %v2442 = vshrl.u32 %v2441, 7
    %v2443 = vsub.s32 0, %v2442
    %v2444 = vrot.slane %v2360, %v2443
    %v2446 = vmul.f32 %v2434, %v2444
    %v2447 = vmul.f32 %v2435, %v2444
    %v2448 = vmul.f32 %v2436, %v2444
    %v2449 = vmul.f32 %v2437, %v2444
    %v2450 = vmul.f32 %v2438, %v2444
    %v2451 = vmul.f32 %v2439, %v2444
    %v2453 = vlaneseq
    %v2454 = vshrl.u32 %v2453, 7
    %v2455 = vsub.s32 0, %v2454
    %v2456 = vrot.slane %v2361, %v2455
    %v2458 = vadd.f32 %v2446, %v2456
    %v2459 = vadd.f32 %v2447, %v2456
    %v2460 = vadd.f32 %v2448, %v2456
    %v2461 = vadd.f32 %v2449, %v2456
    %v2462 = vadd.f32 %v2450, %v2456
    %v2463 = vadd.f32 %v2451, %v2456
    %v2464 = vld [vmem:[%s37] sm:$0xff]
    %v2465 = vld [vmem:[%s37 + $0x8] sm:$0xff]
    %v2466 = vld [vmem:[%s37 + $0x10] sm:$0xff]
    %v2467 = vld [vmem:[%s37 + $0x18] sm:$0xff]
    %v2468 = vld [vmem:[%s37 + $0x20] sm:$0xff]
    %v2469 = vld [vmem:[%s37 + $0x28] sm:$0xff]
    %v2470 = vld [vmem:[%s37 + $0x30] sm:$0xff]
    %v2471 = vld [vmem:[%s37 + $0x38] sm:$0xff]
    %v2472 = vld [vmem:[%s37 + $0x40] sm:$0xff]
    %v2473 = vld [vmem:[%s37 + $0x48] sm:$0xff]
    %v2474 = vld [vmem:[%s37 + $0x50] sm:$0xff]
    %v2475 = vld [vmem:[%s37 + $0x58] sm:$0xff]
    %v2476 = vld [vmem:[%s37 + $0x60] sm:$0xff]
    %v2477 = vld [vmem:[%s37 + $0x68] sm:$0xff]
    %v2478 = vld [vmem:[%s37 + $0x70] sm:$0xff]
    %v2479 = vld [vmem:[%s37 + $0x78] sm:$0xff]
    %v2480 = vld [vmem:[%s37 + $0x80] sm:$0xff]
    %v2481 = vld [vmem:[%s37 + $0x88] sm:$0xff]
    %v2482 = vld [vmem:[%s37 + $0x90] sm:$0xff]
    %v2483 = vld [vmem:[%s37 + $0x98] sm:$0xff]
    %v2484 = vld [vmem:[%s37 + $0xa0] sm:$0xff]
    %v2485 = vld [vmem:[%s37 + $0xa8] sm:$0xff]
    %v2486 = vld [vmem:[%s37 + $0xb0] sm:$0xff]
    %v2487 = vld [vmem:[%s37 + $0xb8] sm:$0xff]
    %v2488 = vld [vmem:[%s37 + $0xc0] sm:$0xff]
    %v2489 = vld [vmem:[%s37 + $0xc8] sm:$0xff]
    %v2490 = vld [vmem:[%s37 + $0xd0] sm:$0xff]
    %v2491 = vld [vmem:[%s37 + $0xd8] sm:$0xff]
    %v2492 = vld [vmem:[%s37 + $0xe0] sm:$0xff]
    %v2493 = vld [vmem:[%s37 + $0xe8] sm:$0xff]
    %v2494 = vld [vmem:[%s37 + $0xf0] sm:$0xff]
    %v2495 = vld [vmem:[%s37 + $0xf8] sm:$0xff]
    %v2496 = vld [vmem:[%s37 + $0x100] sm:$0xff]
    %v2497 = vld [vmem:[%s37 + $0x108] sm:$0xff]
    %v2498 = vld [vmem:[%s37 + $0x110] sm:$0xff]
    %v2499 = vld [vmem:[%s37 + $0x118] sm:$0xff]
    %v2500 = vld [vmem:[%s37 + $0x120] sm:$0xff]
    %v2501 = vld [vmem:[%s37 + $0x128] sm:$0xff]
    %v2502 = vld [vmem:[%s37 + $0x130] sm:$0xff]
    %v2503 = vld [vmem:[%s37 + $0x138] sm:$0xff]
    %v2504 = vld [vmem:[%s37 + $0x140] sm:$0xff]
    %v2505 = vld [vmem:[%s37 + $0x148] sm:$0xff]
    %v2506 = vld [vmem:[%s37 + $0x150] sm:$0xff]
    %v2507 = vld [vmem:[%s37 + $0x158] sm:$0xff]
    %v2508 = vld [vmem:[%s37 + $0x160] sm:$0xff]
    %v2509 = vld [vmem:[%s37 + $0x168] sm:$0xff]
    %v2510 = vld [vmem:[%s37 + $0x170] sm:$0xff]
    %v2511 = vld [vmem:[%s37 + $0x178] sm:$0xff]
    %v2512 = vld [vmem:[%s39] sm:$0x7]
    %v2514 = vlaneseq
    %v2515 = vshrl.u32 %v2514, 7
    %v2516 = vsub.s32 0, %v2515
    %v2517 = vrot.slane %v2512, %v2516
    %v2518 = vlaneseq
    %v2519 = vshrl.u32 %v2518, 7
    %v2520 = vsub.s32 1, %v2519
    %v2521 = vrot.slane %v2512, %v2520
    %v2522 = vlaneseq
    %v2523 = vshrl.u32 %v2522, 7
    %v2524 = vsub.s32 2, %v2523
    %v2525 = vrot.slane %v2512, %v2524
    %2529 = vmatprep.subr.mxu0 %v2465
    %2530 = vmatpush1.msra.mxu0 %v2464
    %2531 = vmatprep.subr.mxu0 %v2468
    %2532 = vmatpush1.msra.mxu0 %v2467
    %2533 = vmatprep.subr.mxu0 %v2471
    %2534 = vmatpush1.msra.mxu0 %v2470
    %2535 = vmatprep.subr.mxu0 %v2474
    %2536 = vmatpush1.msra.mxu0 %v2473
    %2537 = vmatprep.subr.mxu0 %v2477
    %2538 = vmatpush1.msra.mxu0 %v2476
    %2539 = vmatprep.subr.mxu0 %v2480
    %2540 = vmatpush1.msra.mxu0 %v2479
    %2541 = vmatprep.subr.mxu0 %v2483
    %2542 = vmatpush1.msra.mxu0 %v2482
    %2543 = vmatprep.subr.mxu0 %v2486
    %2544 = vmatpush1.msra.mxu0 %v2485
    %2545 = vmatprep.subr.mxu0 %v2489
    %2546 = vmatpush1.msra.mxu0 %v2488
    %2547 = vmatprep.subr.mxu0 %v2492
    %2548 = vmatpush1.msra.mxu0 %v2491
    %2549 = vmatprep.subr.mxu0 %v2495
    %2550 = vmatpush1.msra.mxu0 %v2494
    %2551 = vmatprep.subr.mxu0 %v2498
    %2552 = vmatpush1.msra.mxu0 %v2497
    %2553 = vmatprep.subr.mxu0 %v2501
    %2554 = vmatpush1.msra.mxu0 %v2500
    %2555 = vmatprep.subr.mxu0 %v2504
    %2556 = vmatpush1.msra.mxu0 %v2503
    %2557 = vmatprep.subr.mxu0 %v2507
    %2558 = vmatpush1.msra.mxu0 %v2506
    %2559 = vmatprep.subr.mxu0 %v2510
    %2560 = vmatpush1.msra.mxu0 %v2509
    %2561 = vmatprep.subr.mxu0 0.0
    %2562 = vmatpush1.msra.mxu0 0.0
    %2563 = vmatprep.subr.mxu0 0.0
    %2564 = vmatpush1.msra.mxu0 0.0
    %2565 = vmatprep.subr.mxu0 0.0
    %2566 = vmatpush1.msra.mxu0 0.0
    %2567 = vmatprep.subr.mxu0 0.0
    %2568 = vmatpush1.msra.mxu0 0.0
    %2569 = vmatprep.subr.mxu0 0.0
    %2570 = vmatpush1.msra.mxu0 0.0
    %2571 = vmatprep.subr.mxu0 0.0
    %2572 = vmatpush1.msra.mxu0 0.0
    %2573 = vmatprep.subr.mxu0 0.0
    %2574 = vmatpush1.msra.mxu0 0.0
    %2575 = vmatprep.subr.mxu0 0.0
    %2576 = vmatpush1.msra.mxu0 0.0
    %2577 = vmatprep.subr.mxu0 0.0
    %2578 = vmatpush1.msra.mxu0 0.0
    %2579 = vmatprep.subr.mxu0 0.0
    %2580 = vmatpush1.msra.mxu0 0.0
    %2581 = vmatprep.subr.mxu0 0.0
    %2582 = vmatpush1.msra.mxu0 0.0
    %2583 = vmatprep.subr.mxu0 0.0
    %2584 = vmatpush1.msra.mxu0 0.0
    %2585 = vmatprep.subr.mxu0 0.0
    %2586 = vmatpush1.msra.mxu0 0.0
    %2587 = vmatprep.subr.mxu0 0.0
    %2588 = vmatpush1.msra.mxu0 0.0
    %2589 = vmatprep.subr.mxu0 0.0
    %2590 = vmatpush1.msra.mxu0 0.0
    %2591 = vmatprep.subr.mxu0 0.0
    %2592 = vmatpush1.msra.mxu0 0.0
    %2593 = vmatprep.mubr.f32.mxu0 0.0
    %2594 = vmatmul.mubr.f32.gmra.mrb[0].mxu0 %v2458
    %v2595 = vpop.f32.mrb[0].mxu0
    %v2596 = vadd.f32 %v2517, %v2595
    %v2597 = vpop.f32.mrb[0].mxu0
    %v2598 = vadd.f32 %v2521, %v2597
    %2599 = vmatprep.mubr.f32.mxu0 0.0
    %2600 = vmatmul.mubr.f32.gmra.mrb[0].mxu0 %v2459
    %v2601 = vpop.f32.mrb[0].mxu0
    %v2602 = vadd.f32 %v2517, %v2601
    %v2603 = vpop.f32.mrb[0].mxu0
    %v2604 = vadd.f32 %v2521, %v2603
    %2605 = vmatprep.mubr.f32.mxu0 0.0
    %2606 = vmatmul.mubr.f32.gmra.mrb[0].mxu0 %v2460
    %v2607 = vpop.f32.mrb[0].mxu0
    %v2608 = vadd.f32 %v2517, %v2607
    %v2609 = vpop.f32.mrb[0].mxu0
    %v2610 = vadd.f32 %v2521, %v2609
    %2611 = vmatprep.mubr.f32.mxu0 0.0
    %2612 = vmatmul.mubr.f32.gmra.mrb[0].mxu0 %v2461
    %v2613 = vpop.f32.mrb[0].mxu0
    %v2614 = vadd.f32 %v2517, %v2613
    %v2615 = vpop.f32.mrb[0].mxu0
    %v2616 = vadd.f32 %v2521, %v2615
    %2617 = vmatprep.mubr.f32.mxu0 0.0
    %2618 = vmatmul.mubr.f32.gmra.mrb[0].mxu0 %v2462
    %v2619 = vpop.f32.mrb[0].mxu0
    %v2620 = vadd.f32 %v2517, %v2619
    %v2621 = vpop.f32.mrb[0].mxu0
    %v2622 = vadd.f32 %v2521, %v2621
    %2623 = vmatprep.mubr.f32.mxu0 0.0
    %2624 = vmatmul.mubr.f32.gmra.mrb[0].mxu0 %v2463
    %v2625 = vpop.f32.mrb[0].mxu0
    %v2626 = vadd.f32 %v2517, %v2625
    %v2627 = vpop.f32.mrb[0].mxu0
    %v2628 = vadd.f32 %v2521, %v2627
    %2629 = vdwg.mxu0
    %2630 = vmatprep.subr.mxu0 0.0
    %2631 = vmatpush1.msra.mxu0 %v2466
    %2632 = vmatprep.subr.mxu0 0.0
    %2633 = vmatpush1.msra.mxu0 %v2469
    %2634 = vmatprep.subr.mxu0 0.0
    %2635 = vmatpush1.msra.mxu0 %v2472
    %2636 = vmatprep.subr.mxu0 0.0
    %2637 = vmatpush1.msra.mxu0 %v2475
    %2638 = vmatprep.subr.mxu0 0.0
    %2639 = vmatpush1.msra.mxu0 %v2478
    %2640 = vmatprep.subr.mxu0 0.0
    %2641 = vmatpush1.msra.mxu0 %v2481
    %2642 = vmatprep.subr.mxu0 0.0
    %2643 = vmatpush1.msra.mxu0 %v2484
    %2644 = vmatprep.subr.mxu0 0.0
    %2645 = vmatpush1.msra.mxu0 %v2487
    %2646 = vmatprep.subr.mxu0 0.0
    %2647 = vmatpush1.msra.mxu0 %v2490
    %2648 = vmatprep.subr.mxu0 0.0
    %2649 = vmatpush1.msra.mxu0 %v2493
    %2650 = vmatprep.subr.mxu0 0.0
    %2651 = vmatpush1.msra.mxu0 %v2496
    %2652 = vmatprep.subr.mxu0 0.0
    %2653 = vmatpush1.msra.mxu0 %v2499
    %2654 = vmatprep.subr.mxu0 0.0
    %2655 = vmatpush1.msra.mxu0 %v2502
    %2656 = vmatprep.subr.mxu0 0.0
    %2657 = vmatpush1.msra.mxu0 %v2505
    %2658 = vmatprep.subr.mxu0 0.0
    %2659 = vmatpush1.msra.mxu0 %v2508
    %2660 = vmatprep.subr.mxu0 0.0
    %2661 = vmatpush1.msra.mxu0 %v2511
    %2662 = vmatprep.subr.mxu0 0.0
    %2663 = vmatpush1.msra.mxu0 0.0
    %2664 = vmatprep.subr.mxu0 0.0
    %2665 = vmatpush1.msra.mxu0 0.0
    %2666 = vmatprep.subr.mxu0 0.0
    %2667 = vmatpush1.msra.mxu0 0.0
    %2668 = vmatprep.subr.mxu0 0.0
    %2669 = vmatpush1.msra.mxu0 0.0
    %2670 = vmatprep.subr.mxu0 0.0
    %2671 = vmatpush1.msra.mxu0 0.0
    %2672 = vmatprep.subr.mxu0 0.0
    %2673 = vmatpush1.msra.mxu0 0.0
    %2674 = vmatprep.subr.mxu0 0.0
    %2675 = vmatpush1.msra.mxu0 0.0
    %2676 = vmatprep.subr.mxu0 0.0
    %2677 = vmatpush1.msra.mxu0 0.0
    %2678 = vmatprep.subr.mxu0 0.0
    %2679 = vmatpush1.msra.mxu0 0.0
    %2680 = vmatprep.subr.mxu0 0.0
    %2681 = vmatpush1.msra.mxu0 0.0
    %2682 = vmatprep.subr.mxu0 0.0
    %2683 = vmatpush1.msra.mxu0 0.0
    %2684 = vmatprep.subr.mxu0 0.0
    %2685 = vmatpush1.msra.mxu0 0.0
    %2686 = vmatprep.subr.mxu0 0.0
    %2687 = vmatpush1.msra.mxu0 0.0
    %2688 = vmatprep.subr.mxu0 0.0
    %2689 = vmatpush1.msra.mxu0 0.0
    %2690 = vmatprep.subr.mxu0 0.0
    %2691 = vmatpush1.msra.mxu0 0.0
    %2692 = vmatprep.subr.mxu0 0.0
    %2693 = vmatpush1.msra.mxu0 0.0
    %2694 = vmatprep.mubr.f32.mxu0 0.0
    %2695 = vmatmul.mubr.f32.gmra.mrb[0].mxu0 %v2458
    %v2696 = vpop.f32.mrb[0].mxu0
    %v2697 = vadd.f32 %v2525, %v2696
    %v2698 = vpop.f32.mrb[0].mxu0
    %2699 = vmatprep.mubr.f32.mxu0 0.0
    %2700 = vmatmul.mubr.f32.gmra.mrb[0].mxu0 %v2459
    %v2701 = vpop.f32.mrb[0].mxu0
    %v2702 = vadd.f32 %v2525, %v2701
    %v2703 = vpop.f32.mrb[0].mxu0
    %2704 = vmatprep.mubr.f32.mxu0 0.0
    %2705 = vmatmul.mubr.f32.gmra.mrb[0].mxu0 %v2460
    %v2706 = vpop.f32.mrb[0].mxu0
    %v2707 = vadd.f32 %v2525, %v2706
    %v2708 = vpop.f32.mrb[0].mxu0
    %2709 = vmatprep.mubr.f32.mxu0 0.0
    %2710 = vmatmul.mubr.f32.gmra.mrb[0].mxu0 %v2461
    %v2711 = vpop.f32.mrb[0].mxu0
    %v2712 = vadd.f32 %v2525, %v2711
    %v2713 = vpop.f32.mrb[0].mxu0
    %2714 = vmatprep.mubr.f32.mxu0 0.0
    %2715 = vmatmul.mubr.f32.gmra.mrb[0].mxu0 %v2462
    %v2716 = vpop.f32.mrb[0].mxu0
    %v2717 = vadd.f32 %v2525, %v2716
    %v2718 = vpop.f32.mrb[0].mxu0
    %2719 = vmatprep.mubr.f32.mxu0 0.0
    %2720 = vmatmul.mubr.f32.gmra.mrb[0].mxu0 %v2463
    %v2721 = vpop.f32.mrb[0].mxu0
    %v2722 = vadd.f32 %v2525, %v2721
    %v2723 = vpop.f32.mrb[0].mxu0
    %2724 = vdwg.mxu0
    %v2725 = vmul.f32 %v2598, %v291
    %v2726 = vmul.f32 %v2604, %v291
    %v2727 = vmul.f32 %v2610, %v291
    %v2728 = vmul.f32 %v2616, %v291
    %v2729 = vmul.f32 %v2622, %v291
    %v2730 = vmul.f32 %v2628, %v291
    %v2731 = vmul.f32 %v2697, %v291
    %v2732 = vmul.f32 %v2702, %v291
    %v2733 = vmul.f32 %v2707, %v291
    %v2734 = vmul.f32 %v2712, %v291
    %v2735 = vmul.f32 %v2717, %v291
    %v2736 = vmul.f32 %v2722, %v291
    %2737 = vmatprep.subr.mxu0 0.0
    %2738 = vmatpush1.xpose.msra.mxu0 %v2725
    %2739 = vmatprep.subr.mxu0 0.0
    %2740 = vmatpush1.xpose.msra.mxu0 %v2726
    %2741 = vmatprep.subr.mxu0 0.0
    %2742 = vmatpush1.xpose.msra.mxu0 %v2727
    %2743 = vmatprep.subr.mxu0 0.0
    %2744 = vmatpush1.xpose.msra.mxu0 %v2728
    %2745 = vmatprep.subr.mxu0 0.0
    %2746 = vmatpush1.xpose.msra.mxu0 %v2729
    %2747 = vmatprep.subr.mxu0 0.0
    %2748 = vmatpush1.xpose.msra.mxu0 %v2730
    %2749 = vmatprep.subr.mxu0 0.0
    %2750 = vmatpush1.xpose.msra.mxu0 0.0
    %2751 = vmatprep.subr.mxu0 0.0
    %2752 = vmatpush1.xpose.msra.mxu0 0.0
    %2753 = vmatprep.subr.mxu0 0.0
    %2754 = vmatpush1.xpose.msra.mxu0 0.0
    %2755 = vmatprep.subr.mxu0 0.0
    %2756 = vmatpush1.xpose.msra.mxu0 0.0
    %2757 = vmatprep.subr.mxu0 0.0
    %2758 = vmatpush1.xpose.msra.mxu0 0.0
    %2759 = vmatprep.subr.mxu0 0.0
    %2760 = vmatpush1.xpose.msra.mxu0 0.0
    %2761 = vmatprep.subr.mxu0 0.0
    %2762 = vmatpush1.xpose.msra.mxu0 0.0
    %2763 = vmatprep.subr.mxu0 0.0
    %2764 = vmatpush1.xpose.msra.mxu0 0.0
    %2765 = vmatprep.subr.mxu0 0.0
    %2766 = vmatpush1.xpose.msra.mxu0 0.0
    %2767 = vmatprep.subr.mxu0 0.0
    %2768 = vmatpush1.xpose.msra.mxu0 0.0
    %2769 = vmatprep.subr.mxu0 0.0
    %2770 = vmatpush1.xpose.msra.mxu0 0.0
    %2771 = vmatprep.subr.mxu0 0.0
    %2772 = vmatpush1.xpose.msra.mxu0 0.0
    %2773 = vmatprep.subr.mxu0 0.0
    %2774 = vmatpush1.xpose.msra.mxu0 0.0
    %2775 = vmatprep.subr.mxu0 0.0
    %2776 = vmatpush1.xpose.msra.mxu0 0.0
    %2777 = vmatprep.subr.mxu0 0.0
    %2778 = vmatpush1.xpose.msra.mxu0 0.0
    %2779 = vmatprep.subr.mxu0 0.0
    %2780 = vmatpush1.xpose.msra.mxu0 0.0
    %2781 = vmatprep.subr.mxu0 0.0
    %2782 = vmatpush1.xpose.msra.mxu0 0.0
    %2783 = vmatprep.subr.mxu0 0.0
    %2784 = vmatpush1.xpose.msra.mxu0 0.0
    %2785 = vmatprep.subr.mxu0 0.0
    %2786 = vmatpush1.xpose.msra.mxu0 0.0
    %2787 = vmatprep.subr.mxu0 0.0
    %2788 = vmatpush1.xpose.msra.mxu0 0.0
    %2789 = vmatprep.subr.mxu0 0.0
    %2790 = vmatpush1.xpose.msra.mxu0 0.0
    %2791 = vmatprep.subr.mxu0 0.0
    %2792 = vmatpush1.xpose.msra.mxu0 0.0
    %2793 = vmatprep.subr.mxu0 0.0
    %2794 = vmatpush1.xpose.msra.mxu0 0.0
    %2795 = vmatprep.subr.mxu0 0.0
    %2796 = vmatpush1.xpose.msra.mxu0 0.0
    %2797 = vmatprep.subr.mxu0 0.0
    %2798 = vmatpush1.xpose.msra.mxu0 0.0
    %2799 = vmatprep.subr.mxu0 0.0
    %2800 = vmatpush1.xpose.msra.mxu0 0.0
    %2801 = vmatprep.mubr.f32.mxu0 0.0
    %2802 = vmatmul.mubr.f32.gmra.mrb[0].mxu0 %v2596
    %v2803 = vpop.f32.mrb[0].mxu0
    %v2804 = vadd.f32 %v307, %v2803
    %v2805 = vpop.f32.mrb[0].mxu0
    %2806 = vmatprep.mubr.f32.mxu0 0.0
    %2807 = vmatmul.mubr.f32.gmra.mrb[0].mxu0 %v2602
    %v2808 = vpop.f32.mrb[0].mxu0
    %v2809 = vadd.f32 %v308, %v2808
    %v2810 = vpop.f32.mrb[0].mxu0
    %2811 = vmatprep.mubr.f32.mxu0 0.0
    %2812 = vmatmul.mubr.f32.gmra.mrb[0].mxu0 %v2608
    %v2813 = vpop.f32.mrb[0].mxu0
    %v2814 = vadd.f32 %v309, %v2813
    %v2815 = vpop.f32.mrb[0].mxu0
    %2816 = vmatprep.mubr.f32.mxu0 0.0
    %2817 = vmatmul.mubr.f32.gmra.mrb[0].mxu0 %v2614
    %v2818 = vpop.f32.mrb[0].mxu0
    %v2819 = vadd.f32 %v310, %v2818
    %v2820 = vpop.f32.mrb[0].mxu0
    %2821 = vmatprep.mubr.f32.mxu0 0.0
    %2822 = vmatmul.mubr.f32.gmra.mrb[0].mxu0 %v2620
    %v2823 = vpop.f32.mrb[0].mxu0
    %v2824 = vadd.f32 %v311, %v2823
    %v2825 = vpop.f32.mrb[0].mxu0
    %2826 = vmatprep.mubr.f32.mxu0 0.0
    %2827 = vmatmul.mubr.f32.gmra.mrb[0].mxu0 %v2626
    %v2828 = vpop.f32.mrb[0].mxu0
    %v2829 = vadd.f32 %v312, %v2828
    %v2830 = vpop.f32.mrb[0].mxu0
    %2831 = vdwg.mxu0
    %v2832 = vsel %vm786, %v2804, -inf
    %2833 = vmax.xlane.f32.xlu0 %v2832
    %v2834 = vpop.xlane.xlu0 %2833
    %v2835 = vsel %vm786, %v2809, -inf
    %2836 = vmax.xlane.f32.xlu0 %v2835
    %v2837 = vpop.xlane.xlu0 %2836
    %v2838 = vsel %vm786, %v2814, -inf
    %2839 = vmax.xlane.f32.xlu0 %v2838
    %v2840 = vpop.xlane.xlu0 %2839
    %v2841 = vsel %vm786, %v2819, -inf
    %2842 = vmax.xlane.f32.xlu0 %v2841
    %v2843 = vpop.xlane.xlu0 %2842
    %v2844 = vsel %vm786, %v2824, -inf
    %2845 = vmax.xlane.f32.xlu0 %v2844
    %v2846 = vpop.xlane.xlu0 %2845
    %v2847 = vsel %vm786, %v2829, -inf
    %2848 = vmax.xlane.f32.xlu0 %v2847
    %v2849 = vpop.xlane.xlu0 %2848
    %v2850 = vsub.f32 %v2804, %v2834
    %v2851 = vsub.f32 %v2809, %v2837
    %v2852 = vsub.f32 %v2814, %v2840
    %v2853 = vsub.f32 %v2819, %v2843
    %v2854 = vsub.f32 %v2824, %v2846
    %v2855 = vsub.f32 %v2829, %v2849
    %v2856 = vmul.f32 %v2850, 1.442695
    %v2857 = vpow.pop %v2856
    %v2858 = vmul.f32 %v2851, 1.442695
    %v2859 = vpow.pop %v2858
    %v2860 = vmul.f32 %v2852, 1.442695
    %v2861 = vpow.pop %v2860
    %v2862 = vmul.f32 %v2853, 1.442695
    %v2863 = vpow.pop %v2862
    %v2864 = vmul.f32 %v2854, 1.442695
    %v2865 = vpow.pop %v2864
    %v2866 = vmul.f32 %v2855, 1.442695
    %v2867 = vpow.pop %v2866
    %v2868 = vsel %vm786, %v2857, 0.0
    %2869 = vadd.xlane.f32.xlu0 %v2868
    %v2870 = vpop.xlane.xlu0 %2869
    %v2871 = vsel %vm786, %v2859, 0.0
    %2872 = vadd.xlane.f32.xlu0 %v2871
    %v2873 = vpop.xlane.xlu0 %2872
    %v2874 = vsel %vm786, %v2861, 0.0
    %2875 = vadd.xlane.f32.xlu0 %v2874
    %v2876 = vpop.xlane.xlu0 %2875
    %v2877 = vsel %vm786, %v2863, 0.0
    %2878 = vadd.xlane.f32.xlu0 %v2877
    %v2879 = vpop.xlane.xlu0 %2878
    %v2880 = vsel %vm786, %v2865, 0.0
    %2881 = vadd.xlane.f32.xlu0 %v2880
    %v2882 = vpop.xlane.xlu0 %2881
    %v2883 = vsel %vm786, %v2867, 0.0
    %2884 = vadd.xlane.f32.xlu0 %v2883
    %v2885 = vpop.xlane.xlu0 %2884
    %v2886 = vrcp.pop %v2870
    %v2887 = vrcp.pop %v2873
    %v2888 = vrcp.pop %v2876
    %v2889 = vrcp.pop %v2879
    %v2890 = vrcp.pop %v2882
    %v2891 = vrcp.pop %v2885
    %v2892 = vmul.f32 %v2857, %v2886
    %v2893 = vmul.f32 %v2859, %v2887
    %v2894 = vmul.f32 %v2861, %v2888
    %v2895 = vmul.f32 %v2863, %v2889
    %v2896 = vmul.f32 %v2865, %v2890
    %v2897 = vmul.f32 %v2867, %v2891
    %v2898 = vmul.f32 %v2598, %v296
    %v2899 = vmul.f32 %v2604, %v296
    %v2900 = vmul.f32 %v2610, %v296
    %v2901 = vmul.f32 %v2616, %v296
    %v2902 = vmul.f32 %v2622, %v296
    %v2903 = vmul.f32 %v2628, %v296
    %v2904 = vmul.f32 %v2697, %v296
    %v2905 = vmul.f32 %v2702, %v296
    %v2906 = vmul.f32 %v2707, %v296
    %v2907 = vmul.f32 %v2712, %v296
    %v2908 = vmul.f32 %v2717, %v296
    %v2909 = vmul.f32 %v2722, %v296
    %2910 = vmatprep.subr.mxu0 0.0
    %2911 = vmatpush1.xpose.msra.mxu0 %v2898
    %2912 = vmatprep.subr.mxu0 0.0
    %2913 = vmatpush1.xpose.msra.mxu0 %v2899
    %2914 = vmatprep.subr.mxu0 0.0
    %2915 = vmatpush1.xpose.msra.mxu0 %v2900
    %2916 = vmatprep.subr.mxu0 0.0
    %2917 = vmatpush1.xpose.msra.mxu0 %v2901
    %2918 = vmatprep.subr.mxu0 0.0
    %2919 = vmatpush1.xpose.msra.mxu0 %v2902
    %2920 = vmatprep.subr.mxu0 0.0
    %2921 = vmatpush1.xpose.msra.mxu0 %v2903
    %2922 = vmatprep.subr.mxu0 0.0
    %2923 = vmatpush1.xpose.msra.mxu0 0.0
    %2924 = vmatprep.subr.mxu0 0.0
    %2925 = vmatpush1.xpose.msra.mxu0 0.0
    %2926 = vmatprep.subr.mxu0 0.0
    %2927 = vmatpush1.xpose.msra.mxu0 0.0
    %2928 = vmatprep.subr.mxu0 0.0
    %2929 = vmatpush1.xpose.msra.mxu0 0.0
    %2930 = vmatprep.subr.mxu0 0.0
    %2931 = vmatpush1.xpose.msra.mxu0 0.0
    %2932 = vmatprep.subr.mxu0 0.0
    %2933 = vmatpush1.xpose.msra.mxu0 0.0
    %2934 = vmatprep.subr.mxu0 0.0
    %2935 = vmatpush1.xpose.msra.mxu0 0.0
    %2936 = vmatprep.subr.mxu0 0.0
    %2937 = vmatpush1.xpose.msra.mxu0 0.0
    %2938 = vmatprep.subr.mxu0 0.0
    %2939 = vmatpush1.xpose.msra.mxu0 0.0
    %2940 = vmatprep.subr.mxu0 0.0
    %2941 = vmatpush1.xpose.msra.mxu0 0.0
    %2942 = vmatprep.subr.mxu0 0.0
    %2943 = vmatpush1.xpose.msra.mxu0 0.0
    %2944 = vmatprep.subr.mxu0 0.0
    %2945 = vmatpush1.xpose.msra.mxu0 0.0
    %2946 = vmatprep.subr.mxu0 0.0
    %2947 = vmatpush1.xpose.msra.mxu0 0.0
    %2948 = vmatprep.subr.mxu0 0.0
    %2949 = vmatpush1.xpose.msra.mxu0 0.0
    %2950 = vmatprep.subr.mxu0 0.0
    %2951 = vmatpush1.xpose.msra.mxu0 0.0
    %2952 = vmatprep.subr.mxu0 0.0
    %2953 = vmatpush1.xpose.msra.mxu0 0.0
    %2954 = vmatprep.subr.mxu0 0.0
    %2955 = vmatpush1.xpose.msra.mxu0 0.0
    %2956 = vmatprep.subr.mxu0 0.0
    %2957 = vmatpush1.xpose.msra.mxu0 0.0
    %2958 = vmatprep.subr.mxu0 0.0
    %2959 = vmatpush1.xpose.msra.mxu0 0.0
    %2960 = vmatprep.subr.mxu0 0.0
    %2961 = vmatpush1.xpose.msra.mxu0 0.0
    %2962 = vmatprep.subr.mxu0 0.0
    %2963 = vmatpush1.xpose.msra.mxu0 0.0
    %2964 = vmatprep.subr.mxu0 0.0
    %2965 = vmatpush1.xpose.msra.mxu0 0.0
    %2966 = vmatprep.subr.mxu0 0.0
    %2967 = vmatpush1.xpose.msra.mxu0 0.0
    %2968 = vmatprep.subr.mxu0 0.0
    %2969 = vmatpush1.xpose.msra.mxu0 0.0
    %2970 = vmatprep.subr.mxu0 0.0
    %2971 = vmatpush1.xpose.msra.mxu0 0.0
    %2972 = vmatprep.subr.mxu0 0.0
    %2973 = vmatpush1.xpose.msra.mxu0 0.0
    %2974 = vmatprep.mubr.f32.mxu0 0.0
    %2975 = vmatmul.mubr.f32.gmra.mrb[0].mxu0 %v2596
    %v2976 = vpop.f32.mrb[0].mxu0
    %v2977 = vadd.f32 %v307, %v2976
    %v2978 = vpop.f32.mrb[0].mxu0
    %2979 = vmatprep.mubr.f32.mxu0 0.0
    %2980 = vmatmul.mubr.f32.gmra.mrb[0].mxu0 %v2602
    %v2981 = vpop.f32.mrb[0].mxu0
    %v2982 = vadd.f32 %v308, %v2981
    %v2983 = vpop.f32.mrb[0].mxu0
    %2984 = vmatprep.mubr.f32.mxu0 0.0
    %2985 = vmatmul.mubr.f32.gmra.mrb[0].mxu0 %v2608
    %v2986 = vpop.f32.mrb[0].mxu0
    %v2987 = vadd.f32 %v309, %v2986
    %v2988 = vpop.f32.mrb[0].mxu0
    %2989 = vmatprep.mubr.f32.mxu0 0.0
    %2990 = vmatmul.mubr.f32.gmra.mrb[0].mxu0 %v2614
    %v2991 = vpop.f32.mrb[0].mxu0
    %v2992 = vadd.f32 %v310, %v2991
    %v2993 = vpop.f32.mrb[0].mxu0
    %2994 = vmatprep.mubr.f32.mxu0 0.0
    %2995 = vmatmul.mubr.f32.gmra.mrb[0].mxu0 %v2620
    %v2996 = vpop.f32.mrb[0].mxu0
    %v2997 = vadd.f32 %v311, %v2996
    %v2998 = vpop.f32.mrb[0].mxu0
    %2999 = vmatprep.mubr.f32.mxu0 0.0
    %3000 = vmatmul.mubr.f32.gmra.mrb[0].mxu0 %v2626
    %v3001 = vpop.f32.mrb[0].mxu0
    %v3002 = vadd.f32 %v312, %v3001
    %v3003 = vpop.f32.mrb[0].mxu0
    %3004 = vdwg.mxu0
    %v3005 = vsel %vm786, %v2977, -inf
    %3006 = vmax.xlane.f32.xlu0 %v3005
    %v3007 = vpop.xlane.xlu0 %3006
    %v3008 = vsel %vm786, %v2982, -inf
    %3009 = vmax.xlane.f32.xlu0 %v3008
    %v3010 = vpop.xlane.xlu0 %3009
    %v3011 = vsel %vm786, %v2987, -inf
    %3012 = vmax.xlane.f32.xlu0 %v3011
    %v3013 = vpop.xlane.xlu0 %3012
    %v3014 = vsel %vm786, %v2992, -inf
    %3015 = vmax.xlane.f32.xlu0 %v3014
    %v3016 = vpop.xlane.xlu0 %3015
    %v3017 = vsel %vm786, %v2997, -inf
    %3018 = vmax.xlane.f32.xlu0 %v3017
    %v3019 = vpop.xlane.xlu0 %3018
    %v3020 = vsel %vm786, %v3002, -inf
    %3021 = vmax.xlane.f32.xlu0 %v3020
    %v3022 = vpop.xlane.xlu0 %3021
    %v3023 = vsub.f32 %v2977, %v3007
    %v3024 = vsub.f32 %v2982, %v3010
    %v3025 = vsub.f32 %v2987, %v3013
    %v3026 = vsub.f32 %v2992, %v3016
    %v3027 = vsub.f32 %v2997, %v3019
    %v3028 = vsub.f32 %v3002, %v3022
    %v3029 = vmul.f32 %v3023, 1.442695
    %v3030 = vpow.pop %v3029
    %v3031 = vmul.f32 %v3024, 1.442695
    %v3032 = vpow.pop %v3031
    %v3033 = vmul.f32 %v3025, 1.442695
    %v3034 = vpow.pop %v3033
    %v3035 = vmul.f32 %v3026, 1.442695
    %v3036 = vpow.pop %v3035
    %v3037 = vmul.f32 %v3027, 1.442695
    %v3038 = vpow.pop %v3037
    %v3039 = vmul.f32 %v3028, 1.442695
    %v3040 = vpow.pop %v3039
    %v3041 = vsel %vm786, %v3030, 0.0
    %3042 = vadd.xlane.f32.xlu0 %v3041
    %v3043 = vpop.xlane.xlu0 %3042
    %v3044 = vsel %vm786, %v3032, 0.0
    %3045 = vadd.xlane.f32.xlu0 %v3044
    %v3046 = vpop.xlane.xlu0 %3045
    %v3047 = vsel %vm786, %v3034, 0.0
    %3048 = vadd.xlane.f32.xlu0 %v3047
    %v3049 = vpop.xlane.xlu0 %3048
    %v3050 = vsel %vm786, %v3036, 0.0
    %3051 = vadd.xlane.f32.xlu0 %v3050
    %v3052 = vpop.xlane.xlu0 %3051
    %v3053 = vsel %vm786, %v3038, 0.0
    %3054 = vadd.xlane.f32.xlu0 %v3053
    %v3055 = vpop.xlane.xlu0 %3054
    %v3056 = vsel %vm786, %v3040, 0.0
    %3057 = vadd.xlane.f32.xlu0 %v3056
    %v3058 = vpop.xlane.xlu0 %3057
    %v3059 = vrcp.pop %v3043
    %v3060 = vrcp.pop %v3046
    %v3061 = vrcp.pop %v3049
    %v3062 = vrcp.pop %v3052
    %v3063 = vrcp.pop %v3055
    %v3064 = vrcp.pop %v3058
    %v3065 = vmul.f32 %v3030, %v3059
    %v3066 = vmul.f32 %v3032, %v3060
    %v3067 = vmul.f32 %v3034, %v3061
    %v3068 = vmul.f32 %v3036, %v3062
    %v3069 = vmul.f32 %v3038, %v3063
    %v3070 = vmul.f32 %v3040, %v3064
    %v3072 = vsel %vm786, %v3065, 0
    %v3075 = vsel %vm786, %v3066, 0
    %v3078 = vsel %vm786, %v3067, 0
    %v3081 = vsel %vm786, %v3068, 0
    %v3084 = vsel %vm786, %v3069, 0
    %v3087 = vsel %vm786, %v3070, 0
    %3089 = vmatprep.subr.mxu0 0.0
    %3090 = vmatpush1.msra.mxu0 %v2904
    %3091 = vmatprep.subr.mxu0 0.0
    %3092 = vmatpush1.msra.mxu0 %v2905
    %3093 = vmatprep.subr.mxu0 0.0
    %3094 = vmatpush1.msra.mxu0 %v2906
    %3095 = vmatprep.subr.mxu0 0.0
    %3096 = vmatpush1.msra.mxu0 %v2907
    %3097 = vmatprep.subr.mxu0 0.0
    %3098 = vmatpush1.msra.mxu0 %v2908
    %3099 = vmatprep.subr.mxu0 0.0
    %3100 = vmatpush1.msra.mxu0 %v2909
    %3101 = vmatprep.subr.mxu0 0.0
    %3102 = vmatpush1.msra.mxu0 0.0
    %3103 = vmatprep.subr.mxu0 0.0
    %3104 = vmatpush1.msra.mxu0 0.0
    %3105 = vmatprep.subr.mxu0 0.0
    %3106 = vmatpush1.msra.mxu0 0.0
    %3107 = vmatprep.subr.mxu0 0.0
    %3108 = vmatpush1.msra.mxu0 0.0
    %3109 = vmatprep.subr.mxu0 0.0
    %3110 = vmatpush1.msra.mxu0 0.0
    %3111 = vmatprep.subr.mxu0 0.0
    %3112 = vmatpush1.msra.mxu0 0.0
    %3113 = vmatprep.subr.mxu0 0.0
    %3114 = vmatpush1.msra.mxu0 0.0
    %3115 = vmatprep.subr.mxu0 0.0
    %3116 = vmatpush1.msra.mxu0 0.0
    %3117 = vmatprep.subr.mxu0 0.0
    %3118 = vmatpush1.msra.mxu0 0.0
    %3119 = vmatprep.subr.mxu0 0.0
    %3120 = vmatpush1.msra.mxu0 0.0
    %3121 = vmatprep.subr.mxu0 0.0
    %3122 = vmatpush1.msra.mxu0 0.0
    %3123 = vmatprep.subr.mxu0 0.0
    %3124 = vmatpush1.msra.mxu0 0.0
    %3125 = vmatprep.subr.mxu0 0.0
    %3126 = vmatpush1.msra.mxu0 0.0
    %3127 = vmatprep.subr.mxu0 0.0
    %3128 = vmatpush1.msra.mxu0 0.0
    %3129 = vmatprep.subr.mxu0 0.0
    %3130 = vmatpush1.msra.mxu0 0.0
    %3131 = vmatprep.subr.mxu0 0.0
    %3132 = vmatpush1.msra.mxu0 0.0
    %3133 = vmatprep.subr.mxu0 0.0
    %3134 = vmatpush1.msra.mxu0 0.0
    %3135 = vmatprep.subr.mxu0 0.0
    %3136 = vmatpush1.msra.mxu0 0.0
    %3137 = vmatprep.subr.mxu0 0.0
    %3138 = vmatpush1.msra.mxu0 0.0
    %3139 = vmatprep.subr.mxu0 0.0
    %3140 = vmatpush1.msra.mxu0 0.0
    %3141 = vmatprep.subr.mxu0 0.0
    %3142 = vmatpush1.msra.mxu0 0.0
    %3143 = vmatprep.subr.mxu0 0.0
    %3144 = vmatpush1.msra.mxu0 0.0
    %3145 = vmatprep.subr.mxu0 0.0
    %3146 = vmatpush1.msra.mxu0 0.0
    %3147 = vmatprep.subr.mxu0 0.0
    %3148 = vmatpush1.msra.mxu0 0.0
    %3149 = vmatprep.subr.mxu0 0.0
    %3150 = vmatpush1.msra.mxu0 0.0
    %3151 = vmatprep.subr.mxu0 0.0
    %3152 = vmatpush1.msra.mxu0 0.0
    %3153 = vmatprep.mubr.f32.mxu0 0.0
    %3154 = vmatmul.mubr.f32.gmra.mrb[0].mxu0 %v3072
    %v3155 = vpop.f32.mrb[0].mxu0
    %v3156 = vadd.f32 0.0, %v3155
    %v3157 = vpop.f32.mrb[0].mxu0
    %3158 = vmatprep.mubr.f32.mxu0 0.0
    %3159 = vmatmul.mubr.f32.gmra.mrb[0].mxu0 %v3075
    %v3160 = vpop.f32.mrb[0].mxu0
    %v3161 = vadd.f32 0.0, %v3160
    %v3162 = vpop.f32.mrb[0].mxu0
    %3163 = vmatprep.mubr.f32.mxu0 0.0
    %3164 = vmatmul.mubr.f32.gmra.mrb[0].mxu0 %v3078
    %v3165 = vpop.f32.mrb[0].mxu0
    %v3166 = vadd.f32 0.0, %v3165
    %v3167 = vpop.f32.mrb[0].mxu0
    %3168 = vmatprep.mubr.f32.mxu0 0.0
    %3169 = vmatmul.mubr.f32.gmra.mrb[0].mxu0 %v3081
    %v3170 = vpop.f32.mrb[0].mxu0
    %v3171 = vadd.f32 0.0, %v3170
    %v3172 = vpop.f32.mrb[0].mxu0
    %3173 = vmatprep.mubr.f32.mxu0 0.0
    %3174 = vmatmul.mubr.f32.gmra.mrb[0].mxu0 %v3084
    %v3175 = vpop.f32.mrb[0].mxu0
    %v3176 = vadd.f32 0.0, %v3175
    %v3177 = vpop.f32.mrb[0].mxu0
    %3178 = vmatprep.mubr.f32.mxu0 0.0
    %3179 = vmatmul.mubr.f32.gmra.mrb[0].mxu0 %v3087
    %v3180 = vpop.f32.mrb[0].mxu0
    %v3181 = vadd.f32 0.0, %v3180
    %v3182 = vpop.f32.mrb[0].mxu0
    %3183 = vdwg.mxu0
    %v3185 = vsel %vm786, %v2892, 0
    %v3188 = vsel %vm786, %v2893, 0
    %v3191 = vsel %vm786, %v2894, 0
    %v3194 = vsel %vm786, %v2895, 0
    %v3197 = vsel %vm786, %v2896, 0
    %v3200 = vsel %vm786, %v2897, 0
    %3202 = vmatprep.subr.mxu0 0.0
    %3203 = vmatpush1.msra.mxu0 %v2731
    %3204 = vmatprep.subr.mxu0 0.0
    %3205 = vmatpush1.msra.mxu0 %v2732
    %3206 = vmatprep.subr.mxu0 0.0
    %3207 = vmatpush1.msra.mxu0 %v2733
    %3208 = vmatprep.subr.mxu0 0.0
    %3209 = vmatpush1.msra.mxu0 %v2734
    %3210 = vmatprep.subr.mxu0 0.0
    %3211 = vmatpush1.msra.mxu0 %v2735
    %3212 = vmatprep.subr.mxu0 0.0
    %3213 = vmatpush1.msra.mxu0 %v2736
    %3214 = vmatprep.subr.mxu0 0.0
    %3215 = vmatpush1.msra.mxu0 0.0
    %3216 = vmatprep.subr.mxu0 0.0
    %3217 = vmatpush1.msra.mxu0 0.0
    %3218 = vmatprep.subr.mxu0 0.0
    %3219 = vmatpush1.msra.mxu0 0.0
    %3220 = vmatprep.subr.mxu0 0.0
    %3221 = vmatpush1.msra.mxu0 0.0
    %3222 = vmatprep.subr.mxu0 0.0
    %3223 = vmatpush1.msra.mxu0 0.0
    %3224 = vmatprep.subr.mxu0 0.0
    %3225 = vmatpush1.msra.mxu0 0.0
    %3226 = vmatprep.subr.mxu0 0.0
    %3227 = vmatpush1.msra.mxu0 0.0
    %3228 = vmatprep.subr.mxu0 0.0
    %3229 = vmatpush1.msra.mxu0 0.0
    %3230 = vmatprep.subr.mxu0 0.0
    %3231 = vmatpush1.msra.mxu0 0.0
    %3232 = vmatprep.subr.mxu0 0.0
    %3233 = vmatpush1.msra.mxu0 0.0
    %3234 = vmatprep.subr.mxu0 0.0
    %3235 = vmatpush1.msra.mxu0 0.0
    %3236 = vmatprep.subr.mxu0 0.0
    %3237 = vmatpush1.msra.mxu0 0.0
    %3238 = vmatprep.subr.mxu0 0.0
    %3239 = vmatpush1.msra.mxu0 0.0
    %3240 = vmatprep.subr.mxu0 0.0
    %3241 = vmatpush1.msra.mxu0 0.0
    %3242 = vmatprep.subr.mxu0 0.0
    %3243 = vmatpush1.msra.mxu0 0.0
    %3244 = vmatprep.subr.mxu0 0.0
    %3245 = vmatpush1.msra.mxu0 0.0
    %3246 = vmatprep.subr.mxu0 0.0
    %3247 = vmatpush1.msra.mxu0 0.0
    %3248 = vmatprep.subr.mxu0 0.0
    %3249 = vmatpush1.msra.mxu0 0.0
    %3250 = vmatprep.subr.mxu0 0.0
    %3251 = vmatpush1.msra.mxu0 0.0
    %3252 = vmatprep.subr.mxu0 0.0
    %3253 = vmatpush1.msra.mxu0 0.0
    %3254 = vmatprep.subr.mxu0 0.0
    %3255 = vmatpush1.msra.mxu0 0.0
    %3256 = vmatprep.subr.mxu0 0.0
    %3257 = vmatpush1.msra.mxu0 0.0
    %3258 = vmatprep.subr.mxu0 0.0
    %3259 = vmatpush1.msra.mxu0 0.0
    %3260 = vmatprep.subr.mxu0 0.0
    %3261 = vmatpush1.msra.mxu0 0.0
    %3262 = vmatprep.subr.mxu0 0.0
    %3263 = vmatpush1.msra.mxu0 0.0
    %3264 = vmatprep.subr.mxu0 0.0
    %3265 = vmatpush1.msra.mxu0 0.0
    %3266 = vmatprep.mubr.f32.mxu0 0.0
    %3267 = vmatmul.mubr.f32.gmra.mrb[0].mxu0 %v3185
    %v3268 = vpop.f32.mrb[0].mxu0
    %v3269 = vadd.f32 %v3156, %v3268
    %v3270 = vpop.f32.mrb[0].mxu0
    %3271 = vmatprep.mubr.f32.mxu0 0.0
    %3272 = vmatmul.mubr.f32.gmra.mrb[0].mxu0 %v3188
    %v3273 = vpop.f32.mrb[0].mxu0
    %v3274 = vadd.f32 %v3161, %v3273
    %v3275 = vpop.f32.mrb[0].mxu0
    %3276 = vmatprep.mubr.f32.mxu0 0.0
    %3277 = vmatmul.mubr.f32.gmra.mrb[0].mxu0 %v3191
    %v3278 = vpop.f32.mrb[0].mxu0
    %v3279 = vadd.f32 %v3166, %v3278
    %v3280 = vpop.f32.mrb[0].mxu0
    %3281 = vmatprep.mubr.f32.mxu0 0.0
    %3282 = vmatmul.mubr.f32.gmra.mrb[0].mxu0 %v3194
    %v3283 = vpop.f32.mrb[0].mxu0
    %v3284 = vadd.f32 %v3171, %v3283
    %v3285 = vpop.f32.mrb[0].mxu0
    %3286 = vmatprep.mubr.f32.mxu0 0.0
    %3287 = vmatmul.mubr.f32.gmra.mrb[0].mxu0 %v3197
    %v3288 = vpop.f32.mrb[0].mxu0
    %v3289 = vadd.f32 %v3176, %v3288
    %v3290 = vpop.f32.mrb[0].mxu0
    %3291 = vmatprep.mubr.f32.mxu0 0.0
    %3292 = vmatmul.mubr.f32.gmra.mrb[0].mxu0 %v3200
    %v3293 = vpop.f32.mrb[0].mxu0
    %v3294 = vadd.f32 %v3181, %v3293
    %v3295 = vpop.f32.mrb[0].mxu0
    %3296 = vdwg.mxu0
    %v3297 = vmul.f32 %v2598, %v301
    %v3298 = vmul.f32 %v2604, %v301
    %v3299 = vmul.f32 %v2610, %v301
    %v3300 = vmul.f32 %v2616, %v301
    %v3301 = vmul.f32 %v2622, %v301
    %v3302 = vmul.f32 %v2628, %v301
    %v3303 = vmul.f32 %v2697, %v301
    %v3304 = vmul.f32 %v2702, %v301
    %v3305 = vmul.f32 %v2707, %v301
    %v3306 = vmul.f32 %v2712, %v301
    %v3307 = vmul.f32 %v2717, %v301
    %v3308 = vmul.f32 %v2722, %v301
    %3309 = vmatprep.subr.mxu0 0.0
    %3310 = vmatpush1.xpose.msra.mxu0 %v3297
    %3311 = vmatprep.subr.mxu0 0.0
    %3312 = vmatpush1.xpose.msra.mxu0 %v3298
    %3313 = vmatprep.subr.mxu0 0.0
    %3314 = vmatpush1.xpose.msra.mxu0 %v3299
    %3315 = vmatprep.subr.mxu0 0.0
    %3316 = vmatpush1.xpose.msra.mxu0 %v3300
    %3317 = vmatprep.subr.mxu0 0.0
    %3318 = vmatpush1.xpose.msra.mxu0 %v3301
    %3319 = vmatprep.subr.mxu0 0.0
    %3320 = vmatpush1.xpose.msra.mxu0 %v3302
    %3321 = vmatprep.subr.mxu0 0.0
    %3322 = vmatpush1.xpose.msra.mxu0 0.0
    %3323 = vmatprep.subr.mxu0 0.0
    %3324 = vmatpush1.xpose.msra.mxu0 0.0
    %3325 = vmatprep.subr.mxu0 0.0
    %3326 = vmatpush1.xpose.msra.mxu0 0.0
    %3327 = vmatprep.subr.mxu0 0.0
    %3328 = vmatpush1.xpose.msra.mxu0 0.0
    %3329 = vmatprep.subr.mxu0 0.0
    %3330 = vmatpush1.xpose.msra.mxu0 0.0
    %3331 = vmatprep.subr.mxu0 0.0
    %3332 = vmatpush1.xpose.msra.mxu0 0.0
    %3333 = vmatprep.subr.mxu0 0.0
    %3334 = vmatpush1.xpose.msra.mxu0 0.0
    %3335 = vmatprep.subr.mxu0 0.0
    %3336 = vmatpush1.xpose.msra.mxu0 0.0
    %3337 = vmatprep.subr.mxu0 0.0
    %3338 = vmatpush1.xpose.msra.mxu0 0.0
    %3339 = vmatprep.subr.mxu0 0.0
    %3340 = vmatpush1.xpose.msra.mxu0 0.0
    %3341 = vmatprep.subr.mxu0 0.0
    %3342 = vmatpush1.xpose.msra.mxu0 0.0
    %3343 = vmatprep.subr.mxu0 0.0
    %3344 = vmatpush1.xpose.msra.mxu0 0.0
    %3345 = vmatprep.subr.mxu0 0.0
    %3346 = vmatpush1.xpose.msra.mxu0 0.0
    %3347 = vmatprep.subr.mxu0 0.0
    %3348 = vmatpush1.xpose.msra.mxu0 0.0
    %3349 = vmatprep.subr.mxu0 0.0
    %3350 = vmatpush1.xpose.msra.mxu0 0.0
    %3351 = vmatprep.subr.mxu0 0.0
    %3352 = vmatpush1.xpose.msra.mxu0 0.0
    %3353 = vmatprep.subr.mxu0 0.0
    %3354 = vmatpush1.xpose.msra.mxu0 0.0
    %3355 = vmatprep.subr.mxu0 0.0
    %3356 = vmatpush1.xpose.msra.mxu0 0.0
    %3357 = vmatprep.subr.mxu0 0.0
    %3358 = vmatpush1.xpose.msra.mxu0 0.0
    %3359 = vmatprep.subr.mxu0 0.0
    %3360 = vmatpush1.xpose.msra.mxu0 0.0
    %3361 = vmatprep.subr.mxu0 0.0
    %3362 = vmatpush1.xpose.msra.mxu0 0.0
    %3363 = vmatprep.subr.mxu0 0.0
    %3364 = vmatpush1.xpose.msra.mxu0 0.0
    %3365 = vmatprep.subr.mxu0 0.0
    %3366 = vmatpush1.xpose.msra.mxu0 0.0
    %3367 = vmatprep.subr.mxu0 0.0
    %3368 = vmatpush1.xpose.msra.mxu0 0.0
    %3369 = vmatprep.subr.mxu0 0.0
    %3370 = vmatpush1.xpose.msra.mxu0 0.0
    %3371 = vmatprep.subr.mxu0 0.0
    %3372 = vmatpush1.xpose.msra.mxu0 0.0
    %3373 = vmatprep.mubr.f32.mxu0 0.0
    %3374 = vmatmul.mubr.f32.gmra.mrb[0].mxu0 %v2596
    %v3375 = vpop.f32.mrb[0].mxu0
    %v3376 = vadd.f32 %v307, %v3375
    %v3377 = vpop.f32.mrb[0].mxu0
    %3378 = vmatprep.mubr.f32.mxu0 0.0
    %3379 = vmatmul.mubr.f32.gmra.mrb[0].mxu0 %v2602
    %v3380 = vpop.f32.mrb[0].mxu0
    %v3381 = vadd.f32 %v308, %v3380
    %v3382 = vpop.f32.mrb[0].mxu0
    %3383 = vmatprep.mubr.f32.mxu0 0.0
    %3384 = vmatmul.mubr.f32.gmra.mrb[0].mxu0 %v2608
    %v3385 = vpop.f32.mrb[0].mxu0
    %v3386 = vadd.f32 %v309, %v3385
    %v3387 = vpop.f32.mrb[0].mxu0
    %3388 = vmatprep.mubr.f32.mxu0 0.0
    %3389 = vmatmul.mubr.f32.gmra.mrb[0].mxu0 %v2614
    %v3390 = vpop.f32.mrb[0].mxu0
    %v3391 = vadd.f32 %v310, %v3390
    %v3392 = vpop.f32.mrb[0].mxu0
    %3393 = vmatprep.mubr.f32.mxu0 0.0
    %3394 = vmatmul.mubr.f32.gmra.mrb[0].mxu0 %v2620
    %v3395 = vpop.f32.mrb[0].mxu0
    %v3396 = vadd.f32 %v311, %v3395
    %v3397 = vpop.f32.mrb[0].mxu0
    %3398 = vmatprep.mubr.f32.mxu0 0.0
    %3399 = vmatmul.mubr.f32.gmra.mrb[0].mxu0 %v2626
    %v3400 = vpop.f32.mrb[0].mxu0
    %v3401 = vadd.f32 %v312, %v3400
    %v3402 = vpop.f32.mrb[0].mxu0
    %3403 = vdwg.mxu0
    %v3404 = vsel %vm786, %v3376, -inf
    %3405 = vmax.xlane.f32.xlu0 %v3404
    %v3406 = vpop.xlane.xlu0 %3405
    %v3407 = vsel %vm786, %v3381, -inf
    %3408 = vmax.xlane.f32.xlu0 %v3407
    %v3409 = vpop.xlane.xlu0 %3408
    %v3410 = vsel %vm786, %v3386, -inf
    %3411 = vmax.xlane.f32.xlu0 %v3410
    %v3412 = vpop.xlane.xlu0 %3411
    %v3413 = vsel %vm786, %v3391, -inf
    %3414 = vmax.xlane.f32.xlu0 %v3413
    %v3415 = vpop.xlane.xlu0 %3414
    %v3416 = vsel %vm786, %v3396, -inf
    %3417 = vmax.xlane.f32.xlu0 %v3416
    %v3418 = vpop.xlane.xlu0 %3417
    %v3419 = vsel %vm786, %v3401, -inf
    %3420 = vmax.xlane.f32.xlu0 %v3419
    %v3421 = vpop.xlane.xlu0 %3420
    %v3422 = vsub.f32 %v3376, %v3406
    %v3423 = vsub.f32 %v3381, %v3409
    %v3424 = vsub.f32 %v3386, %v3412
    %v3425 = vsub.f32 %v3391, %v3415
    %v3426 = vsub.f32 %v3396, %v3418
    %v3427 = vsub.f32 %v3401, %v3421
    %v3428 = vmul.f32 %v3422, 1.442695
    %v3429 = vpow.pop %v3428
    %v3430 = vmul.f32 %v3423, 1.442695
    %v3431 = vpow.pop %v3430
    %v3432 = vmul.f32 %v3424, 1.442695
    %v3433 = vpow.pop %v3432
    %v3434 = vmul.f32 %v3425, 1.442695
    %v3435 = vpow.pop %v3434
    %v3436 = vmul.f32 %v3426, 1.442695
    %v3437 = vpow.pop %v3436
    %v3438 = vmul.f32 %v3427, 1.442695
    %v3439 = vpow.pop %v3438
    %v3440 = vsel %vm786, %v3429, 0.0
    %3441 = vadd.xlane.f32.xlu0 %v3440
    %v3442 = vpop.xlane.xlu0 %3441
    %v3443 = vsel %vm786, %v3431, 0.0
    %3444 = vadd.xlane.f32.xlu0 %v3443
    %v3445 = vpop.xlane.xlu0 %3444
    %v3446 = vsel %vm786, %v3433, 0.0
    %3447 = vadd.xlane.f32.xlu0 %v3446
    %v3448 = vpop.xlane.xlu0 %3447
    %v3449 = vsel %vm786, %v3435, 0.0
    %3450 = vadd.xlane.f32.xlu0 %v3449
    %v3451 = vpop.xlane.xlu0 %3450
    %v3452 = vsel %vm786, %v3437, 0.0
    %3453 = vadd.xlane.f32.xlu0 %v3452
    %v3454 = vpop.xlane.xlu0 %3453
    %v3455 = vsel %vm786, %v3439, 0.0
    %3456 = vadd.xlane.f32.xlu0 %v3455
    %v3457 = vpop.xlane.xlu0 %3456
    %v3458 = vrcp.pop %v3442
    %v3459 = vrcp.pop %v3445
    %v3460 = vrcp.pop %v3448
    %v3461 = vrcp.pop %v3451
    %v3462 = vrcp.pop %v3454
    %v3463 = vrcp.pop %v3457
    %v3464 = vmul.f32 %v3429, %v3458
    %v3465 = vmul.f32 %v3431, %v3459
    %v3466 = vmul.f32 %v3433, %v3460
    %v3467 = vmul.f32 %v3435, %v3461
    %v3468 = vmul.f32 %v3437, %v3462
    %v3469 = vmul.f32 %v3439, %v3463
    %v3471 = vsel %vm786, %v3464, 0
    %v3474 = vsel %vm786, %v3465, 0
    %v3477 = vsel %vm786, %v3466, 0
    %v3480 = vsel %vm786, %v3467, 0
    %v3483 = vsel %vm786, %v3468, 0
    %v3486 = vsel %vm786, %v3469, 0
    %3488 = vmatprep.subr.mxu0 0.0
    %3489 = vmatpush1.msra.mxu0 %v3303
    %3490 = vmatprep.subr.mxu0 0.0
    %3491 = vmatpush1.msra.mxu0 %v3304
    %3492 = vmatprep.subr.mxu0 0.0
    %3493 = vmatpush1.msra.mxu0 %v3305
    %3494 = vmatprep.subr.mxu0 0.0
    %3495 = vmatpush1.msra.mxu0 %v3306
    %3496 = vmatprep.subr.mxu0 0.0
    %3497 = vmatpush1.msra.mxu0 %v3307
    %3498 = vmatprep.subr.mxu0 0.0
    %3499 = vmatpush1.msra.mxu0 %v3308
    %3500 = vmatprep.subr.mxu0 0.0
    %3501 = vmatpush1.msra.mxu0 0.0
    %3502 = vmatprep.subr.mxu0 0.0
    %3503 = vmatpush1.msra.mxu0 0.0
    %3504 = vmatprep.subr.mxu0 0.0
    %3505 = vmatpush1.msra.mxu0 0.0
    %3506 = vmatprep.subr.mxu0 0.0
    %3507 = vmatpush1.msra.mxu0 0.0
    %3508 = vmatprep.subr.mxu0 0.0
    %3509 = vmatpush1.msra.mxu0 0.0
    %3510 = vmatprep.subr.mxu0 0.0
    %3511 = vmatpush1.msra.mxu0 0.0
    %3512 = vmatprep.subr.mxu0 0.0
    %3513 = vmatpush1.msra.mxu0 0.0
    %3514 = vmatprep.subr.mxu0 0.0
    %3515 = vmatpush1.msra.mxu0 0.0
    %3516 = vmatprep.subr.mxu0 0.0
    %3517 = vmatpush1.msra.mxu0 0.0
    %3518 = vmatprep.subr.mxu0 0.0
    %3519 = vmatpush1.msra.mxu0 0.0
    %3520 = vmatprep.subr.mxu0 0.0
    %3521 = vmatpush1.msra.mxu0 0.0
    %3522 = vmatprep.subr.mxu0 0.0
    %3523 = vmatpush1.msra.mxu0 0.0
    %3524 = vmatprep.subr.mxu0 0.0
    %3525 = vmatpush1.msra.mxu0 0.0
    %3526 = vmatprep.subr.mxu0 0.0
    %3527 = vmatpush1.msra.mxu0 0.0
    %3528 = vmatprep.subr.mxu0 0.0
    %3529 = vmatpush1.msra.mxu0 0.0
    %3530 = vmatprep.subr.mxu0 0.0
    %3531 = vmatpush1.msra.mxu0 0.0
    %3532 = vmatprep.subr.mxu0 0.0
    %3533 = vmatpush1.msra.mxu0 0.0
    %3534 = vmatprep.subr.mxu0 0.0
    %3535 = vmatpush1.msra.mxu0 0.0
    %3536 = vmatprep.subr.mxu0 0.0
    %3537 = vmatpush1.msra.mxu0 0.0
    %3538 = vmatprep.subr.mxu0 0.0
    %3539 = vmatpush1.msra.mxu0 0.0
    %3540 = vmatprep.subr.mxu0 0.0
    %3541 = vmatpush1.msra.mxu0 0.0
    %3542 = vmatprep.subr.mxu0 0.0
    %3543 = vmatpush1.msra.mxu0 0.0
    %3544 = vmatprep.subr.mxu0 0.0
    %3545 = vmatpush1.msra.mxu0 0.0
    %3546 = vmatprep.subr.mxu0 0.0
    %3547 = vmatpush1.msra.mxu0 0.0
    %3548 = vmatprep.subr.mxu0 0.0
    %3549 = vmatpush1.msra.mxu0 0.0
    %3550 = vmatprep.subr.mxu0 0.0
    %3551 = vmatpush1.msra.mxu0 0.0
    %3552 = vmatprep.mubr.f32.mxu0 0.0
    %3553 = vmatmul.mubr.f32.gmra.mrb[0].mxu0 %v3471
    %v3554 = vpop.f32.mrb[0].mxu0
    %v3555 = vadd.f32 0.0, %v3554
    %v3556 = vpop.f32.mrb[0].mxu0
    %3557 = vmatprep.mubr.f32.mxu0 0.0
    %3558 = vmatmul.mubr.f32.gmra.mrb[0].mxu0 %v3474
    %v3559 = vpop.f32.mrb[0].mxu0
    %v3560 = vadd.f32 0.0, %v3559
    %v3561 = vpop.f32.mrb[0].mxu0
    %3562 = vmatprep.mubr.f32.mxu0 0.0
    %3563 = vmatmul.mubr.f32.gmra.mrb[0].mxu0 %v3477
    %v3564 = vpop.f32.mrb[0].mxu0
    %v3565 = vadd.f32 0.0, %v3564
    %v3566 = vpop.f32.mrb[0].mxu0
    %3567 = vmatprep.mubr.f32.mxu0 0.0
    %3568 = vmatmul.mubr.f32.gmra.mrb[0].mxu0 %v3480
    %v3569 = vpop.f32.mrb[0].mxu0
    %v3570 = vadd.f32 0.0, %v3569
    %v3571 = vpop.f32.mrb[0].mxu0
    %3572 = vmatprep.mubr.f32.mxu0 0.0
    %3573 = vmatmul.mubr.f32.gmra.mrb[0].mxu0 %v3483
    %v3574 = vpop.f32.mrb[0].mxu0
    %v3575 = vadd.f32 0.0, %v3574
    %v3576 = vpop.f32.mrb[0].mxu0
    %3577 = vmatprep.mubr.f32.mxu0 0.0
    %3578 = vmatmul.mubr.f32.gmra.mrb[0].mxu0 %v3486
    %v3579 = vpop.f32.mrb[0].mxu0
    %v3580 = vadd.f32 0.0, %v3579
    %v3581 = vpop.f32.mrb[0].mxu0
    %3582 = vdwg.mxu0
    %v3583 = vadd.f32 %v3269, %v3555
    %v3584 = vadd.f32 %v3274, %v3560
    %v3585 = vadd.f32 %v3279, %v3565
    %v3586 = vadd.f32 %v3284, %v3570
    %v3587 = vadd.f32 %v3289, %v3575
    %v3588 = vadd.f32 %v3294, %v3580
    %v3589 = vmul.f32 %v2598, %v306
    %v3590 = vmul.f32 %v2604, %v306
    %v3591 = vmul.f32 %v2610, %v306
    %v3592 = vmul.f32 %v2616, %v306
    %v3593 = vmul.f32 %v2622, %v306
    %v3594 = vmul.f32 %v2628, %v306
    %v3595 = vmul.f32 %v2697, %v306
    %v3596 = vmul.f32 %v2702, %v306
    %v3597 = vmul.f32 %v2707, %v306
    %v3598 = vmul.f32 %v2712, %v306
    %v3599 = vmul.f32 %v2717, %v306
    %v3600 = vmul.f32 %v2722, %v306
    %3601 = vmatprep.subr.mxu0 0.0
    %3602 = vmatpush1.xpose.msra.mxu0 %v3589
    %3603 = vmatprep.subr.mxu0 0.0
    %3604 = vmatpush1.xpose.msra.mxu0 %v3590
    %3605 = vmatprep.subr.mxu0 0.0
    %3606 = vmatpush1.xpose.msra.mxu0 %v3591
    %3607 = vmatprep.subr.mxu0 0.0
    %3608 = vmatpush1.xpose.msra.mxu0 %v3592
    %3609 = vmatprep.subr.mxu0 0.0
    %3610 = vmatpush1.xpose.msra.mxu0 %v3593
    %3611 = vmatprep.subr.mxu0 0.0
    %3612 = vmatpush1.xpose.msra.mxu0 %v3594
    %3613 = vmatprep.subr.mxu0 0.0
    %3614 = vmatpush1.xpose.msra.mxu0 0.0
    %3615 = vmatprep.subr.mxu0 0.0
    %3616 = vmatpush1.xpose.msra.mxu0 0.0
    %3617 = vmatprep.subr.mxu0 0.0
    %3618 = vmatpush1.xpose.msra.mxu0 0.0
    %3619 = vmatprep.subr.mxu0 0.0
    %3620 = vmatpush1.xpose.msra.mxu0 0.0
    %3621 = vmatprep.subr.mxu0 0.0
    %3622 = vmatpush1.xpose.msra.mxu0 0.0
    %3623 = vmatprep.subr.mxu0 0.0
    %3624 = vmatpush1.xpose.msra.mxu0 0.0
    %3625 = vmatprep.subr.mxu0 0.0
    %3626 = vmatpush1.xpose.msra.mxu0 0.0
    %3627 = vmatprep.subr.mxu0 0.0
    %3628 = vmatpush1.xpose.msra.mxu0 0.0
    %3629 = vmatprep.subr.mxu0 0.0
    %3630 = vmatpush1.xpose.msra.mxu0 0.0
    %3631 = vmatprep.subr.mxu0 0.0
    %3632 = vmatpush1.xpose.msra.mxu0 0.0
    %3633 = vmatprep.subr.mxu0 0.0
    %3634 = vmatpush1.xpose.msra.mxu0 0.0
    %3635 = vmatprep.subr.mxu0 0.0
    %3636 = vmatpush1.xpose.msra.mxu0 0.0
    %3637 = vmatprep.subr.mxu0 0.0
    %3638 = vmatpush1.xpose.msra.mxu0 0.0
    %3639 = vmatprep.subr.mxu0 0.0
    %3640 = vmatpush1.xpose.msra.mxu0 0.0
    %3641 = vmatprep.subr.mxu0 0.0
    %3642 = vmatpush1.xpose.msra.mxu0 0.0
    %3643 = vmatprep.subr.mxu0 0.0
    %3644 = vmatpush1.xpose.msra.mxu0 0.0
    %3645 = vmatprep.subr.mxu0 0.0
    %3646 = vmatpush1.xpose.msra.mxu0 0.0
    %3647 = vmatprep.subr.mxu0 0.0
    %3648 = vmatpush1.xpose.msra.mxu0 0.0
    %3649 = vmatprep.subr.mxu0 0.0
    %3650 = vmatpush1.xpose.msra.mxu0 0.0
    %3651 = vmatprep.subr.mxu0 0.0
    %3652 = vmatpush1.xpose.msra.mxu0 0.0
    %3653 = vmatprep.subr.mxu0 0.0
    %3654 = vmatpush1.xpose.msra.mxu0 0.0
    %3655 = vmatprep.subr.mxu0 0.0
    %3656 = vmatpush1.xpose.msra.mxu0 0.0
    %3657 = vmatprep.subr.mxu0 0.0
    %3658 = vmatpush1.xpose.msra.mxu0 0.0
    %3659 = vmatprep.subr.mxu0 0.0
    %3660 = vmatpush1.xpose.msra.mxu0 0.0
    %3661 = vmatprep.subr.mxu0 0.0
    %3662 = vmatpush1.xpose.msra.mxu0 0.0
    %3663 = vmatprep.subr.mxu0 0.0
    %3664 = vmatpush1.xpose.msra.mxu0 0.0
    %3665 = vmatprep.mubr.f32.mxu0 0.0
    %3666 = vmatmul.mubr.f32.gmra.mrb[0].mxu0 %v2596
    %v3667 = vpop.f32.mrb[0].mxu0
    %v3668 = vadd.f32 %v307, %v3667
    %v3669 = vpop.f32.mrb[0].mxu0
    %3670 = vmatprep.mubr.f32.mxu0 0.0
    %3671 = vmatmul.mubr.f32.gmra.mrb[0].mxu0 %v2602
    %v3672 = vpop.f32.mrb[0].mxu0
    %v3673 = vadd.f32 %v308, %v3672
    %v3674 = vpop.f32.mrb[0].mxu0
    %3675 = vmatprep.mubr.f32.mxu0 0.0
    %3676 = vmatmul.mubr.f32.gmra.mrb[0].mxu0 %v2608
    %v3677 = vpop.f32.mrb[0].mxu0
    %v3678 = vadd.f32 %v309, %v3677
    %v3679 = vpop.f32.mrb[0].mxu0
    %3680 = vmatprep.mubr.f32.mxu0 0.0
    %3681 = vmatmul.mubr.f32.gmra.mrb[0].mxu0 %v2614
    %v3682 = vpop.f32.mrb[0].mxu0
    %v3683 = vadd.f32 %v310, %v3682
    %v3684 = vpop.f32.mrb[0].mxu0
    %3685 = vmatprep.mubr.f32.mxu0 0.0
    %3686 = vmatmul.mubr.f32.gmra.mrb[0].mxu0 %v2620
    %v3687 = vpop.f32.mrb[0].mxu0
    %v3688 = vadd.f32 %v311, %v3687
    %v3689 = vpop.f32.mrb[0].mxu0
    %3690 = vmatprep.mubr.f32.mxu0 0.0
    %3691 = vmatmul.mubr.f32.gmra.mrb[0].mxu0 %v2626
    %v3692 = vpop.f32.mrb[0].mxu0
    %v3693 = vadd.f32 %v312, %v3692
    %v3694 = vpop.f32.mrb[0].mxu0
    %3695 = vdwg.mxu0
    %v3696 = vsel %vm786, %v3668, -inf
    %3697 = vmax.xlane.f32.xlu0 %v3696
    %v3698 = vpop.xlane.xlu0 %3697
    %v3699 = vsel %vm786, %v3673, -inf
    %3700 = vmax.xlane.f32.xlu0 %v3699
    %v3701 = vpop.xlane.xlu0 %3700
    %v3702 = vsel %vm786, %v3678, -inf
    %3703 = vmax.xlane.f32.xlu0 %v3702
    %v3704 = vpop.xlane.xlu0 %3703
    %v3705 = vsel %vm786, %v3683, -inf
    %3706 = vmax.xlane.f32.xlu0 %v3705
    %v3707 = vpop.xlane.xlu0 %3706
    %v3708 = vsel %vm786, %v3688, -inf
    %3709 = vmax.xlane.f32.xlu0 %v3708
    %v3710 = vpop.xlane.xlu0 %3709
    %v3711 = vsel %vm786, %v3693, -inf
    %3712 = vmax.xlane.f32.xlu0 %v3711
    %v3713 = vpop.xlane.xlu0 %3712
    %v3714 = vsub.f32 %v3668, %v3698
    %v3715 = vsub.f32 %v3673, %v3701
    %v3716 = vsub.f32 %v3678, %v3704
    %v3717 = vsub.f32 %v3683, %v3707
    %v3718 = vsub.f32 %v3688, %v3710
    %v3719 = vsub.f32 %v3693, %v3713
    %v3720 = vmul.f32 %v3714, 1.442695
    %v3721 = vpow.pop %v3720
    %v3722 = vmul.f32 %v3715, 1.442695
    %v3723 = vpow.pop %v3722
    %v3724 = vmul.f32 %v3716, 1.442695
    %v3725 = vpow.pop %v3724
    %v3726 = vmul.f32 %v3717, 1.442695
    %v3727 = vpow.pop %v3726
    %v3728 = vmul.f32 %v3718, 1.442695
    %v3729 = vpow.pop %v3728
    %v3730 = vmul.f32 %v3719, 1.442695
    %v3731 = vpow.pop %v3730
    %v3732 = vsel %vm786, %v3721, 0.0
    %3733 = vadd.xlane.f32.xlu0 %v3732
    %v3734 = vpop.xlane.xlu0 %3733
    %v3735 = vsel %vm786, %v3723, 0.0
    %3736 = vadd.xlane.f32.xlu0 %v3735
    %v3737 = vpop.xlane.xlu0 %3736
    %v3738 = vsel %vm786, %v3725, 0.0
    %3739 = vadd.xlane.f32.xlu0 %v3738
    %v3740 = vpop.xlane.xlu0 %3739
    %v3741 = vsel %vm786, %v3727, 0.0
    %3742 = vadd.xlane.f32.xlu0 %v3741
    %v3743 = vpop.xlane.xlu0 %3742
    %v3744 = vsel %vm786, %v3729, 0.0
    %3745 = vadd.xlane.f32.xlu0 %v3744
    %v3746 = vpop.xlane.xlu0 %3745
    %v3747 = vsel %vm786, %v3731, 0.0
    %3748 = vadd.xlane.f32.xlu0 %v3747
    %v3749 = vpop.xlane.xlu0 %3748
    %v3750 = vrcp.pop %v3734
    %v3751 = vrcp.pop %v3737
    %v3752 = vrcp.pop %v3740
    %v3753 = vrcp.pop %v3743
    %v3754 = vrcp.pop %v3746
    %v3755 = vrcp.pop %v3749
    %v3756 = vmul.f32 %v3721, %v3750
    %v3757 = vmul.f32 %v3723, %v3751
    %v3758 = vmul.f32 %v3725, %v3752
    %v3759 = vmul.f32 %v3727, %v3753
    %v3760 = vmul.f32 %v3729, %v3754
    %v3761 = vmul.f32 %v3731, %v3755
    %v3763 = vsel %vm786, %v3756, 0
    %v3766 = vsel %vm786, %v3757, 0
    %v3769 = vsel %vm786, %v3758, 0
    %v3772 = vsel %vm786, %v3759, 0
    %v3775 = vsel %vm786, %v3760, 0
    %v3778 = vsel %vm786, %v3761, 0
    %3780 = vmatprep.subr.mxu0 0.0
    %3781 = vmatpush1.msra.mxu0 %v3595
    %3782 = vmatprep.subr.mxu0 0.0
    %3783 = vmatpush1.msra.mxu0 %v3596
    %3784 = vmatprep.subr.mxu0 0.0
    %3785 = vmatpush1.msra.mxu0 %v3597
    %3786 = vmatprep.subr.mxu0 0.0
    %3787 = vmatpush1.msra.mxu0 %v3598
    %3788 = vmatprep.subr.mxu0 0.0
    %3789 = vmatpush1.msra.mxu0 %v3599
    %3790 = vmatprep.subr.mxu0 0.0
    %3791 = vmatpush1.msra.mxu0 %v3600
    %3792 = vmatprep.subr.mxu0 0.0
    %3793 = vmatpush1.msra.mxu0 0.0
    %3794 = vmatprep.subr.mxu0 0.0
    %3795 = vmatpush1.msra.mxu0 0.0
    %3796 = vmatprep.subr.mxu0 0.0
    %3797 = vmatpush1.msra.mxu0 0.0
    %3798 = vmatprep.subr.mxu0 0.0
    %3799 = vmatpush1.msra.mxu0 0.0
    %3800 = vmatprep.subr.mxu0 0.0
    %3801 = vmatpush1.msra.mxu0 0.0
    %3802 = vmatprep.subr.mxu0 0.0
    %3803 = vmatpush1.msra.mxu0 0.0
    %3804 = vmatprep.subr.mxu0 0.0
    %3805 = vmatpush1.msra.mxu0 0.0
    %3806 = vmatprep.subr.mxu0 0.0
    %3807 = vmatpush1.msra.mxu0 0.0
    %3808 = vmatprep.subr.mxu0 0.0
    %3809 = vmatpush1.msra.mxu0 0.0
    %3810 = vmatprep.subr.mxu0 0.0
    %3811 = vmatpush1.msra.mxu0 0.0
    %3812 = vmatprep.subr.mxu0 0.0
    %3813 = vmatpush1.msra.mxu0 0.0
    %3814 = vmatprep.subr.mxu0 0.0
    %3815 = vmatpush1.msra.mxu0 0.0
    %3816 = vmatprep.subr.mxu0 0.0
    %3817 = vmatpush1.msra.mxu0 0.0
    %3818 = vmatprep.subr.mxu0 0.0
    %3819 = vmatpush1.msra.mxu0 0.0
    %3820 = vmatprep.subr.mxu0 0.0
    %3821 = vmatpush1.msra.mxu0 0.0
    %3822 = vmatprep.subr.mxu0 0.0
    %3823 = vmatpush1.msra.mxu0 0.0
    %3824 = vmatprep.subr.mxu0 0.0
    %3825 = vmatpush1.msra.mxu0 0.0
    %3826 = vmatprep.subr.mxu0 0.0
    %3827 = vmatpush1.msra.mxu0 0.0
    %3828 = vmatprep.subr.mxu0 0.0
    %3829 = vmatpush1.msra.mxu0 0.0
    %3830 = vmatprep.subr.mxu0 0.0
    %3831 = vmatpush1.msra.mxu0 0.0
    %3832 = vmatprep.subr.mxu0 0.0
    %3833 = vmatpush1.msra.mxu0 0.0
    %3834 = vmatprep.subr.mxu0 0.0
    %3835 = vmatpush1.msra.mxu0 0.0
    %3836 = vmatprep.subr.mxu0 0.0
    %3837 = vmatpush1.msra.mxu0 0.0
    %3838 = vmatprep.subr.mxu0 0.0
    %3839 = vmatpush1.msra.mxu0 0.0
    %3840 = vmatprep.subr.mxu0 0.0
    %3841 = vmatpush1.msra.mxu0 0.0
    %3842 = vmatprep.subr.mxu0 0.0
    %3843 = vmatpush1.msra.mxu0 0.0
    %3844 = vmatprep.mubr.f32.mxu0 0.0
    %3845 = vmatmul.mubr.f32.gmra.mrb[0].mxu0 %v3763
    %v3846 = vpop.f32.mrb[0].mxu0
    %v3847 = vadd.f32 0.0, %v3846
    %v3848 = vpop.f32.mrb[0].mxu0
    %3849 = vmatprep.mubr.f32.mxu0 0.0
    %3850 = vmatmul.mubr.f32.gmra.mrb[0].mxu0 %v3766
    %v3851 = vpop.f32.mrb[0].mxu0
    %v3852 = vadd.f32 0.0, %v3851
    %v3853 = vpop.f32.mrb[0].mxu0
    %3854 = vmatprep.mubr.f32.mxu0 0.0
    %3855 = vmatmul.mubr.f32.gmra.mrb[0].mxu0 %v3769
    %v3856 = vpop.f32.mrb[0].mxu0
    %v3857 = vadd.f32 0.0, %v3856
    %v3858 = vpop.f32.mrb[0].mxu0
    %3859 = vmatprep.mubr.f32.mxu0 0.0
    %3860 = vmatmul.mubr.f32.gmra.mrb[0].mxu0 %v3772
    %v3861 = vpop.f32.mrb[0].mxu0
    %v3862 = vadd.f32 0.0, %v3861
    %v3863 = vpop.f32.mrb[0].mxu0
    %3864 = vmatprep.mubr.f32.mxu0 0.0
    %3865 = vmatmul.mubr.f32.gmra.mrb[0].mxu0 %v3775
    %v3866 = vpop.f32.mrb[0].mxu0
    %v3867 = vadd.f32 0.0, %v3866
    %v3868 = vpop.f32.mrb[0].mxu0
    %3869 = vmatprep.mubr.f32.mxu0 0.0
    %3870 = vmatmul.mubr.f32.gmra.mrb[0].mxu0 %v3778
    %v3871 = vpop.f32.mrb[0].mxu0
    %v3872 = vadd.f32 0.0, %v3871
    %v3873 = vpop.f32.mrb[0].mxu0
    %3874 = vdwg.mxu0
    %v3875 = vadd.f32 %v3583, %v3847
    %v3876 = vadd.f32 %v3584, %v3852
    %v3877 = vadd.f32 %v3585, %v3857
    %v3878 = vadd.f32 %v3586, %v3862
    %v3879 = vadd.f32 %v3587, %v3867
    %v3880 = vadd.f32 %v3588, %v3872
    %v3881 = vld [vmem:[%s41] sm:$0xff]
    %v3882 = vld [vmem:[%s41 + $0x8] sm:$0xff]
    %v3883 = vld [vmem:[%s41 + $0x10] sm:$0xff]
    %v3884 = vld [vmem:[%s41 + $0x18] sm:$0xff]
    %v3885 = vld [vmem:[%s41 + $0x20] sm:$0xff]
    %v3886 = vld [vmem:[%s41 + $0x28] sm:$0xff]
    %v3887 = vld [vmem:[%s41 + $0x30] sm:$0xff]
    %v3888 = vld [vmem:[%s41 + $0x38] sm:$0xff]
    %v3889 = vld [vmem:[%s41 + $0x40] sm:$0xff]
    %v3890 = vld [vmem:[%s41 + $0x48] sm:$0xff]
    %v3891 = vld [vmem:[%s41 + $0x50] sm:$0xff]
    %v3892 = vld [vmem:[%s41 + $0x58] sm:$0xff]
    %v3893 = vld [vmem:[%s41 + $0x60] sm:$0xff]
    %v3894 = vld [vmem:[%s41 + $0x68] sm:$0xff]
    %v3895 = vld [vmem:[%s41 + $0x70] sm:$0xff]
    %v3896 = vld [vmem:[%s41 + $0x78] sm:$0xff]
    %v3897 = vld [vmem:[%s43] sm:$0x1]
    %v3899 = vlaneseq
    %v3900 = vshrl.u32 %v3899, 7
    %v3901 = vsub.s32 0, %v3900
    %v3902 = vrot.slane %v3897, %v3901
    %3904 = vmatprep.subr.mxu0 0.0
    %3905 = vmatpush1.msra.mxu0 %v3881
    %3906 = vmatprep.subr.mxu0 0.0
    %3907 = vmatpush1.msra.mxu0 %v3882
    %3908 = vmatprep.subr.mxu0 0.0
    %3909 = vmatpush1.msra.mxu0 %v3883
    %3910 = vmatprep.subr.mxu0 0.0
    %3911 = vmatpush1.msra.mxu0 %v3884
    %3912 = vmatprep.subr.mxu0 0.0
    %3913 = vmatpush1.msra.mxu0 %v3885
    %3914 = vmatprep.subr.mxu0 0.0
    %3915 = vmatpush1.msra.mxu0 %v3886
    %3916 = vmatprep.subr.mxu0 0.0
    %3917 = vmatpush1.msra.mxu0 %v3887
    %3918 = vmatprep.subr.mxu0 0.0
    %3919 = vmatpush1.msra.mxu0 %v3888
    %3920 = vmatprep.subr.mxu0 0.0
    %3921 = vmatpush1.msra.mxu0 %v3889
    %3922 = vmatprep.subr.mxu0 0.0
    %3923 = vmatpush1.msra.mxu0 %v3890
    %3924 = vmatprep.subr.mxu0 0.0
    %3925 = vmatpush1.msra.mxu0 %v3891
    %3926 = vmatprep.subr.mxu0 0.0
    %3927 = vmatpush1.msra.mxu0 %v3892
    %3928 = vmatprep.subr.mxu0 0.0
    %3929 = vmatpush1.msra.mxu0 %v3893
    %3930 = vmatprep.subr.mxu0 0.0
    %3931 = vmatpush1.msra.mxu0 %v3894
    %3932 = vmatprep.subr.mxu0 0.0
    %3933 = vmatpush1.msra.mxu0 %v3895
    %3934 = vmatprep.subr.mxu0 0.0
    %3935 = vmatpush1.msra.mxu0 %v3896
    %3936 = vmatprep.subr.mxu0 0.0
    %3937 = vmatpush1.msra.mxu0 0.0
    %3938 = vmatprep.subr.mxu0 0.0
    %3939 = vmatpush1.msra.mxu0 0.0
    %3940 = vmatprep.subr.mxu0 0.0
    %3941 = vmatpush1.msra.mxu0 0.0
    %3942 = vmatprep.subr.mxu0 0.0
    %3943 = vmatpush1.msra.mxu0 0.0
    %3944 = vmatprep.subr.mxu0 0.0
    %3945 = vmatpush1.msra.mxu0 0.0
    %3946 = vmatprep.subr.mxu0 0.0
    %3947 = vmatpush1.msra.mxu0 0.0
    %3948 = vmatprep.subr.mxu0 0.0
    %3949 = vmatpush1.msra.mxu0 0.0
    %3950 = vmatprep.subr.mxu0 0.0
    %3951 = vmatpush1.msra.mxu0 0.0
    %3952 = vmatprep.subr.mxu0 0.0
    %3953 = vmatpush1.msra.mxu0 0.0
    %3954 = vmatprep.subr.mxu0 0.0
    %3955 = vmatpush1.msra.mxu0 0.0
    %3956 = vmatprep.subr.mxu0 0.0
    %3957 = vmatpush1.msra.mxu0 0.0
    %3958 = vmatprep.subr.mxu0 0.0
    %3959 = vmatpush1.msra.mxu0 0.0
    %3960 = vmatprep.subr.mxu0 0.0
    %3961 = vmatpush1.msra.mxu0 0.0
    %3962 = vmatprep.subr.mxu0 0.0
    %3963 = vmatpush1.msra.mxu0 0.0
    %3964 = vmatprep.subr.mxu0 0.0
    %3965 = vmatpush1.msra.mxu0 0.0
    %3966 = vmatprep.subr.mxu0 0.0
    %3967 = vmatpush1.msra.mxu0 0.0
    %3968 = vmatprep.mubr.f32.mxu0 0.0
    %3969 = vmatmul.mubr.f32.gmra.mrb[0].mxu0 %v3875
    %v3970 = vpop.f32.mrb[0].mxu0
    %v3971 = vadd.f32 %v3902, %v3970
    %v3972 = vpop.f32.mrb[0].mxu0
    %3973 = vmatprep.mubr.f32.mxu0 0.0
    %3974 = vmatmul.mubr.f32.gmra.mrb[0].mxu0 %v3876
    %v3975 = vpop.f32.mrb[0].mxu0
    %v3976 = vadd.f32 %v3902, %v3975
    %v3977 = vpop.f32.mrb[0].mxu0
    %3978 = vmatprep.mubr.f32.mxu0 0.0
    %3979 = vmatmul.mubr.f32.gmra.mrb[0].mxu0 %v3877
    %v3980 = vpop.f32.mrb[0].mxu0
    %v3981 = vadd.f32 %v3902, %v3980
    %v3982 = vpop.f32.mrb[0].mxu0
    %3983 = vmatprep.mubr.f32.mxu0 0.0
    %3984 = vmatmul.mubr.f32.gmra.mrb[0].mxu0 %v3878
    %v3985 = vpop.f32.mrb[0].mxu0
    %v3986 = vadd.f32 %v3902, %v3985
    %v3987 = vpop.f32.mrb[0].mxu0
    %3988 = vmatprep.mubr.f32.mxu0 0.0
    %3989 = vmatmul.mubr.f32.gmra.mrb[0].mxu0 %v3879
    %v3990 = vpop.f32.mrb[0].mxu0
    %v3991 = vadd.f32 %v3902, %v3990
    %v3992 = vpop.f32.mrb[0].mxu0
    %3993 = vmatprep.mubr.f32.mxu0 0.0
    %3994 = vmatmul.mubr.f32.gmra.mrb[0].mxu0 %v3880
    %v3995 = vpop.f32.mrb[0].mxu0
    %v3996 = vadd.f32 %v3902, %v3995
    %v3997 = vpop.f32.mrb[0].mxu0
    %3998 = vdwg.mxu0
    %v3999 = vadd.f32 %v2354, %v3971
    %v4000 = vadd.f32 %v2355, %v3976
    %v4001 = vadd.f32 %v2356, %v3981
    %v4002 = vadd.f32 %v2357, %v3986
    %v4003 = vadd.f32 %v2358, %v3991
    %v4004 = vadd.f32 %v2359, %v3996
    %v4005 = vld [vmem:[%s45] sm:$0x1]
    %v4006 = vld [vmem:[%s47] sm:$0x1]
    %4007 = vadd.xlane.f32.xlu0 %v3999
    %v4008 = vpop.xlane.xlu0 %4007
    %4009 = vadd.xlane.f32.xlu0 %v4000
    %v4010 = vpop.xlane.xlu0 %4009
    %4011 = vadd.xlane.f32.xlu0 %v4001
    %v4012 = vpop.xlane.xlu0 %4011
    %4013 = vadd.xlane.f32.xlu0 %v4002
    %v4014 = vpop.xlane.xlu0 %4013
    %4015 = vadd.xlane.f32.xlu0 %v4003
    %v4016 = vpop.xlane.xlu0 %4015
    %4017 = vadd.xlane.f32.xlu0 %v4004
    %v4018 = vpop.xlane.xlu0 %4017
    %v4019 = vmul.f32 %v3999, %v3999
    %v4020 = vmul.f32 %v4000, %v4000
    %v4021 = vmul.f32 %v4001, %v4001
    %v4022 = vmul.f32 %v4002, %v4002
    %v4023 = vmul.f32 %v4003, %v4003
    %v4024 = vmul.f32 %v4004, %v4004
    %4025 = vadd.xlane.f32.xlu0 %v4019
    %v4026 = vpop.xlane.xlu0 %4025
    %4027 = vadd.xlane.f32.xlu0 %v4020
    %v4028 = vpop.xlane.xlu0 %4027
    %4029 = vadd.xlane.f32.xlu0 %v4021
    %v4030 = vpop.xlane.xlu0 %4029
    %4031 = vadd.xlane.f32.xlu0 %v4022
    %v4032 = vpop.xlane.xlu0 %4031
    %4033 = vadd.xlane.f32.xlu0 %v4023
    %v4034 = vpop.xlane.xlu0 %4033
    %4035 = vadd.xlane.f32.xlu0 %v4024
    %v4036 = vpop.xlane.xlu0 %4035
    %v4037 = vmul.f32 %v4008, %v345
    %v4038 = vmul.f32 %v4010, %v345
    %v4039 = vmul.f32 %v4012, %v345
    %v4040 = vmul.f32 %v4014, %v345
    %v4041 = vmul.f32 %v4016, %v345
    %v4042 = vmul.f32 %v4018, %v345
    %v4043 = vmul.f32 %v4026, %v345
    %v4044 = vmul.f32 %v4028, %v345
    %v4045 = vmul.f32 %v4030, %v345
    %v4046 = vmul.f32 %v4032, %v345
    %v4047 = vmul.f32 %v4034, %v345
    %v4048 = vmul.f32 %v4036, %v345
    %v4049 = vmul.f32 %v4037, %v4037
    %v4050 = vmul.f32 %v4038, %v4038
    %v4051 = vmul.f32 %v4039, %v4039
    %v4052 = vmul.f32 %v4040, %v4040
    %v4053 = vmul.f32 %v4041, %v4041
    %v4054 = vmul.f32 %v4042, %v4042
    %v4055 = vsub.f32 %v4043, %v4049
    %v4056 = vsub.f32 %v4044, %v4050
    %v4057 = vsub.f32 %v4045, %v4051
    %v4058 = vsub.f32 %v4046, %v4052
    %v4059 = vsub.f32 %v4047, %v4053
    %v4060 = vsub.f32 %v4048, %v4054
    %v4061 = vsub.f32 %v3999, %v4037
    %v4062 = vsub.f32 %v4000, %v4038
    %v4063 = vsub.f32 %v4001, %v4039
    %v4064 = vsub.f32 %v4002, %v4040
    %v4065 = vsub.f32 %v4003, %v4041
    %v4066 = vsub.f32 %v4004, %v4042
    %v4067 = vadd.f32 %v4055, 1e-05
    %v4068 = vadd.f32 %v4056, 1e-05
    %v4069 = vadd.f32 %v4057, 1e-05
    %v4070 = vadd.f32 %v4058, 1e-05
    %v4071 = vadd.f32 %v4059, 1e-05
    %v4072 = vadd.f32 %v4060, 1e-05
    %v4073 = vrsqrt.pop %v4067
    %v4074 = vrsqrt.pop %v4068
    %v4075 = vrsqrt.pop %v4069
    %v4076 = vrsqrt.pop %v4070
    %v4077 = vrsqrt.pop %v4071
    %v4078 = vrsqrt.pop %v4072
    %v4079 = vmul.f32 %v4061, %v4073
    %v4080 = vmul.f32 %v4062, %v4074
    %v4081 = vmul.f32 %v4063, %v4075
    %v4082 = vmul.f32 %v4064, %v4076
    %v4083 = vmul.f32 %v4065, %v4077
    %v4084 = vmul.f32 %v4066, %v4078
    %v4086 = vlaneseq
    %v4087 = vshrl.u32 %v4086, 7
    %v4088 = vsub.s32 0, %v4087
    %v4089 = vrot.slane %v4005, %v4088
    %v4091 = vmul.f32 %v4079, %v4089
    %v4092 = vmul.f32 %v4080, %v4089
    %v4093 = vmul.f32 %v4081, %v4089
    %v4094 = vmul.f32 %v4082, %v4089
    %v4095 = vmul.f32 %v4083, %v4089
    %v4096 = vmul.f32 %v4084, %v4089
    %v4098 = vlaneseq
    %v4099 = vshrl.u32 %v4098, 7
    %v4100 = vsub.s32 0, %v4099
    %v4101 = vrot.slane %v4006, %v4100
    %v4103 = vadd.f32 %v4091, %v4101
    %v4104 = vadd.f32 %v4092, %v4101
    %v4105 = vadd.f32 %v4093, %v4101
    %v4106 = vadd.f32 %v4094, %v4101
    %v4107 = vadd.f32 %v4095, %v4101
    %v4108 = vadd.f32 %v4096, %v4101
    %v4109 = vld [vmem:[%s49] sm:$0xff]
    %v4110 = vld [vmem:[%s49 + $0x8] sm:$0xff]
    %v4111 = vld [vmem:[%s49 + $0x10] sm:$0xff]
    %v4112 = vld [vmem:[%s49 + $0x18] sm:$0xff]
    %v4113 = vld [vmem:[%s49 + $0x20] sm:$0xff]
    %v4114 = vld [vmem:[%s49 + $0x28] sm:$0xff]
    %v4115 = vld [vmem:[%s49 + $0x30] sm:$0xff]
    %v4116 = vld [vmem:[%s49 + $0x38] sm:$0xff]
    %v4117 = vld [vmem:[%s49 + $0x40] sm:$0xff]
    %v4118 = vld [vmem:[%s49 + $0x48] sm:$0xff]
    %v4119 = vld [vmem:[%s49 + $0x50] sm:$0xff]
    %v4120 = vld [vmem:[%s49 + $0x58] sm:$0xff]
    %v4121 = vld [vmem:[%s49 + $0x60] sm:$0xff]
    %v4122 = vld [vmem:[%s49 + $0x68] sm:$0xff]
    %v4123 = vld [vmem:[%s49 + $0x70] sm:$0xff]
    %v4124 = vld [vmem:[%s49 + $0x78] sm:$0xff]
    %v4125 = vld [vmem:[%s51] sm:$0x1]
    %v4127 = vlaneseq
    %v4128 = vshrl.u32 %v4127, 7
    %v4129 = vsub.s32 0, %v4128
    %v4130 = vrot.slane %v4125, %v4129
    %4132 = vmatprep.subr.mxu0 0.0
    %4133 = vmatpush1.msra.mxu0 %v4109
    %4134 = vmatprep.subr.mxu0 0.0
    %4135 = vmatpush1.msra.mxu0 %v4110
    %4136 = vmatprep.subr.mxu0 0.0
    %4137 = vmatpush1.msra.mxu0 %v4111
    %4138 = vmatprep.subr.mxu0 0.0
    %4139 = vmatpush1.msra.mxu0 %v4112
    %4140 = vmatprep.subr.mxu0 0.0
    %4141 = vmatpush1.msra.mxu0 %v4113
    %4142 = vmatprep.subr.mxu0 0.0
    %4143 = vmatpush1.msra.mxu0 %v4114
    %4144 = vmatprep.subr.mxu0 0.0
    %4145 = vmatpush1.msra.mxu0 %v4115
    %4146 = vmatprep.subr.mxu0 0.0
    %4147 = vmatpush1.msra.mxu0 %v4116
    %4148 = vmatprep.subr.mxu0 0.0
    %4149 = vmatpush1.msra.mxu0 %v4117
    %4150 = vmatprep.subr.mxu0 0.0
    %4151 = vmatpush1.msra.mxu0 %v4118
    %4152 = vmatprep.subr.mxu0 0.0
    %4153 = vmatpush1.msra.mxu0 %v4119
    %4154 = vmatprep.subr.mxu0 0.0
    %4155 = vmatpush1.msra.mxu0 %v4120
    %4156 = vmatprep.subr.mxu0 0.0
    %4157 = vmatpush1.msra.mxu0 %v4121
    %4158 = vmatprep.subr.mxu0 0.0
    %4159 = vmatpush1.msra.mxu0 %v4122
    %4160 = vmatprep.subr.mxu0 0.0
    %4161 = vmatpush1.msra.mxu0 %v4123
    %4162 = vmatprep.subr.mxu0 0.0
    %4163 = vmatpush1.msra.mxu0 %v4124
    %4164 = vmatprep.subr.mxu0 0.0
    %4165 = vmatpush1.msra.mxu0 0.0
    %4166 = vmatprep.subr.mxu0 0.0
    %4167 = vmatpush1.msra.mxu0 0.0
    %4168 = vmatprep.subr.mxu0 0.0
    %4169 = vmatpush1.msra.mxu0 0.0
    %4170 = vmatprep.subr.mxu0 0.0
    %4171 = vmatpush1.msra.mxu0 0.0
    %4172 = vmatprep.subr.mxu0 0.0
    %4173 = vmatpush1.msra.mxu0 0.0
    %4174 = vmatprep.subr.mxu0 0.0
    %4175 = vmatpush1.msra.mxu0 0.0
    %4176 = vmatprep.subr.mxu0 0.0
    %4177 = vmatpush1.msra.mxu0 0.0
    %4178 = vmatprep.subr.mxu0 0.0
    %4179 = vmatpush1.msra.mxu0 0.0
    %4180 = vmatprep.subr.mxu0 0.0
    %4181 = vmatpush1.msra.mxu0 0.0
    %4182 = vmatprep.subr.mxu0 0.0
    %4183 = vmatpush1.msra.mxu0 0.0
    %4184 = vmatprep.subr.mxu0 0.0
    %4185 = vmatpush1.msra.mxu0 0.0
    %4186 = vmatprep.subr.mxu0 0.0
    %4187 = vmatpush1.msra.mxu0 0.0
    %4188 = vmatprep.subr.mxu0 0.0
    %4189 = vmatpush1.msra.mxu0 0.0
    %4190 = vmatprep.subr.mxu0 0.0
    %4191 = vmatpush1.msra.mxu0 0.0
    %4192 = vmatprep.subr.mxu0 0.0
    %4193 = vmatpush1.msra.mxu0 0.0
    %4194 = vmatprep.subr.mxu0 0.0
    %4195 = vmatpush1.msra.mxu0 0.0
    %4196 = vmatprep.mubr.f32.mxu0 0.0
    %4197 = vmatmul.mubr.f32.gmra.mrb[0].mxu0 %v4103
    %v4198 = vpop.f32.mrb[0].mxu0
    %v4199 = vadd.f32 %v4130, %v4198
    %v4200 = vpop.f32.mrb[0].mxu0
    %4201 = vmatprep.mubr.f32.mxu0 0.0
    %4202 = vmatmul.mubr.f32.gmra.mrb[0].mxu0 %v4104
    %v4203 = vpop.f32.mrb[0].mxu0
    %v4204 = vadd.f32 %v4130, %v4203
    %v4205 = vpop.f32.mrb[0].mxu0
    %4206 = vmatprep.mubr.f32.mxu0 0.0
    %4207 = vmatmul.mubr.f32.gmra.mrb[0].mxu0 %v4105
    %v4208 = vpop.f32.mrb[0].mxu0
    %v4209 = vadd.f32 %v4130, %v4208
    %v4210 = vpop.f32.mrb[0].mxu0
    %4211 = vmatprep.mubr.f32.mxu0 0.0
    %4212 = vmatmul.mubr.f32.gmra.mrb[0].mxu0 %v4106
    %v4213 = vpop.f32.mrb[0].mxu0
    %v4214 = vadd.f32 %v4130, %v4213
    %v4215 = vpop.f32.mrb[0].mxu0
    %4216 = vmatprep.mubr.f32.mxu0 0.0
    %4217 = vmatmul.mubr.f32.gmra.mrb[0].mxu0 %v4107
    %v4218 = vpop.f32.mrb[0].mxu0
    %v4219 = vadd.f32 %v4130, %v4218
    %v4220 = vpop.f32.mrb[0].mxu0
    %4221 = vmatprep.mubr.f32.mxu0 0.0
    %4222 = vmatmul.mubr.f32.gmra.mrb[0].mxu0 %v4108
    %v4223 = vpop.f32.mrb[0].mxu0
    %v4224 = vadd.f32 %v4130, %v4223
    %v4225 = vpop.f32.mrb[0].mxu0
    %4226 = vdwg.mxu0
    %v4227 = vmul.f32 %v4199, %v4199
    %v4228 = vmul.f32 %v4204, %v4204
    %v4229 = vmul.f32 %v4209, %v4209
    %v4230 = vmul.f32 %v4214, %v4214
    %v4231 = vmul.f32 %v4219, %v4219
    %v4232 = vmul.f32 %v4224, %v4224
    %v4233 = vmul.f32 %v4199, %v4227
    %v4234 = vmul.f32 %v4204, %v4228
    %v4235 = vmul.f32 %v4209, %v4229
    %v4236 = vmul.f32 %v4214, %v4230
    %v4237 = vmul.f32 %v4219, %v4231
    %v4238 = vmul.f32 %v4224, %v4232
    %v4239 = vmul.f32 %v4233, 0.044715
    %v4240 = vmul.f32 %v4234, 0.044715
    %v4241 = vmul.f32 %v4235, 0.044715
    %v4242 = vmul.f32 %v4236, 0.044715
    %v4243 = vmul.f32 %v4237, 0.044715
    %v4244 = vmul.f32 %v4238, 0.044715
    %v4245 = vadd.f32 %v4199, %v4239
    %v4246 = vadd.f32 %v4204, %v4240
    %v4247 = vadd.f32 %v4209, %v4241
    %v4248 = vadd.f32 %v4214, %v4242
    %v4249 = vadd.f32 %v4219, %v4243
    %v4250 = vadd.f32 %v4224, %v4244
    %v4251 = vmul.f32 %v4245, 0.7978846
    %v4252 = vmul.f32 %v4246, 0.7978846
    %v4253 = vmul.f32 %v4247, 0.7978846
    %v4254 = vmul.f32 %v4248, 0.7978846
    %v4255 = vmul.f32 %v4249, 0.7978846
    %v4256 = vmul.f32 %v4250, 0.7978846
    %v4257 = vtanh.pop %v4251
    %v4258 = vtanh.pop %v4252
    %v4259 = vtanh.pop %v4253
    %v4260 = vtanh.pop %v4254
    %v4261 = vtanh.pop %v4255
    %v4262 = vtanh.pop %v4256
    %v4263 = vadd.f32 %v4257, 1.0
    %v4264 = vadd.f32 %v4258, 1.0
    %v4265 = vadd.f32 %v4259, 1.0
    %v4266 = vadd.f32 %v4260, 1.0
    %v4267 = vadd.f32 %v4261, 1.0
    %v4268 = vadd.f32 %v4262, 1.0
    %v4269 = vmul.f32 %v4263, 0.5
    %v4270 = vmul.f32 %v4264, 0.5
    %v4271 = vmul.f32 %v4265, 0.5
    %v4272 = vmul.f32 %v4266, 0.5
    %v4273 = vmul.f32 %v4267, 0.5
    %v4274 = vmul.f32 %v4268, 0.5
    %v4275 = vmul.f32 %v4199, %v4269
    %v4276 = vmul.f32 %v4204, %v4270
    %v4277 = vmul.f32 %v4209, %v4271
    %v4278 = vmul.f32 %v4214, %v4272
    %v4279 = vmul.f32 %v4219, %v4273
    %v4280 = vmul.f32 %v4224, %v4274
    %v4281 = vld [vmem:[%s53] sm:$0xff]
    %v4282 = vld [vmem:[%s53 + $0x8] sm:$0xff]
    %v4283 = vld [vmem:[%s53 + $0x10] sm:$0xff]
    %v4284 = vld [vmem:[%s53 + $0x18] sm:$0xff]
    %v4285 = vld [vmem:[%s53 + $0x20] sm:$0xff]
    %v4286 = vld [vmem:[%s53 + $0x28] sm:$0xff]
    %v4287 = vld [vmem:[%s53 + $0x30] sm:$0xff]
    %v4288 = vld [vmem:[%s53 + $0x38] sm:$0xff]
    %v4289 = vld [vmem:[%s53 + $0x40] sm:$0xff]
    %v4290 = vld [vmem:[%s53 + $0x48] sm:$0xff]
    %v4291 = vld [vmem:[%s53 + $0x50] sm:$0xff]
    %v4292 = vld [vmem:[%s53 + $0x58] sm:$0xff]
    %v4293 = vld [vmem:[%s53 + $0x60] sm:$0xff]
    %v4294 = vld [vmem:[%s53 + $0x68] sm:$0xff]
    %v4295 = vld [vmem:[%s53 + $0x70] sm:$0xff]
    %v4296 = vld [vmem:[%s53 + $0x78] sm:$0xff]
    %v4297 = vld [vmem:[%s55] sm:$0x1]
    %v4299 = vlaneseq
    %v4300 = vshrl.u32 %v4299, 7
    %v4301 = vsub.s32 0, %v4300
    %v4302 = vrot.slane %v4297, %v4301
    %4304 = vmatprep.subr.mxu0 0.0
    %4305 = vmatpush1.msra.mxu0 %v4281
    %4306 = vmatprep.subr.mxu0 0.0
    %4307 = vmatpush1.msra.mxu0 %v4282
    %4308 = vmatprep.subr.mxu0 0.0
    %4309 = vmatpush1.msra.mxu0 %v4283
    %4310 = vmatprep.subr.mxu0 0.0
    %4311 = vmatpush1.msra.mxu0 %v4284
    %4312 = vmatprep.subr.mxu0 0.0
    %4313 = vmatpush1.msra.mxu0 %v4285
    %4314 = vmatprep.subr.mxu0 0.0
    %4315 = vmatpush1.msra.mxu0 %v4286
    %4316 = vmatprep.subr.mxu0 0.0
    %4317 = vmatpush1.msra.mxu0 %v4287
    %4318 = vmatprep.subr.mxu0 0.0
    %4319 = vmatpush1.msra.mxu0 %v4288
    %4320 = vmatprep.subr.mxu0 0.0
    %4321 = vmatpush1.msra.mxu0 %v4289
    %4322 = vmatprep.subr.mxu0 0.0
    %4323 = vmatpush1.msra.mxu0 %v4290
    %4324 = vmatprep.subr.mxu0 0.0
    %4325 = vmatpush1.msra.mxu0 %v4291
    %4326 = vmatprep.subr.mxu0 0.0
    %4327 = vmatpush1.msra.mxu0 %v4292
    %4328 = vmatprep.subr.mxu0 0.0
    %4329 = vmatpush1.msra.mxu0 %v4293
    %4330 = vmatprep.subr.mxu0 0.0
    %4331 = vmatpush1.msra.mxu0 %v4294
    %4332 = vmatprep.subr.mxu0 0.0
    %4333 = vmatpush1.msra.mxu0 %v4295
    %4334 = vmatprep.subr.mxu0 0.0
    %4335 = vmatpush1.msra.mxu0 %v4296
    %4336 = vmatprep.subr.mxu0 0.0
    %4337 = vmatpush1.msra.mxu0 0.0
    %4338 = vmatprep.subr.mxu0 0.0
    %4339 = vmatpush1.msra.mxu0 0.0
    %4340 = vmatprep.subr.mxu0 0.0
    %4341 = vmatpush1.msra.mxu0 0.0
    %4342 = vmatprep.subr.mxu0 0.0
    %4343 = vmatpush1.msra.mxu0 0.0
    %4344 = vmatprep.subr.mxu0 0.0
    %4345 = vmatpush1.msra.mxu0 0.0
    %4346 = vmatprep.subr.mxu0 0.0
    %4347 = vmatpush1.msra.mxu0 0.0
    %4348 = vmatprep.subr.mxu0 0.0
    %4349 = vmatpush1.msra.mxu0 0.0
    %4350 = vmatprep.subr.mxu0 0.0
    %4351 = vmatpush1.msra.mxu0 0.0
    %4352 = vmatprep.subr.mxu0 0.0
    %4353 = vmatpush1.msra.mxu0 0.0
    %4354 = vmatprep.subr.mxu0 0.0
    %4355 = vmatpush1.msra.mxu0 0.0
    %4356 = vmatprep.subr.mxu0 0.0
    %4357 = vmatpush1.msra.mxu0 0.0
    %4358 = vmatprep.subr.mxu0 0.0
    %4359 = vmatpush1.msra.mxu0 0.0
    %4360 = vmatprep.subr.mxu0 0.0
    %4361 = vmatpush1.msra.mxu0 0.0
    %4362 = vmatprep.subr.mxu0 0.0
    %4363 = vmatpush1.msra.mxu0 0.0
    %4364 = vmatprep.subr.mxu0 0.0
    %4365 = vmatpush1.msra.mxu0 0.0
    %4366 = vmatprep.subr.mxu0 0.0
    %4367 = vmatpush1.msra.mxu0 0.0
    %4368 = vmatprep.mubr.f32.mxu0 0.0
    %4369 = vmatmul.mubr.f32.gmra.mrb[0].mxu0 %v4275
    %v4370 = vpop.f32.mrb[0].mxu0
    %v4371 = vadd.f32 %v4302, %v4370
    %v4372 = vpop.f32.mrb[0].mxu0
    %4373 = vmatprep.mubr.f32.mxu0 0.0
    %4374 = vmatmul.mubr.f32.gmra.mrb[0].mxu0 %v4276
    %v4375 = vpop.f32.mrb[0].mxu0
    %v4376 = vadd.f32 %v4302, %v4375
    %v4377 = vpop.f32.mrb[0].mxu0
    %4378 = vmatprep.mubr.f32.mxu0 0.0
    %4379 = vmatmul.mubr.f32.gmra.mrb[0].mxu0 %v4277
    %v4380 = vpop.f32.mrb[0].mxu0
    %v4381 = vadd.f32 %v4302, %v4380
    %v4382 = vpop.f32.mrb[0].mxu0
    %4383 = vmatprep.mubr.f32.mxu0 0.0
    %4384 = vmatmul.mubr.f32.gmra.mrb[0].mxu0 %v4278
    %v4385 = vpop.f32.mrb[0].mxu0
    %v4386 = vadd.f32 %v4302, %v4385
    %v4387 = vpop.f32.mrb[0].mxu0
    %4388 = vmatprep.mubr.f32.mxu0 0.0
    %4389 = vmatmul.mubr.f32.gmra.mrb[0].mxu0 %v4279
    %v4390 = vpop.f32.mrb[0].mxu0
    %v4391 = vadd.f32 %v4302, %v4390
    %v4392 = vpop.f32.mrb[0].mxu0
    %4393 = vmatprep.mubr.f32.mxu0 0.0
    %4394 = vmatmul.mubr.f32.gmra.mrb[0].mxu0 %v4280
    %v4395 = vpop.f32.mrb[0].mxu0
    %v4396 = vadd.f32 %v4302, %v4395
    %v4397 = vpop.f32.mrb[0].mxu0
    %4398 = vdwg.mxu0
    %v4399 = vadd.f32 %v3999, %v4371
    %v4400 = vadd.f32 %v4000, %v4376
    %v4401 = vadd.f32 %v4001, %v4381
    %v4402 = vadd.f32 %v4002, %v4386
    %v4403 = vadd.f32 %v4003, %v4391
    %v4404 = vadd.f32 %v4004, %v4396
    %v4405 = vld [vmem:[%s57] sm:$0x1]
    %v4406 = vld [vmem:[%s59] sm:$0x1]
    %4407 = vadd.xlane.f32.xlu0 %v4399
    %v4408 = vpop.xlane.xlu0 %4407
    %4409 = vadd.xlane.f32.xlu0 %v4400
    %v4410 = vpop.xlane.xlu0 %4409
    %4411 = vadd.xlane.f32.xlu0 %v4401
    %v4412 = vpop.xlane.xlu0 %4411
    %4413 = vadd.xlane.f32.xlu0 %v4402
    %v4414 = vpop.xlane.xlu0 %4413
    %4415 = vadd.xlane.f32.xlu0 %v4403
    %v4416 = vpop.xlane.xlu0 %4415
    %4417 = vadd.xlane.f32.xlu0 %v4404
    %v4418 = vpop.xlane.xlu0 %4417
    %v4419 = vmul.f32 %v4399, %v4399
    %v4420 = vmul.f32 %v4400, %v4400
    %v4421 = vmul.f32 %v4401, %v4401
    %v4422 = vmul.f32 %v4402, %v4402
    %v4423 = vmul.f32 %v4403, %v4403
    %v4424 = vmul.f32 %v4404, %v4404
    %4425 = vadd.xlane.f32.xlu0 %v4419
    %v4426 = vpop.xlane.xlu0 %4425
    %4427 = vadd.xlane.f32.xlu0 %v4420
    %v4428 = vpop.xlane.xlu0 %4427
    %4429 = vadd.xlane.f32.xlu0 %v4421
    %v4430 = vpop.xlane.xlu0 %4429
    %4431 = vadd.xlane.f32.xlu0 %v4422
    %v4432 = vpop.xlane.xlu0 %4431
    %4433 = vadd.xlane.f32.xlu0 %v4423
    %v4434 = vpop.xlane.xlu0 %4433
    %4435 = vadd.xlane.f32.xlu0 %v4424
    %v4436 = vpop.xlane.xlu0 %4435
    %v4437 = vmul.f32 %v4408, %v345
    %v4438 = vmul.f32 %v4410, %v345
    %v4439 = vmul.f32 %v4412, %v345
    %v4440 = vmul.f32 %v4414, %v345
    %v4441 = vmul.f32 %v4416, %v345
    %v4442 = vmul.f32 %v4418, %v345
    %v4443 = vmul.f32 %v4426, %v345
    %v4444 = vmul.f32 %v4428, %v345
    %v4445 = vmul.f32 %v4430, %v345
    %v4446 = vmul.f32 %v4432, %v345
    %v4447 = vmul.f32 %v4434, %v345
    %v4448 = vmul.f32 %v4436, %v345
    %v4449 = vmul.f32 %v4437, %v4437
    %v4450 = vmul.f32 %v4438, %v4438
    %v4451 = vmul.f32 %v4439, %v4439
    %v4452 = vmul.f32 %v4440, %v4440
    %v4453 = vmul.f32 %v4441, %v4441
    %v4454 = vmul.f32 %v4442, %v4442
    %v4455 = vsub.f32 %v4443, %v4449
    %v4456 = vsub.f32 %v4444, %v4450
    %v4457 = vsub.f32 %v4445, %v4451
    %v4458 = vsub.f32 %v4446, %v4452
    %v4459 = vsub.f32 %v4447, %v4453
    %v4460 = vsub.f32 %v4448, %v4454
    %v4461 = vsub.f32 %v4399, %v4437
    %v4462 = vsub.f32 %v4400, %v4438
    %v4463 = vsub.f32 %v4401, %v4439
    %v4464 = vsub.f32 %v4402, %v4440
    %v4465 = vsub.f32 %v4403, %v4441
    %v4466 = vsub.f32 %v4404, %v4442
    %v4467 = vadd.f32 %v4455, 1e-05
    %v4468 = vadd.f32 %v4456, 1e-05
    %v4469 = vadd.f32 %v4457, 1e-05
    %v4470 = vadd.f32 %v4458, 1e-05
    %v4471 = vadd.f32 %v4459, 1e-05
    %v4472 = vadd.f32 %v4460, 1e-05
    %v4473 = vrsqrt.pop %v4467
    %v4474 = vrsqrt.pop %v4468
    %v4475 = vrsqrt.pop %v4469
    %v4476 = vrsqrt.pop %v4470
    %v4477 = vrsqrt.pop %v4471
    %v4478 = vrsqrt.pop %v4472
    %v4479 = vmul.f32 %v4461, %v4473
    %v4480 = vmul.f32 %v4462, %v4474
    %v4481 = vmul.f32 %v4463, %v4475
    %v4482 = vmul.f32 %v4464, %v4476
    %v4483 = vmul.f32 %v4465, %v4477
    %v4484 = vmul.f32 %v4466, %v4478
    %v4486 = vlaneseq
    %v4487 = vshrl.u32 %v4486, 7
    %v4488 = vsub.s32 0, %v4487
    %v4489 = vrot.slane %v4405, %v4488
    %v4491 = vmul.f32 %v4479, %v4489
    %v4492 = vmul.f32 %v4480, %v4489
    %v4493 = vmul.f32 %v4481, %v4489
    %v4494 = vmul.f32 %v4482, %v4489
    %v4495 = vmul.f32 %v4483, %v4489
    %v4496 = vmul.f32 %v4484, %v4489
    %v4498 = vlaneseq
    %v4499 = vshrl.u32 %v4498, 7
    %v4500 = vsub.s32 0, %v4499
    %v4501 = vrot.slane %v4406, %v4500
    %v4503 = vadd.f32 %v4491, %v4501
    %v4504 = vadd.f32 %v4492, %v4501
    %v4505 = vadd.f32 %v4493, %v4501
    %v4506 = vadd.f32 %v4494, %v4501
    %v4507 = vadd.f32 %v4495, %v4501
    %v4508 = vadd.f32 %v4496, %v4501
    %v4509 = vld [vmem:[#allocation4] sm:$0xff]
    %v4510 = vld [vmem:[#allocation4 + $0x8] sm:$0xff]
    %v4511 = vld [vmem:[#allocation4 + $0x10] sm:$0xff]
    %v4512 = vld [vmem:[#allocation4 + $0x18] sm:$0xff]
    %v4513 = vld [vmem:[#allocation4 + $0x20] sm:$0xff]
    %v4514 = vld [vmem:[#allocation4 + $0x28] sm:$0xff]
    %v4515 = vld [vmem:[#allocation4 + $0x30] sm:$0xff]
    %v4516 = vld [vmem:[#allocation4 + $0x38] sm:$0xff]
    %v4517 = vld [vmem:[#allocation4 + $0x40] sm:$0xff]
    %v4518 = vld [vmem:[#allocation4 + $0x48] sm:$0xff]
    %v4519 = vld [vmem:[#allocation4 + $0x50] sm:$0xff]
    %v4520 = vld [vmem:[#allocation4 + $0x58] sm:$0xff]
    %v4521 = vld [vmem:[#allocation4 + $0x60] sm:$0xff]
    %v4522 = vld [vmem:[#allocation4 + $0x68] sm:$0xff]
    %v4523 = vld [vmem:[#allocation4 + $0x70] sm:$0xff]
    %v4524 = vld [vmem:[#allocation4 + $0x78] sm:$0xff]
    %v4525 = vld [vmem:[%s63] sm:$0x1]
    %v4527 = vlaneseq
    %v4528 = vshrl.u32 %v4527, 7
    %v4529 = vsub.s32 0, %v4528
    %v4530 = vrot.slane %v4525, %v4529
    %4532 = vmatprep.subr.mxu0 0.0
    %4533 = vmatpush1.msra.mxu0 %v4509
    %4534 = vmatprep.subr.mxu0 0.0
    %4535 = vmatpush1.msra.mxu0 %v4510
    %4536 = vmatprep.subr.mxu0 0.0
    %4537 = vmatpush1.msra.mxu0 %v4511
    %4538 = vmatprep.subr.mxu0 0.0
    %4539 = vmatpush1.msra.mxu0 %v4512
    %4540 = vmatprep.subr.mxu0 0.0
    %4541 = vmatpush1.msra.mxu0 %v4513
    %4542 = vmatprep.subr.mxu0 0.0
    %4543 = vmatpush1.msra.mxu0 %v4514
    %4544 = vmatprep.subr.mxu0 0.0
    %4545 = vmatpush1.msra.mxu0 %v4515
    %4546 = vmatprep.subr.mxu0 0.0
    %4547 = vmatpush1.msra.mxu0 %v4516
    %4548 = vmatprep.subr.mxu0 0.0
    %4549 = vmatpush1.msra.mxu0 %v4517
    %4550 = vmatprep.subr.mxu0 0.0
    %4551 = vmatpush1.msra.mxu0 %v4518
    %4552 = vmatprep.subr.mxu0 0.0
    %4553 = vmatpush1.msra.mxu0 %v4519
    %4554 = vmatprep.subr.mxu0 0.0
    %4555 = vmatpush1.msra.mxu0 %v4520
    %4556 = vmatprep.subr.mxu0 0.0
    %4557 = vmatpush1.msra.mxu0 %v4521
    %4558 = vmatprep.subr.mxu0 0.0
    %4559 = vmatpush1.msra.mxu0 %v4522
    %4560 = vmatprep.subr.mxu0 0.0
    %4561 = vmatpush1.msra.mxu0 %v4523
    %4562 = vmatprep.subr.mxu0 0.0
    %4563 = vmatpush1.msra.mxu0 %v4524
    %4564 = vmatprep.subr.mxu0 0.0
    %4565 = vmatpush1.msra.mxu0 0.0
    %4566 = vmatprep.subr.mxu0 0.0
    %4567 = vmatpush1.msra.mxu0 0.0
    %4568 = vmatprep.subr.mxu0 0.0
    %4569 = vmatpush1.msra.mxu0 0.0
    %4570 = vmatprep.subr.mxu0 0.0
    %4571 = vmatpush1.msra.mxu0 0.0
    %4572 = vmatprep.subr.mxu0 0.0
    %4573 = vmatpush1.msra.mxu0 0.0
    %4574 = vmatprep.subr.mxu0 0.0
    %4575 = vmatpush1.msra.mxu0 0.0
    %4576 = vmatprep.subr.mxu0 0.0
    %4577 = vmatpush1.msra.mxu0 0.0
    %4578 = vmatprep.subr.mxu0 0.0
    %4579 = vmatpush1.msra.mxu0 0.0
    %4580 = vmatprep.subr.mxu0 0.0
    %4581 = vmatpush1.msra.mxu0 0.0
    %4582 = vmatprep.subr.mxu0 0.0
    %4583 = vmatpush1.msra.mxu0 0.0
    %4584 = vmatprep.subr.mxu0 0.0
    %4585 = vmatpush1.msra.mxu0 0.0
    %4586 = vmatprep.subr.mxu0 0.0
    %4587 = vmatpush1.msra.mxu0 0.0
    %4588 = vmatprep.subr.mxu0 0.0
    %4589 = vmatpush1.msra.mxu0 0.0
    %4590 = vmatprep.subr.mxu0 0.0
    %4591 = vmatpush1.msra.mxu0 0.0
    %4592 = vmatprep.subr.mxu0 0.0
    %4593 = vmatpush1.msra.mxu0 0.0
    %4594 = vmatprep.subr.mxu0 0.0
    %4595 = vmatpush1.msra.mxu0 0.0
    %4596 = vmatprep.mubr.f32.mxu0 0.0
    %4597 = vmatmul.mubr.f32.gmra.mrb[0].mxu0 %v4503
    %v4598 = vpop.f32.mrb[0].mxu0
    %v4599 = vadd.f32 %v4530, %v4598
    %v4600 = vpop.f32.mrb[0].mxu0
    %4601 = vmatprep.mubr.f32.mxu0 0.0
    %4602 = vmatmul.mubr.f32.gmra.mrb[0].mxu0 %v4504
    %v4603 = vpop.f32.mrb[0].mxu0
    %v4604 = vadd.f32 %v4530, %v4603
    %v4605 = vpop.f32.mrb[0].mxu0
    %4606 = vmatprep.mubr.f32.mxu0 0.0
    %4607 = vmatmul.mubr.f32.gmra.mrb[0].mxu0 %v4505
    %v4608 = vpop.f32.mrb[0].mxu0
    %v4609 = vadd.f32 %v4530, %v4608
    %v4610 = vpop.f32.mrb[0].mxu0
    %4611 = vmatprep.mubr.f32.mxu0 0.0
    %4612 = vmatmul.mubr.f32.gmra.mrb[0].mxu0 %v4506
    %v4613 = vpop.f32.mrb[0].mxu0
    %v4614 = vadd.f32 %v4530, %v4613
    %v4615 = vpop.f32.mrb[0].mxu0
    %4616 = vmatprep.mubr.f32.mxu0 0.0
    %4617 = vmatmul.mubr.f32.gmra.mrb[0].mxu0 %v4507
    %v4618 = vpop.f32.mrb[0].mxu0
    %v4619 = vadd.f32 %v4530, %v4618
    %v4620 = vpop.f32.mrb[0].mxu0
    %4621 = vmatprep.mubr.f32.mxu0 0.0
    %4622 = vmatmul.mubr.f32.gmra.mrb[0].mxu0 %v4508
    %v4623 = vpop.f32.mrb[0].mxu0
    %v4624 = vadd.f32 %v4530, %v4623
    %v4625 = vpop.f32.mrb[0].mxu0
    %4626 = vdwg.mxu0
    %4627 = vst [vmem:[%s65] sm:$0xff] %v4599
    %4628 = vst [vmem:[%s65 + $0x8] sm:$0xff] %v4604
    %4629 = vst [vmem:[%s65 + $0x10] sm:$0xff] %v4609
    %4630 = vst [vmem:[%s65 + $0x18] sm:$0xff] %v4614
    %4631 = vst [vmem:[%s65 + $0x20] sm:$0xff] %v4619
    %4632 = vst [vmem:[%s65 + $0x28] sm:$0xff] %v4624
    // Predicated region
    $region138: #{vit_forward.1} parent=1 // pred_check
      _
    $region139: #{vit_forward.1} parent=1 // pred_check_branch
      %4634 = sbr.rel (0) target = $region141
    $region140: #{vit_forward.1} parent=1 // pred_region
      _
    $region141: #{vit_forward.1} parent=1 // pred_fallthru
      _
    // Predicated region
    $region142: #{vit_forward.1} parent=1 // pred_check
      _
    $region143: #{vit_forward.1} parent=1 // pred_check_branch
      %4636 = sbr.rel (0) target = $region145
    $region144: #{vit_forward.1} parent=1 // pred_region
      _
    $region145: #{vit_forward.1} parent=1 // pred_fallthru
      _
    %4637 = vsyncpa [#allocation3], 1
    %4638 = vsyncpa [#allocation5], 1

</llo_original>
